<compile_context>
chip_gen: v5e
topology: v5e:2x2
jax: 0.10.0
libtpu: 0.0.40
codegen_flags: <defaults>
</compile_context>

<pallas_src>
import functools

import jax
import jax.numpy as jnp
import numpy as np
from jax.experimental import pallas as pl
from jax.experimental.pallas import tpu as pltpu

# NatureCNN architecture constants (fixed by the PyTorch module).
K1, S1, C1 = 8, 4, 32      # conv1: 8x8 stride 4 -> 32 channels
K2, S2, C2 = 4, 2, 64      # conv2: 4x4 stride 2 -> 64 channels
K3, S3, C3 = 3, 1, 64      # conv3: 3x3 stride 1 -> 64 channels
FC1 = 512
LANE = 128


def conv_out(n, k, s):
    return (n - k) // s + 1


def _shapes(H, W):
    Ho1, Wo1 = conv_out(H, K1, S1), conv_out(W, K1, S1)
    Ho2, Wo2 = conv_out(Ho1, K2, S2), conv_out(Wo1, K2, S2)
    Ho3, Wo3 = conv_out(Ho2, K3, S3), conv_out(Wo2, K3, S3)
    return Ho1, Wo1, Ho2, Wo2, Ho3, Wo3


# ----------------------------------------------------------------------------
# Fused forward kernel: Bt samples per grid step, everything resident in VMEM.
# ----------------------------------------------------------------------------
def _nature_cnn_kernel(x_ref, w1_ref, b1_ref, w2_ref, b2_ref, w3_ref, b3_ref,
                       l1w_ref, l1b_ref, l2w_ref, l2b_ref, o_ref, *, dims):
    Bt, H2s, W2s, Ho2, Wo2, Ho3, Wo3 = dims
    f32 = jnp.float32
    cdt = w1_ref.dtype                      # matmul operand dtype (bf16)
    ncell = H2s * W2s

    # ---- conv1: ONE matmul against the block-diagonal weight ---------------
    # Output lanes are (dy, dx, c1) for the four sub-positions of each cell,
    # i.e. already in the layout conv2's im2col wants.
    x = x_ref[...].reshape(Bt * ncell, x_ref.shape[-1])
    y1 = jnp.dot(x, w1_ref[...], preferred_element_type=f32)
    y1 = jnp.maximum(y1 + b1_ref[...], 0.0)
    y1 = y1.reshape(Bt, H2s, W2s, 4 * C1)

    # ---- conv2: 4x4/stride-2 == 2x2/stride-1 over the cell grid ------------
    # im2col = 4 static slices lane-concatenated -> ONE matmul, K = 16*C1.
    p2 = jnp.concatenate(
        [y1[:, pi:pi + Ho2, pj:pj + Wo2, :]
         for pi in range(2) for pj in range(2)], axis=-1)
    p2 = p2.reshape(Bt * Ho2 * Wo2, 2 * 2 * 4 * C1).astype(cdt)
    y2 = jnp.dot(p2, w2_ref[...], preferred_element_type=f32)
    y2 = jnp.maximum(y2 + b2_ref[...], 0.0)
    y2 = y2.reshape(Bt, Ho2, Wo2, C2)

    # ---- conv3: 3x3/stride-1 im2col -> ONE matmul, K = 9*C2 -----------------
    p3 = jnp.concatenate(
        [y2[:, ki:ki + Ho3, kj:kj + Wo3, :]
         for ki in range(K3) for kj in range(K3)], axis=-1)
    p3 = p3.reshape(Bt * Ho3 * Wo3, K3 * K3 * C2).astype(cdt)
    y3 = jnp.dot(p3, w3_ref[...], preferred_element_type=f32)
    y3 = jnp.maximum(y3 + b3_ref[...], 0.0)             # (Bt*Ho3*Wo3, C3)

    # ---- fc1: flatten (h3, w3, c3) per sample; l1_w pre-permuted to match ---
    z1 = y3.reshape(Bt, Ho3 * Wo3 * C3).astype(cdt)
    z1 = jnp.dot(z1, l1w_ref[...], preferred_element_type=f32)
    z1 = jnp.maximum(z1 + l1b_ref[...], 0.0)            # (Bt, 512)

    # ---- fc2: lane+sublane-dense padded output block ------------------------
    z2 = jnp.dot(z1.astype(cdt), l2w_ref[...], preferred_element_type=f32)
    o_ref[...] = z2 + l2b_ref[...]


# ----------------------------------------------------------------------------
# One-time parameter repack: PyTorch layout -> kernel layout (+ bf16 cast).
# ----------------------------------------------------------------------------
def prepare_params(params, input_shape, output_dim, compute_dtype=jnp.bfloat16):
    C, H, W = input_shape
    _, _, _, _, Ho3, Wo3 = _shapes(H, W)
    kin = K1 * K1 * C

    # conv1 -> block-diagonal slab: 4 copies of the (kin, C1) filter matrix so
    # all four (dy, dx) sub-positions of a cell come out of one matmul.
    w1s = jnp.transpose(params["c1_w"], (2, 3, 1, 0)).reshape(kin, C1)
    w1 = jnp.zeros((4 * kin, 4 * C1), jnp.float32)
    for s in range(4):
        w1 = w1.at[s * kin:(s + 1) * kin, s * C1:(s + 1) * C1].set(w1s)
    b1 = jnp.tile(params["c1_b"], 4).reshape(1, 4 * C1)

    # conv2 -> (16*C1, C2); row order (pi, pj, dy, dx, cin) matching the
    # kernel's lane-concat order (ki = 2*pi + dy, kj = 2*pj + dx).
    t = jnp.transpose(params["c2_w"], (2, 3, 1, 0)).reshape(2, 2, 2, 2, C1, C2)
    w2 = jnp.transpose(t, (0, 2, 1, 3, 4, 5)).reshape(16 * C1, C2)
    b2 = params["c2_b"].reshape(1, C2)

    # conv3 -> (9*C2, C3); row order (ki, kj, cin).
    w3 = jnp.transpose(params["c3_w"], (2, 3, 1, 0)).reshape(K3 * K3 * C2, C3)
    b3 = params["c3_b"].reshape(1, C3)

    # fc1: permute columns from PyTorch's (c3, h3, w3) flatten order to the
    # kernel's (h3, w3, c3) order.
    l1w = params["l1_w"].reshape(FC1, C3, Ho3, Wo3)
    l1w = jnp.transpose(l1w, (2, 3, 1, 0)).reshape(Ho3 * Wo3 * C3, FC1)
    l1b = params["l1_b"].reshape(1, FC1)

    # fc2: [K, N] layout, zero-padded to a lane-dense multiple of 128.
    n_pad = max(LANE, ((output_dim + LANE - 1) // LANE) * LANE)
    l2w = jnp.zeros((FC1, n_pad), jnp.float32).at[:, :output_dim].set(
        params["l2_w"].T)
    l2b = jnp.zeros((1, n_pad), jnp.float32).at[:, :output_dim].set(
        params["l2_b"])

    cdt = compute_dtype
    return {
        "w1": w1.astype(cdt), "b1": b1,
        "w2": w2.astype(cdt), "b2": b2,
        "w3": w3.astype(cdt), "b3": b3,
        "l1_w": l1w.astype(cdt), "l1_b": l1b,
        "l2_w": l2w.astype(cdt), "l2_b": l2b,
    }


# ----------------------------------------------------------------------------
# Forward pass: one pallas_call, grid over batch tiles of Bt samples.
# ----------------------------------------------------------------------------
def nature_cnn_forward(kp, obs, output_dim, *, block_batch=8):
    """obs: [B, C, H, W] float32 -> [B, output_dim] float32."""
    B, C, H, W = obs.shape
    Ho1, Wo1, Ho2, Wo2, Ho3, Wo3 = _shapes(H, W)
    assert Ho3 >= 1 and Wo3 >= 1, "input spatially too small for NatureCNN"
    H2s, W2s = Ho2 + 1, Wo2 + 1          # conv1-output cells needed by conv2
    ncell = H2s * W2s
    kin = K1 * K1 * C
    cdt = kp["w1"].dtype
    n_pad = kp["l2_w"].shape[1]

    # conv1 im2col in the wrapper, grouped by the (dy, dx) sub-position of each
    # stride-2 cell.  kernel(8) == 2*stride(4), so each sub-position's patches
    # tile the image exactly -> pure reshape/transpose, no gather.
    slabs = []
    for dy in range(2):
        for dx in range(2):
            sub = obs[:, :, S1 * dy:S1 * dy + K1 * H2s,
                            S1 * dx:S1 * dx + K1 * W2s]
            sub = sub.reshape(B, C, H2s, K1, W2s, K1)
            slabs.append(sub.transpose(0, 2, 4, 3, 5, 1).reshape(B, ncell, kin))
    x_cols = jnp.concatenate(slabs, axis=-1).astype(cdt)   # (B, ncell, 4*kin)

    # Batch tiling: Bt per grid step (output block's sublane dim must be a
    # multiple of 8); pad the batch so the grid divides evenly.
    Bt = max(8, (min(block_batch, max(B, 1)) + 7) // 8 * 8)
    nsteps = pl.cdiv(B, Bt)
    B_pad = nsteps * Bt
    if B_pad != B:
        x_cols = jnp.pad(x_cols, ((0, B_pad - B), (0, 0), (0, 0)))

    dims = (Bt, H2s, W2s, Ho2, Wo2, Ho3, Wo3)
    kern = functools.partial(_nature_cnn_kernel, dims=dims)

    def full(a):  # whole-array block, constant index map -> resident in VMEM
        nd = a.ndim
        return pl.BlockSpec(a.shape, lambda i, _nd=nd: (0,) * _nd)

    flops_per_sample = 2 * (
        ncell * (4 * kin) * (4 * C1)
        + Ho2 * Wo2 * (16 * C1) * C2
        + Ho3 * Wo3 * (K3 * K3 * C2) * C3
        + (Ho3 * Wo3 * C3) * FC1
        + FC1 * n_pad)
    weight_bytes = sum(int(v.size) * v.dtype.itemsize for v in kp.values())
    cost = pl.CostEstimate(
        flops=int(flops_per_sample) * int(B_pad),
        transcendentals=0,
        bytes_accessed=int(x_cols.size) * x_cols.dtype.itemsize
        + weight_bytes + int(B_pad) * n_pad * 4)

    grid_spec = pltpu.PrefetchScalarGridSpec(
        num_scalar_prefetch=0,
        grid=(nsteps,),
        in_specs=[
            pl.BlockSpec((Bt, ncell, 4 * kin), lambda i: (i, 0, 0)),
            full(kp["w1"]), full(kp["b1"]),
            full(kp["w2"]), full(kp["b2"]),
            full(kp["w3"]), full(kp["b3"]),
            full(kp["l1_w"]), full(kp["l1_b"]),
            full(kp["l2_w"]), full(kp["l2_b"]),
        ],
        out_specs=pl.BlockSpec((Bt, n_pad), lambda i: (i, 0)),
    )
    out = pl.pallas_call(
        kern,
        out_shape=jax.ShapeDtypeStruct((B_pad, n_pad), jnp.float32),
        grid_spec=grid_spec,
        compiler_params=pltpu.CompilerParams(
            dimension_semantics=("parallel",),
            # Above v5e's 16 MiB default; re-derive Bt per generation for big
            # inputs (v7x total VMEM is 64 MiB).
            vmem_limit_bytes=32 * 1024 * 1024),
        cost_estimate=cost,
    )(x_cols, kp["w1"], kp["b1"], kp["w2"], kp["b2"], kp["w3"], kp["b3"],
      kp["l1_w"], kp["l1_b"], kp["l2_w"], kp["l2_b"])
    return out[:B, :output_dim]


# ----------------------------------------------------------------------------
# Parameter init (PyTorch layout) + pure-JAX reference for the sanity check.
# ----------------------------------------------------------------------------
def init_params(key, input_shape, output_dim):
    C, H, W = input_shape
    _, _, _, _, h3, w3 = _shapes(H, W)
    n_flatten = C3 * h3 * w3

    ks = jax.random.split(key, 10)

    def dense_init(kw, kb, shape_w, fan_in):
        scale = 1.0 / np.sqrt(fan_in)
        w = jax.random.normal(kw, shape_w, jnp.float32) * scale
        b = jax.random.normal(kb, (shape_w[0],), jnp.float32) * scale
        return w, b

    p = {}
    p["c1_w"], p["c1_b"] = dense_init(ks[0], ks[1], (C1, C, K1, K1), C * K1 * K1)
    p["c2_w"], p["c2_b"] = dense_init(ks[2], ks[3], (C2, C1, K2, K2), C1 * K2 * K2)
    p["c3_w"], p["c3_b"] = dense_init(ks[4], ks[5], (C3, C2, K3, K3), C2 * K3 * K3)
    p["l1_w"], p["l1_b"] = dense_init(ks[6], ks[7], (FC1, n_flatten), n_flatten)
    p["l2_w"], p["l2_b"] = dense_init(ks[8], ks[9], (output_dim, FC1), FC1)
    return p


def _ref_forward(params, obs):
    def conv(x, w, b, s, relu):
        y = jax.lax.conv_general_dilated(
            x, w, window_strides=(s, s), padding="VALID",
            dimension_numbers=("NCHW", "OIHW", "NCHW"))
        y = y + b.reshape(1, -1, 1, 1)
        return jnp.maximum(y, 0.0) if relu else y

    x = conv(obs, params["c1_w"], params["c1_b"], S1, True)
    x = conv(x, params["c2_w"], params["c2_b"], S2, True)
    x = conv(x, params["c3_w"], params["c3_b"], S3, True)
    x = x.reshape(x.shape[0], -1)
    x = jnp.maximum(x @ params["l1_w"].T + params["l1_b"], 0.0)
    return x @ params["l2_w"].T + params["l2_b"]


if __name__ == "__main__":
    # Smallest spatial size that survives the 8/4 -> 4/2 -> 3/1 conv stack is 36.
    # batch=16 with block_batch=8 -> grid of 2 (exercises multi-step + megacore).
    batch, C, H, W = 16, 4, 36, 36
    output_dim = 32

    key = jax.random.PRNGKey(0)
    k_obs, k_params = jax.random.split(key)
    obs = jax.random.normal(k_obs, (batch, C, H, W), jnp.float32)
    params = init_params(k_params, (C, H, W), output_dim)

    kparams = prepare_params(params, (C, H, W), output_dim)  # one-time repack
    fwd = jax.jit(functools.partial(nature_cnn_forward,
                                    output_dim=output_dim, block_batch=8))

    out = jax.block_until_ready(fwd(kparams, obs))
    assert out.shape == (batch, output_dim), out.shape

    ref = jax.block_until_ready(_ref_forward(params, obs))
    # bf16 MXU operands with f32 accumulation -> loosened tolerance vs the
    # pure-f32 reference.
    np.testing.assert_allclose(np.asarray(out), np.asarray(ref),
                               rtol=5e-2, atol=1e-1)

    print("KERNEL_OK")
</pallas_src>

<mosaic_0001>
module attributes {stable_mosaic.version = 11 : i64} {
  func.func @_nature_cnn_kernel(%arg0: i32, %arg1: memref<8x16x1024xbf16, #tpu.memory_space<vmem>>, %arg2: memref<1024x128xbf16, #tpu.memory_space<vmem>>, %arg3: memref<1x128xf32, #tpu.memory_space<vmem>>, %arg4: memref<512x64xbf16, #tpu.memory_space<vmem>>, %arg5: memref<1x64xf32, #tpu.memory_space<vmem>>, %arg6: memref<576x64xbf16, #tpu.memory_space<vmem>>, %arg7: memref<1x64xf32, #tpu.memory_space<vmem>>, %arg8: memref<64x512xbf16, #tpu.memory_space<vmem>>, %arg9: memref<1x512xf32, #tpu.memory_space<vmem>>, %arg10: memref<512x128xbf16, #tpu.memory_space<vmem>>, %arg11: memref<1x128xf32, #tpu.memory_space<vmem>>, %arg12: memref<8x128xf32, #tpu.memory_space<vmem>>) attributes {dimension_semantics = [#tpu.dimension_semantics<parallel>], iteration_bounds = array<i64: 2>, scalar_prefetch = 0 : i64, scratch_operands = 0 : i64, tpu.core_type = #tpu.core_type<tc>, window_params = [{transform_indices = @transform_0, window_bounds = array<i64: 8, 16, 1024>}, {pipeline_mode = #tpu.pipeline_mode<synchronous>, transform_indices = @transform_1, window_bounds = array<i64: 1024, 128>}, {pipeline_mode = #tpu.pipeline_mode<synchronous>, transform_indices = @transform_2, window_bounds = array<i64: 1, 128>}, {pipeline_mode = #tpu.pipeline_mode<synchronous>, transform_indices = @transform_3, window_bounds = array<i64: 512, 64>}, {pipeline_mode = #tpu.pipeline_mode<synchronous>, transform_indices = @transform_4, window_bounds = array<i64: 1, 64>}, {pipeline_mode = #tpu.pipeline_mode<synchronous>, transform_indices = @transform_5, window_bounds = array<i64: 576, 64>}, {pipeline_mode = #tpu.pipeline_mode<synchronous>, transform_indices = @transform_6, window_bounds = array<i64: 1, 64>}, {pipeline_mode = #tpu.pipeline_mode<synchronous>, transform_indices = @transform_7, window_bounds = array<i64: 64, 512>}, {pipeline_mode = #tpu.pipeline_mode<synchronous>, transform_indices = @transform_8, window_bounds = array<i64: 1, 512>}, {pipeline_mode = #tpu.pipeline_mode<synchronous>, transform_indices = @transform_9, window_bounds = array<i64: 512, 128>}, {pipeline_mode = #tpu.pipeline_mode<synchronous>, transform_indices = @transform_10, window_bounds = array<i64: 1, 128>}, {transform_indices = @transform_11, window_bounds = array<i64: 8, 128>}]} {
    %c0 = arith.constant 0 : index
    %c0_0 = arith.constant 0 : index
    %c0_1 = arith.constant 0 : index
    %0 = vector.load %arg1[%c0, %c0_0, %c0_1] : memref<8x16x1024xbf16, #tpu.memory_space<vmem>>, vector<8x16x1024xbf16>
    %1 = vector.shape_cast %0 : vector<8x16x1024xbf16> to vector<128x1024xbf16>
    %c0_2 = arith.constant 0 : index
    %c0_3 = arith.constant 0 : index
    %2 = vector.load %arg2[%c0_2, %c0_3] : memref<1024x128xbf16, #tpu.memory_space<vmem>>, vector<1024x128xbf16>
    %cst = arith.constant dense<0.000000e+00> : vector<128x128xf32>
    %3 = tpu.matmul %1, %2, %cst {dimension_numbers = #tpu.dot_dimension_numbers<[1], [0], [0], [1], [0, 0, 1, 1], [], []>} : vector<128x1024xbf16>, vector<1024x128xbf16>, vector<128x128xf32> -> vector<128x128xf32>
    %c0_4 = arith.constant 0 : index
    %c0_5 = arith.constant 0 : index
    %4 = vector.load %arg3[%c0_4, %c0_5] : memref<1x128xf32, #tpu.memory_space<vmem>>, vector<1x128xf32>
    %5 = vector.broadcast %4 : vector<1x128xf32> to vector<128x128xf32>
    %6 = arith.addf %3, %5 : vector<128x128xf32>
    %cst_6 = arith.constant 0.000000e+00 : f32
    %7 = vector.broadcast %cst_6 : f32 to vector<128x128xf32>
    %8 = arith.maximumf %6, %7 : vector<128x128xf32>
    %9 = vector.shape_cast %8 : vector<128x128xf32> to vector<8x4x4x128xf32>
    %10 = vector.extract_strided_slice %9 {offsets = [0, 0, 0, 0], sizes = [8, 3, 3, 128], strides = [1, 1, 1, 1]} : vector<8x4x4x128xf32> to vector<8x3x3x128xf32>
    %11 = vector.extract_strided_slice %9 {offsets = [0, 0, 1, 0], sizes = [8, 3, 3, 128], strides = [1, 1, 1, 1]} : vector<8x4x4x128xf32> to vector<8x3x3x128xf32>
    %12 = vector.extract_strided_slice %9 {offsets = [0, 1, 0, 0], sizes = [8, 3, 3, 128], strides = [1, 1, 1, 1]} : vector<8x4x4x128xf32> to vector<8x3x3x128xf32>
    %13 = vector.extract_strided_slice %9 {offsets = [0, 1, 1, 0], sizes = [8, 3, 3, 128], strides = [1, 1, 1, 1]} : vector<8x4x4x128xf32> to vector<8x3x3x128xf32>
    %14 = tpu.concatenate %10, %11, %12, %13 in 3 : vector<8x3x3x128xf32>, vector<8x3x3x128xf32>, vector<8x3x3x128xf32>, vector<8x3x3x128xf32> -> vector<8x3x3x512xf32>
    %15 = vector.shape_cast %14 : vector<8x3x3x512xf32> to vector<72x512xf32>
    %16 = arith.truncf %15 : vector<72x512xf32> to vector<72x512xbf16>
    %c0_7 = arith.constant 0 : index
    %c0_8 = arith.constant 0 : index
    %17 = vector.load %arg4[%c0_7, %c0_8] : memref<512x64xbf16, #tpu.memory_space<vmem>>, vector<512x64xbf16>
    %cst_9 = arith.constant dense<0.000000e+00> : vector<72x64xf32>
    %18 = tpu.matmul %16, %17, %cst_9 {dimension_numbers = #tpu.dot_dimension_numbers<[1], [0], [0], [1], [0, 0, 1, 1], [], []>} : vector<72x512xbf16>, vector<512x64xbf16>, vector<72x64xf32> -> vector<72x64xf32>
    %c0_10 = arith.constant 0 : index
    %c0_11 = arith.constant 0 : index
    %19 = vector.load %arg5[%c0_10, %c0_11] : memref<1x64xf32, #tpu.memory_space<vmem>>, vector<1x64xf32>
    %20 = vector.broadcast %19 : vector<1x64xf32> to vector<72x64xf32>
    %21 = arith.addf %18, %20 : vector<72x64xf32>
    %cst_12 = arith.constant 0.000000e+00 : f32
    %22 = vector.broadcast %cst_12 : f32 to vector<72x64xf32>
    %23 = arith.maximumf %21, %22 : vector<72x64xf32>
    %24 = vector.shape_cast %23 : vector<72x64xf32> to vector<8x3x3x64xf32>
    %25 = vector.extract_strided_slice %24 {offsets = [0, 0, 0, 0], sizes = [8, 1, 1, 64], strides = [1, 1, 1, 1]} : vector<8x3x3x64xf32> to vector<8x1x1x64xf32>
    %26 = vector.extract_strided_slice %24 {offsets = [0, 0, 1, 0], sizes = [8, 1, 1, 64], strides = [1, 1, 1, 1]} : vector<8x3x3x64xf32> to vector<8x1x1x64xf32>
    %27 = vector.extract_strided_slice %24 {offsets = [0, 0, 2, 0], sizes = [8, 1, 1, 64], strides = [1, 1, 1, 1]} : vector<8x3x3x64xf32> to vector<8x1x1x64xf32>
    %28 = vector.extract_strided_slice %24 {offsets = [0, 1, 0, 0], sizes = [8, 1, 1, 64], strides = [1, 1, 1, 1]} : vector<8x3x3x64xf32> to vector<8x1x1x64xf32>
    %29 = vector.extract_strided_slice %24 {offsets = [0, 1, 1, 0], sizes = [8, 1, 1, 64], strides = [1, 1, 1, 1]} : vector<8x3x3x64xf32> to vector<8x1x1x64xf32>
    %30 = vector.extract_strided_slice %24 {offsets = [0, 1, 2, 0], sizes = [8, 1, 1, 64], strides = [1, 1, 1, 1]} : vector<8x3x3x64xf32> to vector<8x1x1x64xf32>
    %31 = vector.extract_strided_slice %24 {offsets = [0, 2, 0, 0], sizes = [8, 1, 1, 64], strides = [1, 1, 1, 1]} : vector<8x3x3x64xf32> to vector<8x1x1x64xf32>
    %32 = vector.extract_strided_slice %24 {offsets = [0, 2, 1, 0], sizes = [8, 1, 1, 64], strides = [1, 1, 1, 1]} : vector<8x3x3x64xf32> to vector<8x1x1x64xf32>
    %33 = vector.extract_strided_slice %24 {offsets = [0, 2, 2, 0], sizes = [8, 1, 1, 64], strides = [1, 1, 1, 1]} : vector<8x3x3x64xf32> to vector<8x1x1x64xf32>
    %34 = tpu.concatenate %25, %26, %27, %28, %29, %30, %31, %32, %33 in 3 : vector<8x1x1x64xf32>, vector<8x1x1x64xf32>, vector<8x1x1x64xf32>, vector<8x1x1x64xf32>, vector<8x1x1x64xf32>, vector<8x1x1x64xf32>, vector<8x1x1x64xf32>, vector<8x1x1x64xf32>, vector<8x1x1x64xf32> -> vector<8x1x1x576xf32>
    %35 = vector.shape_cast %34 : vector<8x1x1x576xf32> to vector<8x576xf32>
    %36 = arith.truncf %35 : vector<8x576xf32> to vector<8x576xbf16>
    %c0_13 = arith.constant 0 : index
    %c0_14 = arith.constant 0 : index
    %37 = vector.load %arg6[%c0_13, %c0_14] : memref<576x64xbf16, #tpu.memory_space<vmem>>, vector<576x64xbf16>
    %cst_15 = arith.constant dense<0.000000e+00> : vector<8x64xf32>
    %38 = tpu.matmul %36, %37, %cst_15 {dimension_numbers = #tpu.dot_dimension_numbers<[1], [0], [0], [1], [0, 0, 1, 1], [], []>} : vector<8x576xbf16>, vector<576x64xbf16>, vector<8x64xf32> -> vector<8x64xf32>
    %c0_16 = arith.constant 0 : index
    %c0_17 = arith.constant 0 : index
    %39 = vector.load %arg7[%c0_16, %c0_17] : memref<1x64xf32, #tpu.memory_space<vmem>>, vector<1x64xf32>
    %40 = vector.broadcast %39 : vector<1x64xf32> to vector<8x64xf32>
    %41 = arith.addf %38, %40 : vector<8x64xf32>
    %cst_18 = arith.constant 0.000000e+00 : f32
    %42 = vector.broadcast %cst_18 : f32 to vector<8x64xf32>
    %43 = arith.maximumf %41, %42 : vector<8x64xf32>
    %44 = arith.truncf %43 : vector<8x64xf32> to vector<8x64xbf16>
    %c0_19 = arith.constant 0 : index
    %c0_20 = arith.constant 0 : index
    %45 = vector.load %arg8[%c0_19, %c0_20] : memref<64x512xbf16, #tpu.memory_space<vmem>>, vector<64x512xbf16>
    %cst_21 = arith.constant dense<0.000000e+00> : vector<8x512xf32>
    %46 = tpu.matmul %44, %45, %cst_21 {dimension_numbers = #tpu.dot_dimension_numbers<[1], [0], [0], [1], [0, 0, 1, 1], [], []>} : vector<8x64xbf16>, vector<64x512xbf16>, vector<8x512xf32> -> vector<8x512xf32>
    %c0_22 = arith.constant 0 : index
    %c0_23 = arith.constant 0 : index
    %47 = vector.load %arg9[%c0_22, %c0_23] : memref<1x512xf32, #tpu.memory_space<vmem>>, vector<1x512xf32>
    %48 = vector.broadcast %47 : vector<1x512xf32> to vector<8x512xf32>
    %49 = arith.addf %46, %48 : vector<8x512xf32>
    %cst_24 = arith.constant 0.000000e+00 : f32
    %50 = vector.broadcast %cst_24 : f32 to vector<8x512xf32>
    %51 = arith.maximumf %49, %50 : vector<8x512xf32>
    %52 = arith.truncf %51 : vector<8x512xf32> to vector<8x512xbf16>
    %c0_25 = arith.constant 0 : index
    %c0_26 = arith.constant 0 : index
    %53 = vector.load %arg10[%c0_25, %c0_26] : memref<512x128xbf16, #tpu.memory_space<vmem>>, vector<512x128xbf16>
    %cst_27 = arith.constant dense<0.000000e+00> : vector<8x128xf32>
    %54 = tpu.matmul %52, %53, %cst_27 {dimension_numbers = #tpu.dot_dimension_numbers<[1], [0], [0], [1], [0, 0, 1, 1], [], []>} : vector<8x512xbf16>, vector<512x128xbf16>, vector<8x128xf32> -> vector<8x128xf32>
    %c0_28 = arith.constant 0 : index
    %c0_29 = arith.constant 0 : index
    %55 = vector.load %arg11[%c0_28, %c0_29] : memref<1x128xf32, #tpu.memory_space<vmem>>, vector<1x128xf32>
    %56 = vector.broadcast %55 : vector<1x128xf32> to vector<8x128xf32>
    %57 = arith.addf %54, %56 : vector<8x128xf32>
    %c0_30 = arith.constant 0 : index
    %c0_31 = arith.constant 0 : index
    %58 = vector.load %arg12[%c0_30, %c0_31] : memref<8x128xf32, #tpu.memory_space<vmem>>, vector<8x128xf32>
    tpu.vector_store %arg12[%c0_30, %c0_31], %57 {strides = array<i32>} : memref<8x128xf32, #tpu.memory_space<vmem>>, vector<8x128xf32>,
    return
  }
  func.func @transform_0(%arg0: i32) -> (i32, i32, i32) {
    %c0_i32 = arith.constant 0 : i32
    %c0_i32_0 = arith.constant 0 : i32
    %c0_i32_1 = arith.constant 0 : i32
    return %arg0, %c0_i32, %c0_i32_0 : i32, i32, i32
  }
  func.func @transform_1(%arg0: i32) -> (i32, i32) {
    %c0_i32 = arith.constant 0 : i32
    %c0_i32_0 = arith.constant 0 : i32
    %c0_i32_1 = arith.constant 0 : i32
    return %c0_i32, %c0_i32_0 : i32, i32
  }
  func.func @transform_2(%arg0: i32) -> (i32, i32) {
    %c0_i32 = arith.constant 0 : i32
    %c0_i32_0 = arith.constant 0 : i32
    %c0_i32_1 = arith.constant 0 : i32
    return %c0_i32, %c0_i32_0 : i32, i32
  }
  func.func @transform_3(%arg0: i32) -> (i32, i32) {
    %c0_i32 = arith.constant 0 : i32
    %c0_i32_0 = arith.constant 0 : i32
    %c0_i32_1 = arith.constant 0 : i32
    return %c0_i32, %c0_i32_0 : i32, i32
  }
  func.func @transform_4(%arg0: i32) -> (i32, i32) {
    %c0_i32 = arith.constant 0 : i32
    %c0_i32_0 = arith.constant 0 : i32
    %c0_i32_1 = arith.constant 0 : i32
    return %c0_i32, %c0_i32_0 : i32, i32
  }
  func.func @transform_5(%arg0: i32) -> (i32, i32) {
    %c0_i32 = arith.constant 0 : i32
    %c0_i32_0 = arith.constant 0 : i32
    %c0_i32_1 = arith.constant 0 : i32
    return %c0_i32, %c0_i32_0 : i32, i32
  }
  func.func @transform_6(%arg0: i32) -> (i32, i32) {
    %c0_i32 = arith.constant 0 : i32
    %c0_i32_0 = arith.constant 0 : i32
    %c0_i32_1 = arith.constant 0 : i32
    return %c0_i32, %c0_i32_0 : i32, i32
  }
  func.func @transform_7(%arg0: i32) -> (i32, i32) {
    %c0_i32 = arith.constant 0 : i32
    %c0_i32_0 = arith.constant 0 : i32
    %c0_i32_1 = arith.constant 0 : i32
    return %c0_i32, %c0_i32_0 : i32, i32
  }
  func.func @transform_8(%arg0: i32) -> (i32, i32) {
    %c0_i32 = arith.constant 0 : i32
    %c0_i32_0 = arith.constant 0 : i32
    %c0_i32_1 = arith.constant 0 : i32
    return %c0_i32, %c0_i32_0 : i32, i32
  }
  func.func @transform_9(%arg0: i32) -> (i32, i32) {
    %c0_i32 = arith.constant 0 : i32
    %c0_i32_0 = arith.constant 0 : i32
    %c0_i32_1 = arith.constant 0 : i32
    return %c0_i32, %c0_i32_0 : i32, i32
  }
  func.func @transform_10(%arg0: i32) -> (i32, i32) {
    %c0_i32 = arith.constant 0 : i32
    %c0_i32_0 = arith.constant 0 : i32
    %c0_i32_1 = arith.constant 0 : i32
    return %c0_i32, %c0_i32_0 : i32, i32
  }
  func.func @transform_11(%arg0: i32) -> (i32, i32) {
    %c0_i32 = arith.constant 0 : i32
    %c0_i32_0 = arith.constant 0 : i32
    return %arg0, %c0_i32 : i32, i32
  }
}

</mosaic_0001>

<llo_original>
// kernel: nature_cnn_forward.1
$region0: #{nature_cnn_forward.1}
  #allocation0 [shape = 'u32[]', space=smem, size = 0x4, offset = 0x4, fixed_abs, tag = 'smem constant byte address 0x4 - core index']
  #allocation1 [shape = 'u32[72,128]{1,0:T(1,128)}', space=vmem, size = 0x9000, scoped, tag = 'internal scratch']
  %s0 = inlined_call_operand.vmem [shape: bf16[16,16,1024], index: 0, kind: input, shape index: {}]
  %s1 = inlined_call_operand.vmem [shape: bf16[1024,128], index: 1, kind: input, shape index: {}]
  %s2 = inlined_call_operand.vmem [shape: f32[1,128], index: 2, kind: input, shape index: {}]
  %s3 = inlined_call_operand.vmem [shape: bf16[512,64], index: 3, kind: input, shape index: {}]
  %s4 = inlined_call_operand.vmem [shape: f32[1,64], index: 4, kind: input, shape index: {}]
  %s5 = inlined_call_operand.vmem [shape: bf16[576,64], index: 5, kind: input, shape index: {}]
  %s6 = inlined_call_operand.vmem [shape: f32[1,64], index: 6, kind: input, shape index: {}]
  %s7 = inlined_call_operand.vmem [shape: bf16[64,512], index: 7, kind: input, shape index: {}]
  %s8 = inlined_call_operand.vmem [shape: f32[1,512], index: 8, kind: input, shape index: {}]
  %s9 = inlined_call_operand.vmem [shape: bf16[512,128], index: 9, kind: input, shape index: {}]
  %s10 = inlined_call_operand.vmem [shape: f32[1,128], index: 10, kind: input, shape index: {}]
  %s11 = inlined_call_operand.hbm [shape: f32[16,128], index: 11, kind: output, shape index: {}]
  %s12 = sld [smem:[#allocation0]]
  $region77: #{nature_cnn_forward.1} parent=0
    _
  %s14 = ssub.s32 1, %s12
  %s15 = scalar_select 0, %s14, %s12
  $region1: #{nature_cnn_forward.1} parent=0
    #allocation2 [shape = 'u8[8192]{0}', space=vmem, size = 0x2000, scoped, tag = 'output window, operand 0']
    #allocation3 [shape = 's32[2]{0}', space=sflag, size = 0x8, scoped, tag = 'scoped memory for nature_cnn_forward.1']
    %16 = vsyncpa [#allocation3], 0
    %s17 = scalar_lea.sflag [#allocation3], 1
    %18 = vsyncpa %s17, 0
    loop: start=0, step=1, limit=4
    $region2: #{nature_cnn_forward.1} parent=1 // loop_pre_header
      _
    $region3: #{nature_cnn_forward.1} parent=1 // loop_header
      %s20 = sphi 0, %s24
      %p21 = scmp.ge.s32.totalorder %s20, 4
      %s30 = sphi 0, %s32
      %s33 = sphi 0, %s30
      %s34 = sphi 0, %s33
      %s50 = sphi 0, %s34
      %s54 = sphi 0, %s54
      %s56 = sphi 0, %s54
      %s57 = sphi 0, %s56
      %s71 = sphi 0, %s57
      %s75 = sphi 0, %s75
      %s77 = sphi 0, %s75
      %s78 = sphi 0, %s77
      %s92 = sphi 0, %s78
      %s96 = sphi 0, %s96
      %s98 = sphi 0, %s96
      %s99 = sphi 0, %s98
      %s113 = sphi 0, %s99
      %s117 = sphi 0, %s117
      %s119 = sphi 0, %s117
      %s120 = sphi 0, %s119
      %s134 = sphi 0, %s120
      %s138 = sphi 0, %s138
      %s140 = sphi 0, %s138
      %s141 = sphi 0, %s140
      %s155 = sphi 0, %s141
      %s159 = sphi 0, %s159
      %s161 = sphi 0, %s159
      %s162 = sphi 0, %s161
      %s176 = sphi 0, %s162
      %s180 = sphi 0, %s180
      %s182 = sphi 0, %s180
      %s183 = sphi 0, %s182
      %s197 = sphi 0, %s183
      %s201 = sphi 0, %s201
      %s203 = sphi 0, %s201
      %s204 = sphi 0, %s203
      %s218 = sphi 0, %s204
      %s222 = sphi 0, %s222
      %s224 = sphi 0, %s222
      %s225 = sphi 0, %s224
      %s239 = sphi 0, %s225
      %s243 = sphi 0, %s243
      %s245 = sphi 0, %s243
      %s246 = sphi 0, %s245
      %s260 = sphi 0, %s246
      %s266 = sphi 0, %s268
      %s269 = sphi 0, %s266
      %s270 = sphi 0, %s269
      %s286 = sphi 0, %s270
    $region4: #{nature_cnn_forward.1} parent=1 // loop_header_branch
      %23 = sbr.rel (%p21) target = $region8
    $region5: #{nature_cnn_forward.1} parent=1 // loop_body
      %s25 = ssub.s32 %s20, 1
      %s26 = ssub.s32 %s20, 2
      %s27 = sadd.s32 %s20, 1
      %s28 = ssub.s32 %s20, %s27
      %p29 = scmp.eq.s32.totalorder %s28, 0
      %s31 = sadd.s32 %s30, 1
      %s32 = scalar_select %p29, %s30, %s31
      %p35 = pneg %p29
      %p36 = scmp.eq.s32.totalorder %s20, 1
      %p37 = por %p35, %p36
      %p38 = scmp.ne.s32.totalorder %s30, %s33
      %p39 = scmp.eq.s32.totalorder %s20, 0
      %p40 = por %p38, %p39
      %p41 = scmp.ne.s32.totalorder %s30, %s33
      %p42 = scmp.eq.s32.totalorder %s25, 1
      %p43 = por %p41, %p42
      %p44 = scmp.ne.s32.totalorder %s33, %s34
      %p45 = scmp.eq.s32.totalorder %s25, 0
      %p46 = por %p44, %p45
      %p47 = scmp.ne.s32.totalorder %s33, %s34
      %p48 = scmp.eq.s32.totalorder %s26, 1
      %p49 = por %p47, %p48
      %p51 = scmp.ne.s32.totalorder %s34, %s50
      %p52 = scmp.eq.s32.totalorder %s26, 0
      %p53 = por %p51, %p52
      %s55 = sadd.s32 %s54, 1
      %p58 = scmp.eq.s32.totalorder %s20, 1
      %p59 = scmp.ne.s32.totalorder %s54, %s56
      %p60 = scmp.eq.s32.totalorder %s20, 0
      %p61 = por %p59, %p60
      %p62 = scmp.ne.s32.totalorder %s54, %s56
      %p63 = scmp.eq.s32.totalorder %s25, 1
      %p64 = por %p62, %p63
      %p65 = scmp.ne.s32.totalorder %s56, %s57
      %p66 = scmp.eq.s32.totalorder %s25, 0
      %p67 = por %p65, %p66
      %p68 = scmp.ne.s32.totalorder %s56, %s57
      %p69 = scmp.eq.s32.totalorder %s26, 1
      %p70 = por %p68, %p69
      %p72 = scmp.ne.s32.totalorder %s57, %s71
      %p73 = scmp.eq.s32.totalorder %s26, 0
      %p74 = por %p72, %p73
      %s76 = sadd.s32 %s75, 1
      %p79 = scmp.eq.s32.totalorder %s20, 1
      %p80 = scmp.ne.s32.totalorder %s75, %s77
      %p81 = scmp.eq.s32.totalorder %s20, 0
      %p82 = por %p80, %p81
      %p83 = scmp.ne.s32.totalorder %s75, %s77
      %p84 = scmp.eq.s32.totalorder %s25, 1
      %p85 = por %p83, %p84
      %p86 = scmp.ne.s32.totalorder %s77, %s78
      %p87 = scmp.eq.s32.totalorder %s25, 0
      %p88 = por %p86, %p87
      %p89 = scmp.ne.s32.totalorder %s77, %s78
      %p90 = scmp.eq.s32.totalorder %s26, 1
      %p91 = por %p89, %p90
      %p93 = scmp.ne.s32.totalorder %s78, %s92
      %p94 = scmp.eq.s32.totalorder %s26, 0
      %p95 = por %p93, %p94
      %s97 = sadd.s32 %s96, 1
      %p100 = scmp.eq.s32.totalorder %s20, 1
      %p101 = scmp.ne.s32.totalorder %s96, %s98
      %p102 = scmp.eq.s32.totalorder %s20, 0
      %p103 = por %p101, %p102
      %p104 = scmp.ne.s32.totalorder %s96, %s98
      %p105 = scmp.eq.s32.totalorder %s25, 1
      %p106 = por %p104, %p105
      %p107 = scmp.ne.s32.totalorder %s98, %s99
      %p108 = scmp.eq.s32.totalorder %s25, 0
      %p109 = por %p107, %p108
      %p110 = scmp.ne.s32.totalorder %s98, %s99
      %p111 = scmp.eq.s32.totalorder %s26, 1
      %p112 = por %p110, %p111
      %p114 = scmp.ne.s32.totalorder %s99, %s113
      %p115 = scmp.eq.s32.totalorder %s26, 0
      %p116 = por %p114, %p115
      %s118 = sadd.s32 %s117, 1
      %p121 = scmp.eq.s32.totalorder %s20, 1
      %p122 = scmp.ne.s32.totalorder %s117, %s119
      %p123 = scmp.eq.s32.totalorder %s20, 0
      %p124 = por %p122, %p123
      %p125 = scmp.ne.s32.totalorder %s117, %s119
      %p126 = scmp.eq.s32.totalorder %s25, 1
      %p127 = por %p125, %p126
      %p128 = scmp.ne.s32.totalorder %s119, %s120
      %p129 = scmp.eq.s32.totalorder %s25, 0
      %p130 = por %p128, %p129
      %p131 = scmp.ne.s32.totalorder %s119, %s120
      %p132 = scmp.eq.s32.totalorder %s26, 1
      %p133 = por %p131, %p132
      %p135 = scmp.ne.s32.totalorder %s120, %s134
      %p136 = scmp.eq.s32.totalorder %s26, 0
      %p137 = por %p135, %p136
      %s139 = sadd.s32 %s138, 1
      %p142 = scmp.eq.s32.totalorder %s20, 1
      %p143 = scmp.ne.s32.totalorder %s138, %s140
      %p144 = scmp.eq.s32.totalorder %s20, 0
      %p145 = por %p143, %p144
      %p146 = scmp.ne.s32.totalorder %s138, %s140
      %p147 = scmp.eq.s32.totalorder %s25, 1
      %p148 = por %p146, %p147
      %p149 = scmp.ne.s32.totalorder %s140, %s141
      %p150 = scmp.eq.s32.totalorder %s25, 0
      %p151 = por %p149, %p150
      %p152 = scmp.ne.s32.totalorder %s140, %s141
      %p153 = scmp.eq.s32.totalorder %s26, 1
      %p154 = por %p152, %p153
      %p156 = scmp.ne.s32.totalorder %s141, %s155
      %p157 = scmp.eq.s32.totalorder %s26, 0
      %p158 = por %p156, %p157
      %s160 = sadd.s32 %s159, 1
      %p163 = scmp.eq.s32.totalorder %s20, 1
      %p164 = scmp.ne.s32.totalorder %s159, %s161
      %p165 = scmp.eq.s32.totalorder %s20, 0
      %p166 = por %p164, %p165
      %p167 = scmp.ne.s32.totalorder %s159, %s161
      %p168 = scmp.eq.s32.totalorder %s25, 1
      %p169 = por %p167, %p168
      %p170 = scmp.ne.s32.totalorder %s161, %s162
      %p171 = scmp.eq.s32.totalorder %s25, 0
      %p172 = por %p170, %p171
      %p173 = scmp.ne.s32.totalorder %s161, %s162
      %p174 = scmp.eq.s32.totalorder %s26, 1
      %p175 = por %p173, %p174
      %p177 = scmp.ne.s32.totalorder %s162, %s176
      %p178 = scmp.eq.s32.totalorder %s26, 0
      %p179 = por %p177, %p178
      %s181 = sadd.s32 %s180, 1
      %p184 = scmp.eq.s32.totalorder %s20, 1
      %p185 = scmp.ne.s32.totalorder %s180, %s182
      %p186 = scmp.eq.s32.totalorder %s20, 0
      %p187 = por %p185, %p186
      %p188 = scmp.ne.s32.totalorder %s180, %s182
      %p189 = scmp.eq.s32.totalorder %s25, 1
      %p190 = por %p188, %p189
      %p191 = scmp.ne.s32.totalorder %s182, %s183
      %p192 = scmp.eq.s32.totalorder %s25, 0
      %p193 = por %p191, %p192
      %p194 = scmp.ne.s32.totalorder %s182, %s183
      %p195 = scmp.eq.s32.totalorder %s26, 1
      %p196 = por %p194, %p195
      %p198 = scmp.ne.s32.totalorder %s183, %s197
      %p199 = scmp.eq.s32.totalorder %s26, 0
      %p200 = por %p198, %p199
      %s202 = sadd.s32 %s201, 1
      %p205 = scmp.eq.s32.totalorder %s20, 1
      %p206 = scmp.ne.s32.totalorder %s201, %s203
      %p207 = scmp.eq.s32.totalorder %s20, 0
      %p208 = por %p206, %p207
      %p209 = scmp.ne.s32.totalorder %s201, %s203
      %p210 = scmp.eq.s32.totalorder %s25, 1
      %p211 = por %p209, %p210
      %p212 = scmp.ne.s32.totalorder %s203, %s204
      %p213 = scmp.eq.s32.totalorder %s25, 0
      %p214 = por %p212, %p213
      %p215 = scmp.ne.s32.totalorder %s203, %s204
      %p216 = scmp.eq.s32.totalorder %s26, 1
      %p217 = por %p215, %p216
      %p219 = scmp.ne.s32.totalorder %s204, %s218
      %p220 = scmp.eq.s32.totalorder %s26, 0
      %p221 = por %p219, %p220
      %s223 = sadd.s32 %s222, 1
      %p226 = scmp.eq.s32.totalorder %s20, 1
      %p227 = scmp.ne.s32.totalorder %s222, %s224
      %p228 = scmp.eq.s32.totalorder %s20, 0
      %p229 = por %p227, %p228
      %p230 = scmp.ne.s32.totalorder %s222, %s224
      %p231 = scmp.eq.s32.totalorder %s25, 1
      %p232 = por %p230, %p231
      %p233 = scmp.ne.s32.totalorder %s224, %s225
      %p234 = scmp.eq.s32.totalorder %s25, 0
      %p235 = por %p233, %p234
      %p236 = scmp.ne.s32.totalorder %s224, %s225
      %p237 = scmp.eq.s32.totalorder %s26, 1
      %p238 = por %p236, %p237
      %p240 = scmp.ne.s32.totalorder %s225, %s239
      %p241 = scmp.eq.s32.totalorder %s26, 0
      %p242 = por %p240, %p241
      %s244 = sadd.s32 %s243, 1
      %p247 = scmp.eq.s32.totalorder %s20, 1
      %p248 = scmp.ne.s32.totalorder %s243, %s245
      %p249 = scmp.eq.s32.totalorder %s20, 0
      %p250 = por %p248, %p249
      %p251 = scmp.ne.s32.totalorder %s243, %s245
      %p252 = scmp.eq.s32.totalorder %s25, 1
      %p253 = por %p251, %p252
      %p254 = scmp.ne.s32.totalorder %s245, %s246
      %p255 = scmp.eq.s32.totalorder %s25, 0
      %p256 = por %p254, %p255
      %p257 = scmp.ne.s32.totalorder %s245, %s246
      %p258 = scmp.eq.s32.totalorder %s26, 1
      %p259 = por %p257, %p258
      %p261 = scmp.ne.s32.totalorder %s246, %s260
      %p262 = scmp.eq.s32.totalorder %s26, 0
      %p263 = por %p261, %p262
      %s264 = ssub.s32 %s20, %s27
      %p265 = scmp.eq.s32.totalorder %s264, 0
      %s267 = sadd.s32 %s266, 1
      %s268 = scalar_select %p265, %s266, %s267
      %p271 = pneg %p265
      %p272 = scmp.eq.s32.totalorder %s20, 1
      %p273 = por %p271, %p272
      %p274 = scmp.ne.s32.totalorder %s266, %s269
      %p275 = scmp.eq.s32.totalorder %s20, 0
      %p276 = por %p274, %p275
      %p277 = scmp.ne.s32.totalorder %s266, %s269
      %p278 = scmp.eq.s32.totalorder %s25, 1
      %p279 = por %p277, %p278
      %p280 = scmp.ne.s32.totalorder %s269, %s270
      %p281 = scmp.eq.s32.totalorder %s25, 0
      %p282 = por %p280, %p281
      %p283 = scmp.ne.s32.totalorder %s269, %s270
      %p284 = scmp.eq.s32.totalorder %s26, 1
      %p285 = por %p283, %p284
      %p287 = scmp.ne.s32.totalorder %s270, %s286
      %p288 = scmp.eq.s32.totalorder %s26, 0
      %p289 = por %p287, %p288
      %p290 = scmp.le.s32.totalorder 1, %s20
      %p291 = scmp.lt.s32.totalorder %s20, 3
      %p292 = pnand %p290, %p291
      %p293 = pneg %p292
      // Predicated region
      $region9: #{nature_cnn_forward.1} parent=5 // pred_check
        _
      $region10: #{nature_cnn_forward.1} parent=5 // pred_check_branch
        %295 = sbr.rel (%p292) target = $region12
      $region11: #{nature_cnn_forward.1} parent=5 // pred_region
        %s296 = ssub.s32 %s20, 1
        // Predicated region
        $region13: #{nature_cnn_forward.1} parent=11 // pred_check
          %p297 = pneg %p67
        $region14: #{nature_cnn_forward.1} parent=11 // pred_check_branch
          %299 = sbr.rel (%p297) target = $region16
        $region15: #{nature_cnn_forward.1} parent=11 // pred_region
          _
        $region16: #{nature_cnn_forward.1} parent=11 // pred_fallthru
          _
        // Predicated region
        $region17: #{nature_cnn_forward.1} parent=11 // pred_check
          %p300 = pneg %p88
        $region18: #{nature_cnn_forward.1} parent=11 // pred_check_branch
          %302 = sbr.rel (%p300) target = $region20
        $region19: #{nature_cnn_forward.1} parent=11 // pred_region
          _
        $region20: #{nature_cnn_forward.1} parent=11 // pred_fallthru
          _
        // Predicated region
        $region21: #{nature_cnn_forward.1} parent=11 // pred_check
          %p303 = pneg %p109
        $region22: #{nature_cnn_forward.1} parent=11 // pred_check_branch
          %305 = sbr.rel (%p303) target = $region24
        $region23: #{nature_cnn_forward.1} parent=11 // pred_region
          _
        $region24: #{nature_cnn_forward.1} parent=11 // pred_fallthru
          _
        // Predicated region
        $region25: #{nature_cnn_forward.1} parent=11 // pred_check
          %p306 = pneg %p130
        $region26: #{nature_cnn_forward.1} parent=11 // pred_check_branch
          %308 = sbr.rel (%p306) target = $region28
        $region27: #{nature_cnn_forward.1} parent=11 // pred_region
          _
        $region28: #{nature_cnn_forward.1} parent=11 // pred_fallthru
          _
        // Predicated region
        $region29: #{nature_cnn_forward.1} parent=11 // pred_check
          %p309 = pneg %p151
        $region30: #{nature_cnn_forward.1} parent=11 // pred_check_branch
          %311 = sbr.rel (%p309) target = $region32
        $region31: #{nature_cnn_forward.1} parent=11 // pred_region
          _
        $region32: #{nature_cnn_forward.1} parent=11 // pred_fallthru
          _
        // Predicated region
        $region33: #{nature_cnn_forward.1} parent=11 // pred_check
          %p312 = pneg %p172
        $region34: #{nature_cnn_forward.1} parent=11 // pred_check_branch
          %314 = sbr.rel (%p312) target = $region36
        $region35: #{nature_cnn_forward.1} parent=11 // pred_region
          _
        $region36: #{nature_cnn_forward.1} parent=11 // pred_fallthru
          _
        // Predicated region
        $region37: #{nature_cnn_forward.1} parent=11 // pred_check
          %p315 = pneg %p193
        $region38: #{nature_cnn_forward.1} parent=11 // pred_check_branch
          %317 = sbr.rel (%p315) target = $region40
        $region39: #{nature_cnn_forward.1} parent=11 // pred_region
          _
        $region40: #{nature_cnn_forward.1} parent=11 // pred_fallthru
          _
        // Predicated region
        $region41: #{nature_cnn_forward.1} parent=11 // pred_check
          %p318 = pneg %p214
        $region42: #{nature_cnn_forward.1} parent=11 // pred_check_branch
          %320 = sbr.rel (%p318) target = $region44
        $region43: #{nature_cnn_forward.1} parent=11 // pred_region
          _
        $region44: #{nature_cnn_forward.1} parent=11 // pred_fallthru
          _
        // Predicated region
        $region45: #{nature_cnn_forward.1} parent=11 // pred_check
          %p321 = pneg %p235
        $region46: #{nature_cnn_forward.1} parent=11 // pred_check_branch
          %323 = sbr.rel (%p321) target = $region48
        $region47: #{nature_cnn_forward.1} parent=11 // pred_region
          _
        $region48: #{nature_cnn_forward.1} parent=11 // pred_fallthru
          _
        // Predicated region
        $region49: #{nature_cnn_forward.1} parent=11 // pred_check
          %p324 = pneg %p256
        $region50: #{nature_cnn_forward.1} parent=11 // pred_check_branch
          %326 = sbr.rel (%p324) target = $region52
        $region51: #{nature_cnn_forward.1} parent=11 // pred_region
          _
        $region52: #{nature_cnn_forward.1} parent=11 // pred_fallthru
          _
      $region12: #{nature_cnn_forward.1} parent=5 // pred_fallthru
        _
      %p327 = scmp.lt.s32.totalorder %s20, 2
      // Predicated region
      $region53: #{nature_cnn_forward.1} parent=5 // pred_check
        %p328 = pneg %p327
      $region54: #{nature_cnn_forward.1} parent=5 // pred_check_branch
        %330 = sbr.rel (%p328) target = $region56
      $region55: #{nature_cnn_forward.1} parent=5 // pred_region
        // Predicated region
        $region57: #{nature_cnn_forward.1} parent=55 // pred_check
          %p331 = pneg %p40
        $region58: #{nature_cnn_forward.1} parent=55 // pred_check_branch
          %333 = sbr.rel (%p331) target = $region60
        $region59: #{nature_cnn_forward.1} parent=55 // pred_region
          %s334 = smul.u32 8, %s20
          %p335 = scmp.lt.s32.totalorder %s334, 15
          %s336 = scalar_select %p335, %s334, 15
          %s337 = smul.addr %s336, 16
          %s338 = smul.addr %s337, 4
          %s339 = scalar_lea.vmem %s0, %s338
          %s340 = smul.u32 8, %s20
        $region60: #{nature_cnn_forward.1} parent=55 // pred_fallthru
          _
      $region56: #{nature_cnn_forward.1} parent=5 // pred_fallthru
        _
      %p341 = scmp.le.s32.totalorder 1, %s20
      %p342 = scmp.lt.s32.totalorder %s20, 3
      %p343 = pnand %p341, %p342
      %p344 = pneg %p343
      // Predicated region
      $region61: #{nature_cnn_forward.1} parent=5 // pred_check
        _
      $region62: #{nature_cnn_forward.1} parent=5 // pred_check_branch
        %346 = sbr.rel (%p343) target = $region64
      $region63: #{nature_cnn_forward.1} parent=5 // pred_region
        %s347 = ssub.s32 %s20, 1
        %s348 = smul.u32 8, %s25
        %p349 = scmp.lt.s32.totalorder %s348, 15
        %s350 = scalar_select %p349, %s348, 15
        %s351 = smul.addr %s350, 16
        %s352 = smul.addr %s351, 4
        %s353 = scalar_lea.vmem %s0, %s352
        %p354 = pneg %p46
        %p355 = pneg %p43
        %p356 = pneg %p67
        %p357 = pneg %p64
        %p358 = pneg %p88
        %p359 = pneg %p85
        %p360 = pneg %p109
        %p361 = pneg %p106
        %p362 = pneg %p130
        %p363 = pneg %p127
        %p364 = pneg %p151
        %p365 = pneg %p148
        %p366 = pneg %p172
        %p367 = pneg %p169
        %p368 = pneg %p193
        %p369 = pneg %p190
        %p370 = pneg %p214
        %p371 = pneg %p211
        %p372 = pneg %p235
        %p373 = pneg %p232
        %p374 = pneg %p256
        %p375 = pneg %p253
        %p376 = pneg %p282
        %p377 = pneg %p279
        %s378 = sand.u32 %s269, 1
        %s379 = scalar_lea.sflag [#allocation3], %s378
        %s380 = sand.u32 %s269, 1
        %s381 = smul.addr %s380, 8
        %s382 = scalar_lea.vmem [#allocation2], %s381
        %s383 = smul.u32 8, %s25
        %p384 = scmp.lt.s32.totalorder %s383, 15
        %s385 = scalar_select %p384, %s383, 15
        %s386 = smul.addr %s385, 16
        %s387 = smul.addr %s386, 4
        %s388 = scalar_lea.vmem %s0, %s387
        %s389 = smul.u32 8, %s25
        %v391 = vld [vmem:[%s388] sm:$0xff]
        %v392 = vld [vmem:[%s388 + $0x8] sm:$0xff]
        %v393 = vld [vmem:[%s388 + $0x10] sm:$0xff]
        %v394 = vld [vmem:[%s388 + $0x18] sm:$0xff]
        %v395 = vld [vmem:[%s388 + $0x20] sm:$0xff]
        %v396 = vld [vmem:[%s388 + $0x28] sm:$0xff]
        %v397 = vld [vmem:[%s388 + $0x30] sm:$0xff]
        %v398 = vld [vmem:[%s388 + $0x38] sm:$0xff]
        %v399 = vld [vmem:[%s388 + $0x40] sm:$0xff]
        %v400 = vld [vmem:[%s388 + $0x48] sm:$0xff]
        %v401 = vld [vmem:[%s388 + $0x50] sm:$0xff]
        %v402 = vld [vmem:[%s388 + $0x58] sm:$0xff]
        %v403 = vld [vmem:[%s388 + $0x60] sm:$0xff]
        %v404 = vld [vmem:[%s388 + $0x68] sm:$0xff]
        %v405 = vld [vmem:[%s388 + $0x70] sm:$0xff]
        %v406 = vld [vmem:[%s388 + $0x78] sm:$0xff]
        %v407 = vld [vmem:[%s388 + $0x80] sm:$0xff]
        %v408 = vld [vmem:[%s388 + $0x88] sm:$0xff]
        %v409 = vld [vmem:[%s388 + $0x90] sm:$0xff]
        %v410 = vld [vmem:[%s388 + $0x98] sm:$0xff]
        %v411 = vld [vmem:[%s388 + $0xa0] sm:$0xff]
        %v412 = vld [vmem:[%s388 + $0xa8] sm:$0xff]
        %v413 = vld [vmem:[%s388 + $0xb0] sm:$0xff]
        %v414 = vld [vmem:[%s388 + $0xb8] sm:$0xff]
        %v415 = vld [vmem:[%s388 + $0xc0] sm:$0xff]
        %v416 = vld [vmem:[%s388 + $0xc8] sm:$0xff]
        %v417 = vld [vmem:[%s388 + $0xd0] sm:$0xff]
        %v418 = vld [vmem:[%s388 + $0xd8] sm:$0xff]
        %v419 = vld [vmem:[%s388 + $0xe0] sm:$0xff]
        %v420 = vld [vmem:[%s388 + $0xe8] sm:$0xff]
        %v421 = vld [vmem:[%s388 + $0xf0] sm:$0xff]
        %v422 = vld [vmem:[%s388 + $0xf8] sm:$0xff]
        %v423 = vld [vmem:[%s388 + $0x100] sm:$0xff]
        %v424 = vld [vmem:[%s388 + $0x108] sm:$0xff]
        %v425 = vld [vmem:[%s388 + $0x110] sm:$0xff]
        %v426 = vld [vmem:[%s388 + $0x118] sm:$0xff]
        %v427 = vld [vmem:[%s388 + $0x120] sm:$0xff]
        %v428 = vld [vmem:[%s388 + $0x128] sm:$0xff]
        %v429 = vld [vmem:[%s388 + $0x130] sm:$0xff]
        %v430 = vld [vmem:[%s388 + $0x138] sm:$0xff]
        %v431 = vld [vmem:[%s388 + $0x140] sm:$0xff]
        %v432 = vld [vmem:[%s388 + $0x148] sm:$0xff]
        %v433 = vld [vmem:[%s388 + $0x150] sm:$0xff]
        %v434 = vld [vmem:[%s388 + $0x158] sm:$0xff]
        %v435 = vld [vmem:[%s388 + $0x160] sm:$0xff]
        %v436 = vld [vmem:[%s388 + $0x168] sm:$0xff]
        %v437 = vld [vmem:[%s388 + $0x170] sm:$0xff]
        %v438 = vld [vmem:[%s388 + $0x178] sm:$0xff]
        %v439 = vld [vmem:[%s388 + $0x180] sm:$0xff]
        %v440 = vld [vmem:[%s388 + $0x188] sm:$0xff]
        %v441 = vld [vmem:[%s388 + $0x190] sm:$0xff]
        %v442 = vld [vmem:[%s388 + $0x198] sm:$0xff]
        %v443 = vld [vmem:[%s388 + $0x1a0] sm:$0xff]
        %v444 = vld [vmem:[%s388 + $0x1a8] sm:$0xff]
        %v445 = vld [vmem:[%s388 + $0x1b0] sm:$0xff]
        %v446 = vld [vmem:[%s388 + $0x1b8] sm:$0xff]
        %v447 = vld [vmem:[%s388 + $0x1c0] sm:$0xff]
        %v448 = vld [vmem:[%s388 + $0x1c8] sm:$0xff]
        %v449 = vld [vmem:[%s388 + $0x1d0] sm:$0xff]
        %v450 = vld [vmem:[%s388 + $0x1d8] sm:$0xff]
        %v451 = vld [vmem:[%s388 + $0x1e0] sm:$0xff]
        %v452 = vld [vmem:[%s388 + $0x1e8] sm:$0xff]
        %v453 = vld [vmem:[%s388 + $0x1f0] sm:$0xff]
        %v454 = vld [vmem:[%s388 + $0x1f8] sm:$0xff]
        %v455 = vld [vmem:[%s1] sm:$0xf]
        %v456 = vld [vmem:[%s1 + $0x4] sm:$0xf]
        %v457 = vld [vmem:[%s1 + $0x8] sm:$0xf]
        %v458 = vld [vmem:[%s1 + $0xc] sm:$0xf]
        %v459 = vld [vmem:[%s1 + $0x10] sm:$0xf]
        %v460 = vld [vmem:[%s1 + $0x14] sm:$0xf]
        %v461 = vld [vmem:[%s1 + $0x18] sm:$0xf]
        %v462 = vld [vmem:[%s1 + $0x1c] sm:$0xf]
        %v463 = vld [vmem:[%s1 + $0x20] sm:$0xf]
        %v464 = vld [vmem:[%s1 + $0x24] sm:$0xf]
        %v465 = vld [vmem:[%s1 + $0x28] sm:$0xf]
        %v466 = vld [vmem:[%s1 + $0x2c] sm:$0xf]
        %v467 = vld [vmem:[%s1 + $0x30] sm:$0xf]
        %v468 = vld [vmem:[%s1 + $0x34] sm:$0xf]
        %v469 = vld [vmem:[%s1 + $0x38] sm:$0xf]
        %v470 = vld [vmem:[%s1 + $0x3c] sm:$0xf]
        %v471 = vld [vmem:[%s1 + $0x40] sm:$0xf]
        %v472 = vld [vmem:[%s1 + $0x44] sm:$0xf]
        %v473 = vld [vmem:[%s1 + $0x48] sm:$0xf]
        %v474 = vld [vmem:[%s1 + $0x4c] sm:$0xf]
        %v475 = vld [vmem:[%s1 + $0x50] sm:$0xf]
        %v476 = vld [vmem:[%s1 + $0x54] sm:$0xf]
        %v477 = vld [vmem:[%s1 + $0x58] sm:$0xf]
        %v478 = vld [vmem:[%s1 + $0x5c] sm:$0xf]
        %v479 = vld [vmem:[%s1 + $0x60] sm:$0xf]
        %v480 = vld [vmem:[%s1 + $0x64] sm:$0xf]
        %v481 = vld [vmem:[%s1 + $0x68] sm:$0xf]
        %v482 = vld [vmem:[%s1 + $0x6c] sm:$0xf]
        %v483 = vld [vmem:[%s1 + $0x70] sm:$0xf]
        %v484 = vld [vmem:[%s1 + $0x74] sm:$0xf]
        %v485 = vld [vmem:[%s1 + $0x78] sm:$0xf]
        %v486 = vld [vmem:[%s1 + $0x7c] sm:$0xf]
        %v487 = vld [vmem:[%s1 + $0x80] sm:$0xf]
        %v488 = vld [vmem:[%s1 + $0x84] sm:$0xf]
        %v489 = vld [vmem:[%s1 + $0x88] sm:$0xf]
        %v490 = vld [vmem:[%s1 + $0x8c] sm:$0xf]
        %v491 = vld [vmem:[%s1 + $0x90] sm:$0xf]
        %v492 = vld [vmem:[%s1 + $0x94] sm:$0xf]
        %v493 = vld [vmem:[%s1 + $0x98] sm:$0xf]
        %v494 = vld [vmem:[%s1 + $0x9c] sm:$0xf]
        %v495 = vld [vmem:[%s1 + $0xa0] sm:$0xf]
        %v496 = vld [vmem:[%s1 + $0xa4] sm:$0xf]
        %v497 = vld [vmem:[%s1 + $0xa8] sm:$0xf]
        %v498 = vld [vmem:[%s1 + $0xac] sm:$0xf]
        %v499 = vld [vmem:[%s1 + $0xb0] sm:$0xf]
        %v500 = vld [vmem:[%s1 + $0xb4] sm:$0xf]
        %v501 = vld [vmem:[%s1 + $0xb8] sm:$0xf]
        %v502 = vld [vmem:[%s1 + $0xbc] sm:$0xf]
        %v503 = vld [vmem:[%s1 + $0xc0] sm:$0xf]
        %v504 = vld [vmem:[%s1 + $0xc4] sm:$0xf]
        %v505 = vld [vmem:[%s1 + $0xc8] sm:$0xf]
        %v506 = vld [vmem:[%s1 + $0xcc] sm:$0xf]
        %v507 = vld [vmem:[%s1 + $0xd0] sm:$0xf]
        %v508 = vld [vmem:[%s1 + $0xd4] sm:$0xf]
        %v509 = vld [vmem:[%s1 + $0xd8] sm:$0xf]
        %v510 = vld [vmem:[%s1 + $0xdc] sm:$0xf]
        %v511 = vld [vmem:[%s1 + $0xe0] sm:$0xf]
        %v512 = vld [vmem:[%s1 + $0xe4] sm:$0xf]
        %v513 = vld [vmem:[%s1 + $0xe8] sm:$0xf]
        %v514 = vld [vmem:[%s1 + $0xec] sm:$0xf]
        %v515 = vld [vmem:[%s1 + $0xf0] sm:$0xf]
        %v516 = vld [vmem:[%s1 + $0xf4] sm:$0xf]
        %v517 = vld [vmem:[%s1 + $0xf8] sm:$0xf]
        %v518 = vld [vmem:[%s1 + $0xfc] sm:$0xf]
        %v519 = vld [vmem:[%s1 + $0x100] sm:$0xf]
        %v520 = vld [vmem:[%s1 + $0x104] sm:$0xf]
        %v521 = vld [vmem:[%s1 + $0x108] sm:$0xf]
        %v522 = vld [vmem:[%s1 + $0x10c] sm:$0xf]
        %v523 = vld [vmem:[%s1 + $0x110] sm:$0xf]
        %v524 = vld [vmem:[%s1 + $0x114] sm:$0xf]
        %v525 = vld [vmem:[%s1 + $0x118] sm:$0xf]
        %v526 = vld [vmem:[%s1 + $0x11c] sm:$0xf]
        %v527 = vld [vmem:[%s1 + $0x120] sm:$0xf]
        %v528 = vld [vmem:[%s1 + $0x124] sm:$0xf]
        %v529 = vld [vmem:[%s1 + $0x128] sm:$0xf]
        %v530 = vld [vmem:[%s1 + $0x12c] sm:$0xf]
        %v531 = vld [vmem:[%s1 + $0x130] sm:$0xf]
        %v532 = vld [vmem:[%s1 + $0x134] sm:$0xf]
        %v533 = vld [vmem:[%s1 + $0x138] sm:$0xf]
        %v534 = vld [vmem:[%s1 + $0x13c] sm:$0xf]
        %v535 = vld [vmem:[%s1 + $0x140] sm:$0xf]
        %v536 = vld [vmem:[%s1 + $0x144] sm:$0xf]
        %v537 = vld [vmem:[%s1 + $0x148] sm:$0xf]
        %v538 = vld [vmem:[%s1 + $0x14c] sm:$0xf]
        %v539 = vld [vmem:[%s1 + $0x150] sm:$0xf]
        %v540 = vld [vmem:[%s1 + $0x154] sm:$0xf]
        %v541 = vld [vmem:[%s1 + $0x158] sm:$0xf]
        %v542 = vld [vmem:[%s1 + $0x15c] sm:$0xf]
        %v543 = vld [vmem:[%s1 + $0x160] sm:$0xf]
        %v544 = vld [vmem:[%s1 + $0x164] sm:$0xf]
        %v545 = vld [vmem:[%s1 + $0x168] sm:$0xf]
        %v546 = vld [vmem:[%s1 + $0x16c] sm:$0xf]
        %v547 = vld [vmem:[%s1 + $0x170] sm:$0xf]
        %v548 = vld [vmem:[%s1 + $0x174] sm:$0xf]
        %v549 = vld [vmem:[%s1 + $0x178] sm:$0xf]
        %v550 = vld [vmem:[%s1 + $0x17c] sm:$0xf]
        %v551 = vld [vmem:[%s1 + $0x180] sm:$0xf]
        %v552 = vld [vmem:[%s1 + $0x184] sm:$0xf]
        %v553 = vld [vmem:[%s1 + $0x188] sm:$0xf]
        %v554 = vld [vmem:[%s1 + $0x18c] sm:$0xf]
        %v555 = vld [vmem:[%s1 + $0x190] sm:$0xf]
        %v556 = vld [vmem:[%s1 + $0x194] sm:$0xf]
        %v557 = vld [vmem:[%s1 + $0x198] sm:$0xf]
        %v558 = vld [vmem:[%s1 + $0x19c] sm:$0xf]
        %v559 = vld [vmem:[%s1 + $0x1a0] sm:$0xf]
        %v560 = vld [vmem:[%s1 + $0x1a4] sm:$0xf]
        %v561 = vld [vmem:[%s1 + $0x1a8] sm:$0xf]
        %v562 = vld [vmem:[%s1 + $0x1ac] sm:$0xf]
        %v563 = vld [vmem:[%s1 + $0x1b0] sm:$0xf]
        %v564 = vld [vmem:[%s1 + $0x1b4] sm:$0xf]
        %v565 = vld [vmem:[%s1 + $0x1b8] sm:$0xf]
        %v566 = vld [vmem:[%s1 + $0x1bc] sm:$0xf]
        %v567 = vld [vmem:[%s1 + $0x1c0] sm:$0xf]
        %v568 = vld [vmem:[%s1 + $0x1c4] sm:$0xf]
        %v569 = vld [vmem:[%s1 + $0x1c8] sm:$0xf]
        %v570 = vld [vmem:[%s1 + $0x1cc] sm:$0xf]
        %v571 = vld [vmem:[%s1 + $0x1d0] sm:$0xf]
        %v572 = vld [vmem:[%s1 + $0x1d4] sm:$0xf]
        %v573 = vld [vmem:[%s1 + $0x1d8] sm:$0xf]
        %v574 = vld [vmem:[%s1 + $0x1dc] sm:$0xf]
        %v575 = vld [vmem:[%s1 + $0x1e0] sm:$0xf]
        %v576 = vld [vmem:[%s1 + $0x1e4] sm:$0xf]
        %v577 = vld [vmem:[%s1 + $0x1e8] sm:$0xf]
        %v578 = vld [vmem:[%s1 + $0x1ec] sm:$0xf]
        %v579 = vld [vmem:[%s1 + $0x1f0] sm:$0xf]
        %v580 = vld [vmem:[%s1 + $0x1f4] sm:$0xf]
        %v581 = vld [vmem:[%s1 + $0x1f8] sm:$0xf]
        %v582 = vld [vmem:[%s1 + $0x1fc] sm:$0xf]
        %v583 = vld [vmem:[%s2] sm:$0x1]
        %v585 = vperm.slane %v583, 0
        %v651 = vunpack.c.l.b16 %v391
        %v652 = vunpack.c.h.b16 %v391
        %v653 = vunpack.c.l.b16 %v392
        %v654 = vunpack.c.h.b16 %v392
        %v655 = vunpack.c.l.b16 %v393
        %v656 = vunpack.c.h.b16 %v393
        %v657 = vunpack.c.l.b16 %v394
        %v658 = vunpack.c.h.b16 %v394
        %v659 = vunpack.c.l.b16 %v395
        %v660 = vunpack.c.h.b16 %v395
        %v661 = vunpack.c.l.b16 %v396
        %v662 = vunpack.c.h.b16 %v396
        %v663 = vunpack.c.l.b16 %v397
        %v664 = vunpack.c.h.b16 %v397
        %v665 = vunpack.c.l.b16 %v398
        %v666 = vunpack.c.h.b16 %v398
        %v667 = vunpack.c.l.b16 %v399
        %v668 = vunpack.c.h.b16 %v399
        %v669 = vunpack.c.l.b16 %v400
        %v670 = vunpack.c.h.b16 %v400
        %v671 = vunpack.c.l.b16 %v401
        %v672 = vunpack.c.h.b16 %v401
        %v673 = vunpack.c.l.b16 %v402
        %v674 = vunpack.c.h.b16 %v402
        %v675 = vunpack.c.l.b16 %v403
        %v676 = vunpack.c.h.b16 %v403
        %v677 = vunpack.c.l.b16 %v404
        %v678 = vunpack.c.h.b16 %v404
        %v679 = vunpack.c.l.b16 %v405
        %v680 = vunpack.c.h.b16 %v405
        %v681 = vunpack.c.l.b16 %v406
        %v682 = vunpack.c.h.b16 %v406
        %v683 = vunpack.c.l.b16 %v407
        %v684 = vunpack.c.h.b16 %v407
        %v685 = vunpack.c.l.b16 %v408
        %v686 = vunpack.c.h.b16 %v408
        %v687 = vunpack.c.l.b16 %v409
        %v688 = vunpack.c.h.b16 %v409
        %v689 = vunpack.c.l.b16 %v410
        %v690 = vunpack.c.h.b16 %v410
        %v691 = vunpack.c.l.b16 %v411
        %v692 = vunpack.c.h.b16 %v411
        %v693 = vunpack.c.l.b16 %v412
        %v694 = vunpack.c.h.b16 %v412
        %v695 = vunpack.c.l.b16 %v413
        %v696 = vunpack.c.h.b16 %v413
        %v697 = vunpack.c.l.b16 %v414
        %v698 = vunpack.c.h.b16 %v414
        %v699 = vunpack.c.l.b16 %v415
        %v700 = vunpack.c.h.b16 %v415
        %v701 = vunpack.c.l.b16 %v416
        %v702 = vunpack.c.h.b16 %v416
        %v703 = vunpack.c.l.b16 %v417
        %v704 = vunpack.c.h.b16 %v417
        %v705 = vunpack.c.l.b16 %v418
        %v706 = vunpack.c.h.b16 %v418
        %v707 = vunpack.c.l.b16 %v419
        %v708 = vunpack.c.h.b16 %v419
        %v709 = vunpack.c.l.b16 %v420
        %v710 = vunpack.c.h.b16 %v420
        %v711 = vunpack.c.l.b16 %v421
        %v712 = vunpack.c.h.b16 %v421
        %v713 = vunpack.c.l.b16 %v422
        %v714 = vunpack.c.h.b16 %v422
        %v715 = vunpack.c.l.b16 %v423
        %v716 = vunpack.c.h.b16 %v423
        %v717 = vunpack.c.l.b16 %v424
        %v718 = vunpack.c.h.b16 %v424
        %v719 = vunpack.c.l.b16 %v425
        %v720 = vunpack.c.h.b16 %v425
        %v721 = vunpack.c.l.b16 %v426
        %v722 = vunpack.c.h.b16 %v426
        %v723 = vunpack.c.l.b16 %v427
        %v724 = vunpack.c.h.b16 %v427
        %v725 = vunpack.c.l.b16 %v428
        %v726 = vunpack.c.h.b16 %v428
        %v727 = vunpack.c.l.b16 %v429
        %v728 = vunpack.c.h.b16 %v429
        %v729 = vunpack.c.l.b16 %v430
        %v730 = vunpack.c.h.b16 %v430
        %v731 = vunpack.c.l.b16 %v431
        %v732 = vunpack.c.h.b16 %v431
        %v733 = vunpack.c.l.b16 %v432
        %v734 = vunpack.c.h.b16 %v432
        %v735 = vunpack.c.l.b16 %v433
        %v736 = vunpack.c.h.b16 %v433
        %v737 = vunpack.c.l.b16 %v434
        %v738 = vunpack.c.h.b16 %v434
        %v739 = vunpack.c.l.b16 %v435
        %v740 = vunpack.c.h.b16 %v435
        %v741 = vunpack.c.l.b16 %v436
        %v742 = vunpack.c.h.b16 %v436
        %v743 = vunpack.c.l.b16 %v437
        %v744 = vunpack.c.h.b16 %v437
        %v745 = vunpack.c.l.b16 %v438
        %v746 = vunpack.c.h.b16 %v438
        %v747 = vunpack.c.l.b16 %v439
        %v748 = vunpack.c.h.b16 %v439
        %v749 = vunpack.c.l.b16 %v440
        %v750 = vunpack.c.h.b16 %v440
        %v751 = vunpack.c.l.b16 %v441
        %v752 = vunpack.c.h.b16 %v441
        %v753 = vunpack.c.l.b16 %v442
        %v754 = vunpack.c.h.b16 %v442
        %v755 = vunpack.c.l.b16 %v443
        %v756 = vunpack.c.h.b16 %v443
        %v757 = vunpack.c.l.b16 %v444
        %v758 = vunpack.c.h.b16 %v444
        %v759 = vunpack.c.l.b16 %v445
        %v760 = vunpack.c.h.b16 %v445
        %v761 = vunpack.c.l.b16 %v446
        %v762 = vunpack.c.h.b16 %v446
        %v763 = vunpack.c.l.b16 %v447
        %v764 = vunpack.c.h.b16 %v447
        %v765 = vunpack.c.l.b16 %v448
        %v766 = vunpack.c.h.b16 %v448
        %v767 = vunpack.c.l.b16 %v449
        %v768 = vunpack.c.h.b16 %v449
        %v769 = vunpack.c.l.b16 %v450
        %v770 = vunpack.c.h.b16 %v450
        %v771 = vunpack.c.l.b16 %v451
        %v772 = vunpack.c.h.b16 %v451
        %v773 = vunpack.c.l.b16 %v452
        %v774 = vunpack.c.h.b16 %v452
        %v775 = vunpack.c.l.b16 %v453
        %v776 = vunpack.c.h.b16 %v453
        %v777 = vunpack.c.l.b16 %v454
        %v778 = vunpack.c.h.b16 %v454
        %v779 = vpack.c.b16 %v659, %v651
        %v780 = vpack.c.b16 %v660, %v652
        %v781 = vpack.c.b16 %v661, %v653
        %v782 = vpack.c.b16 %v662, %v654
        %v783 = vpack.c.b16 %v663, %v655
        %v784 = vpack.c.b16 %v664, %v656
        %v785 = vpack.c.b16 %v665, %v657
        %v786 = vpack.c.b16 %v666, %v658
        %v787 = vpack.c.b16 %v675, %v667
        %v788 = vpack.c.b16 %v676, %v668
        %v789 = vpack.c.b16 %v677, %v669
        %v790 = vpack.c.b16 %v678, %v670
        %v791 = vpack.c.b16 %v679, %v671
        %v792 = vpack.c.b16 %v680, %v672
        %v793 = vpack.c.b16 %v681, %v673
        %v794 = vpack.c.b16 %v682, %v674
        %v795 = vpack.c.b16 %v691, %v683
        %v796 = vpack.c.b16 %v692, %v684
        %v797 = vpack.c.b16 %v693, %v685
        %v798 = vpack.c.b16 %v694, %v686
        %v799 = vpack.c.b16 %v695, %v687
        %v800 = vpack.c.b16 %v696, %v688
        %v801 = vpack.c.b16 %v697, %v689
        %v802 = vpack.c.b16 %v698, %v690
        %v803 = vpack.c.b16 %v707, %v699
        %v804 = vpack.c.b16 %v708, %v700
        %v805 = vpack.c.b16 %v709, %v701
        %v806 = vpack.c.b16 %v710, %v702
        %v807 = vpack.c.b16 %v711, %v703
        %v808 = vpack.c.b16 %v712, %v704
        %v809 = vpack.c.b16 %v713, %v705
        %v810 = vpack.c.b16 %v714, %v706
        %v811 = vpack.c.b16 %v723, %v715
        %v812 = vpack.c.b16 %v724, %v716
        %v813 = vpack.c.b16 %v725, %v717
        %v814 = vpack.c.b16 %v726, %v718
        %v815 = vpack.c.b16 %v727, %v719
        %v816 = vpack.c.b16 %v728, %v720
        %v817 = vpack.c.b16 %v729, %v721
        %v818 = vpack.c.b16 %v730, %v722
        %v819 = vpack.c.b16 %v739, %v731
        %v820 = vpack.c.b16 %v740, %v732
        %v821 = vpack.c.b16 %v741, %v733
        %v822 = vpack.c.b16 %v742, %v734
        %v823 = vpack.c.b16 %v743, %v735
        %v824 = vpack.c.b16 %v744, %v736
        %v825 = vpack.c.b16 %v745, %v737
        %v826 = vpack.c.b16 %v746, %v738
        %v827 = vpack.c.b16 %v755, %v747
        %v828 = vpack.c.b16 %v756, %v748
        %v829 = vpack.c.b16 %v757, %v749
        %v830 = vpack.c.b16 %v758, %v750
        %v831 = vpack.c.b16 %v759, %v751
        %v832 = vpack.c.b16 %v760, %v752
        %v833 = vpack.c.b16 %v761, %v753
        %v834 = vpack.c.b16 %v762, %v754
        %v835 = vpack.c.b16 %v771, %v763
        %v836 = vpack.c.b16 %v772, %v764
        %v837 = vpack.c.b16 %v773, %v765
        %v838 = vpack.c.b16 %v774, %v766
        %v839 = vpack.c.b16 %v775, %v767
        %v840 = vpack.c.b16 %v776, %v768
        %v841 = vpack.c.b16 %v777, %v769
        %v842 = vpack.c.b16 %v778, %v770
        %v1035 = vunpack.c.l.b16 %v455
        %v1036 = vunpack.c.l.b16 %v456
        %v1037 = vunpack.c.l.b16 %v457
        %v1038 = vunpack.c.l.b16 %v458
        %v1039 = vunpack.c.l.b16 %v459
        %v1040 = vunpack.c.l.b16 %v460
        %v1041 = vunpack.c.l.b16 %v461
        %v1042 = vunpack.c.l.b16 %v462
        %v1043 = vunpack.c.l.b16 %v463
        %v1044 = vunpack.c.l.b16 %v464
        %v1045 = vunpack.c.l.b16 %v465
        %v1046 = vunpack.c.l.b16 %v466
        %v1047 = vunpack.c.l.b16 %v467
        %v1048 = vunpack.c.l.b16 %v468
        %v1049 = vunpack.c.l.b16 %v469
        %v1050 = vunpack.c.l.b16 %v470
        %v1051 = vunpack.c.l.b16 %v471
        %v1052 = vunpack.c.l.b16 %v472
        %v1053 = vunpack.c.l.b16 %v473
        %v1054 = vunpack.c.l.b16 %v474
        %v1055 = vunpack.c.l.b16 %v475
        %v1056 = vunpack.c.l.b16 %v476
        %v1057 = vunpack.c.l.b16 %v477
        %v1058 = vunpack.c.l.b16 %v478
        %v1059 = vunpack.c.l.b16 %v479
        %v1060 = vunpack.c.l.b16 %v480
        %v1061 = vunpack.c.l.b16 %v481
        %v1062 = vunpack.c.l.b16 %v482
        %v1063 = vunpack.c.l.b16 %v483
        %v1064 = vunpack.c.l.b16 %v484
        %v1065 = vunpack.c.l.b16 %v485
        %v1066 = vunpack.c.l.b16 %v486
        %v1067 = vunpack.c.l.b16 %v487
        %v1068 = vunpack.c.l.b16 %v488
        %v1069 = vunpack.c.l.b16 %v489
        %v1070 = vunpack.c.l.b16 %v490
        %v1071 = vunpack.c.l.b16 %v491
        %v1072 = vunpack.c.l.b16 %v492
        %v1073 = vunpack.c.l.b16 %v493
        %v1074 = vunpack.c.l.b16 %v494
        %v1075 = vunpack.c.l.b16 %v495
        %v1076 = vunpack.c.l.b16 %v496
        %v1077 = vunpack.c.l.b16 %v497
        %v1078 = vunpack.c.l.b16 %v498
        %v1079 = vunpack.c.l.b16 %v499
        %v1080 = vunpack.c.l.b16 %v500
        %v1081 = vunpack.c.l.b16 %v501
        %v1082 = vunpack.c.l.b16 %v502
        %v1083 = vunpack.c.l.b16 %v503
        %v1084 = vunpack.c.l.b16 %v504
        %v1085 = vunpack.c.l.b16 %v505
        %v1086 = vunpack.c.l.b16 %v506
        %v1087 = vunpack.c.l.b16 %v507
        %v1088 = vunpack.c.l.b16 %v508
        %v1089 = vunpack.c.l.b16 %v509
        %v1090 = vunpack.c.l.b16 %v510
        %v1091 = vunpack.c.l.b16 %v511
        %v1092 = vunpack.c.l.b16 %v512
        %v1093 = vunpack.c.l.b16 %v513
        %v1094 = vunpack.c.l.b16 %v514
        %v1095 = vunpack.c.l.b16 %v515
        %v1096 = vunpack.c.l.b16 %v516
        %v1097 = vunpack.c.l.b16 %v517
        %v1098 = vunpack.c.l.b16 %v518
        %v1099 = vunpack.c.l.b16 %v519
        %v1100 = vunpack.c.l.b16 %v520
        %v1101 = vunpack.c.l.b16 %v521
        %v1102 = vunpack.c.l.b16 %v522
        %v1103 = vunpack.c.l.b16 %v523
        %v1104 = vunpack.c.l.b16 %v524
        %v1105 = vunpack.c.l.b16 %v525
        %v1106 = vunpack.c.l.b16 %v526
        %v1107 = vunpack.c.l.b16 %v527
        %v1108 = vunpack.c.l.b16 %v528
        %v1109 = vunpack.c.l.b16 %v529
        %v1110 = vunpack.c.l.b16 %v530
        %v1111 = vunpack.c.l.b16 %v531
        %v1112 = vunpack.c.l.b16 %v532
        %v1113 = vunpack.c.l.b16 %v533
        %v1114 = vunpack.c.l.b16 %v534
        %v1115 = vunpack.c.l.b16 %v535
        %v1116 = vunpack.c.l.b16 %v536
        %v1117 = vunpack.c.l.b16 %v537
        %v1118 = vunpack.c.l.b16 %v538
        %v1119 = vunpack.c.l.b16 %v539
        %v1120 = vunpack.c.l.b16 %v540
        %v1121 = vunpack.c.l.b16 %v541
        %v1122 = vunpack.c.l.b16 %v542
        %v1123 = vunpack.c.l.b16 %v543
        %v1124 = vunpack.c.l.b16 %v544
        %v1125 = vunpack.c.l.b16 %v545
        %v1126 = vunpack.c.l.b16 %v546
        %v1127 = vunpack.c.l.b16 %v547
        %v1128 = vunpack.c.l.b16 %v548
        %v1129 = vunpack.c.l.b16 %v549
        %v1130 = vunpack.c.l.b16 %v550
        %v1131 = vunpack.c.l.b16 %v551
        %v1132 = vunpack.c.l.b16 %v552
        %v1133 = vunpack.c.l.b16 %v553
        %v1134 = vunpack.c.l.b16 %v554
        %v1135 = vunpack.c.l.b16 %v555
        %v1136 = vunpack.c.l.b16 %v556
        %v1137 = vunpack.c.l.b16 %v557
        %v1138 = vunpack.c.l.b16 %v558
        %v1139 = vunpack.c.l.b16 %v559
        %v1140 = vunpack.c.l.b16 %v560
        %v1141 = vunpack.c.l.b16 %v561
        %v1142 = vunpack.c.l.b16 %v562
        %v1143 = vunpack.c.l.b16 %v563
        %v1144 = vunpack.c.l.b16 %v564
        %v1145 = vunpack.c.l.b16 %v565
        %v1146 = vunpack.c.l.b16 %v566
        %v1147 = vunpack.c.l.b16 %v567
        %v1148 = vunpack.c.l.b16 %v568
        %v1149 = vunpack.c.l.b16 %v569
        %v1150 = vunpack.c.l.b16 %v570
        %v1151 = vunpack.c.l.b16 %v571
        %v1152 = vunpack.c.l.b16 %v572
        %v1153 = vunpack.c.l.b16 %v573
        %v1154 = vunpack.c.l.b16 %v574
        %v1155 = vunpack.c.l.b16 %v575
        %v1156 = vunpack.c.l.b16 %v576
        %v1157 = vunpack.c.l.b16 %v577
        %v1158 = vunpack.c.l.b16 %v578
        %v1159 = vunpack.c.l.b16 %v579
        %v1160 = vunpack.c.l.b16 %v580
        %v1161 = vunpack.c.l.b16 %v581
        %v1162 = vunpack.c.l.b16 %v582
        %v1163 = vpack.c.b16 %v1036, %v1035
        %v1164 = vpack.c.b16 %v1038, %v1037
        %v1165 = vpack.c.b16 %v1040, %v1039
        %v1166 = vpack.c.b16 %v1042, %v1041
        %v1167 = vpack.c.b16 %v1044, %v1043
        %v1168 = vpack.c.b16 %v1046, %v1045
        %v1169 = vpack.c.b16 %v1048, %v1047
        %v1170 = vpack.c.b16 %v1050, %v1049
        %v1171 = vpack.c.b16 %v1052, %v1051
        %v1172 = vpack.c.b16 %v1054, %v1053
        %v1173 = vpack.c.b16 %v1056, %v1055
        %v1174 = vpack.c.b16 %v1058, %v1057
        %v1175 = vpack.c.b16 %v1060, %v1059
        %v1176 = vpack.c.b16 %v1062, %v1061
        %v1177 = vpack.c.b16 %v1064, %v1063
        %v1178 = vpack.c.b16 %v1066, %v1065
        %v1179 = vpack.c.b16 %v1068, %v1067
        %v1180 = vpack.c.b16 %v1070, %v1069
        %v1181 = vpack.c.b16 %v1072, %v1071
        %v1182 = vpack.c.b16 %v1074, %v1073
        %v1183 = vpack.c.b16 %v1076, %v1075
        %v1184 = vpack.c.b16 %v1078, %v1077
        %v1185 = vpack.c.b16 %v1080, %v1079
        %v1186 = vpack.c.b16 %v1082, %v1081
        %v1187 = vpack.c.b16 %v1084, %v1083
        %v1188 = vpack.c.b16 %v1086, %v1085
        %v1189 = vpack.c.b16 %v1088, %v1087
        %v1190 = vpack.c.b16 %v1090, %v1089
        %v1191 = vpack.c.b16 %v1092, %v1091
        %v1192 = vpack.c.b16 %v1094, %v1093
        %v1193 = vpack.c.b16 %v1096, %v1095
        %v1194 = vpack.c.b16 %v1098, %v1097
        %v1195 = vpack.c.b16 %v1100, %v1099
        %v1196 = vpack.c.b16 %v1102, %v1101
        %v1197 = vpack.c.b16 %v1104, %v1103
        %v1198 = vpack.c.b16 %v1106, %v1105
        %v1199 = vpack.c.b16 %v1108, %v1107
        %v1200 = vpack.c.b16 %v1110, %v1109
        %v1201 = vpack.c.b16 %v1112, %v1111
        %v1202 = vpack.c.b16 %v1114, %v1113
        %v1203 = vpack.c.b16 %v1116, %v1115
        %v1204 = vpack.c.b16 %v1118, %v1117
        %v1205 = vpack.c.b16 %v1120, %v1119
        %v1206 = vpack.c.b16 %v1122, %v1121
        %v1207 = vpack.c.b16 %v1124, %v1123
        %v1208 = vpack.c.b16 %v1126, %v1125
        %v1209 = vpack.c.b16 %v1128, %v1127
        %v1210 = vpack.c.b16 %v1130, %v1129
        %v1211 = vpack.c.b16 %v1132, %v1131
        %v1212 = vpack.c.b16 %v1134, %v1133
        %v1213 = vpack.c.b16 %v1136, %v1135
        %v1214 = vpack.c.b16 %v1138, %v1137
        %v1215 = vpack.c.b16 %v1140, %v1139
        %v1216 = vpack.c.b16 %v1142, %v1141
        %v1217 = vpack.c.b16 %v1144, %v1143
        %v1218 = vpack.c.b16 %v1146, %v1145
        %v1219 = vpack.c.b16 %v1148, %v1147
        %v1220 = vpack.c.b16 %v1150, %v1149
        %v1221 = vpack.c.b16 %v1152, %v1151
        %v1222 = vpack.c.b16 %v1154, %v1153
        %v1223 = vpack.c.b16 %v1156, %v1155
        %v1224 = vpack.c.b16 %v1158, %v1157
        %v1225 = vpack.c.b16 %v1160, %v1159
        %v1226 = vpack.c.b16 %v1162, %v1161
        %1291 = vmatpush.bf16.msra.mxu0 %v1170
        %1292 = vmatpush.bf16.msra.mxu0 %v1169
        %1293 = vmatpush.bf16.msra.mxu0 %v1168
        %1294 = vmatpush.bf16.msra.mxu0 %v1167
        %1295 = vmatpush.bf16.msra.mxu0 %v1166
        %1296 = vmatpush.bf16.msra.mxu0 %v1165
        %1297 = vmatpush.bf16.msra.mxu0 %v1164
        %1298 = vmatpush.bf16.msra.mxu0 %v1163
        %1299 = vmatmul.bf16.gmra.mxu0 %v779
        %v1300 = vpop.f32.mrf.mxu0
        %v1301 = vadd.f32 %v585, %v1300
        %v1302 = vpop.f32.mrf.mxu0
        %v1303 = vadd.f32 %v585, %v1302
        %1304 = vmatmul.bf16.gmra.mxu0 %v787
        %v1305 = vpop.f32.mrf.mxu0
        %v1306 = vadd.f32 %v585, %v1305
        %v1307 = vpop.f32.mrf.mxu0
        %v1308 = vadd.f32 %v585, %v1307
        %1309 = vmatmul.bf16.gmra.mxu0 %v795
        %v1310 = vpop.f32.mrf.mxu0
        %v1311 = vadd.f32 %v585, %v1310
        %v1312 = vpop.f32.mrf.mxu0
        %v1313 = vadd.f32 %v585, %v1312
        %1314 = vmatmul.bf16.gmra.mxu0 %v803
        %v1315 = vpop.f32.mrf.mxu0
        %v1316 = vadd.f32 %v585, %v1315
        %v1317 = vpop.f32.mrf.mxu0
        %v1318 = vadd.f32 %v585, %v1317
        %1319 = vmatmul.bf16.gmra.mxu0 %v811
        %v1320 = vpop.f32.mrf.mxu0
        %v1321 = vadd.f32 %v585, %v1320
        %v1322 = vpop.f32.mrf.mxu0
        %v1323 = vadd.f32 %v585, %v1322
        %1324 = vmatmul.bf16.gmra.mxu0 %v819
        %v1325 = vpop.f32.mrf.mxu0
        %v1326 = vadd.f32 %v585, %v1325
        %v1327 = vpop.f32.mrf.mxu0
        %v1328 = vadd.f32 %v585, %v1327
        %1329 = vmatmul.bf16.gmra.mxu0 %v827
        %v1330 = vpop.f32.mrf.mxu0
        %v1331 = vadd.f32 %v585, %v1330
        %v1332 = vpop.f32.mrf.mxu0
        %v1333 = vadd.f32 %v585, %v1332
        %1334 = vmatmul.bf16.gmra.mxu0 %v835
        %v1335 = vpop.f32.mrf.mxu0
        %v1336 = vadd.f32 %v585, %v1335
        %v1337 = vpop.f32.mrf.mxu0
        %v1338 = vadd.f32 %v585, %v1337
        %1339 = vdwg.mxu0
        %1340 = vmatpush.bf16.msra.mxu0 %v1178
        %1341 = vmatpush.bf16.msra.mxu0 %v1177
        %1342 = vmatpush.bf16.msra.mxu0 %v1176
        %1343 = vmatpush.bf16.msra.mxu0 %v1175
        %1344 = vmatpush.bf16.msra.mxu0 %v1174
        %1345 = vmatpush.bf16.msra.mxu0 %v1173
        %1346 = vmatpush.bf16.msra.mxu0 %v1172
        %1347 = vmatpush.bf16.msra.mxu0 %v1171
        %1348 = vmatmul.bf16.gmra.mxu0 %v780
        %v1349 = vpop.f32.mrf.mxu0
        %v1350 = vadd.f32 %v1301, %v1349
        %v1351 = vpop.f32.mrf.mxu0
        %v1352 = vadd.f32 %v1303, %v1351
        %1353 = vmatmul.bf16.gmra.mxu0 %v788
        %v1354 = vpop.f32.mrf.mxu0
        %v1355 = vadd.f32 %v1306, %v1354
        %v1356 = vpop.f32.mrf.mxu0
        %v1357 = vadd.f32 %v1308, %v1356
        %1358 = vmatmul.bf16.gmra.mxu0 %v796
        %v1359 = vpop.f32.mrf.mxu0
        %v1360 = vadd.f32 %v1311, %v1359
        %v1361 = vpop.f32.mrf.mxu0
        %v1362 = vadd.f32 %v1313, %v1361
        %1363 = vmatmul.bf16.gmra.mxu0 %v804
        %v1364 = vpop.f32.mrf.mxu0
        %v1365 = vadd.f32 %v1316, %v1364
        %v1366 = vpop.f32.mrf.mxu0
        %v1367 = vadd.f32 %v1318, %v1366
        %1368 = vmatmul.bf16.gmra.mxu0 %v812
        %v1369 = vpop.f32.mrf.mxu0
        %v1370 = vadd.f32 %v1321, %v1369
        %v1371 = vpop.f32.mrf.mxu0
        %v1372 = vadd.f32 %v1323, %v1371
        %1373 = vmatmul.bf16.gmra.mxu0 %v820
        %v1374 = vpop.f32.mrf.mxu0
        %v1375 = vadd.f32 %v1326, %v1374
        %v1376 = vpop.f32.mrf.mxu0
        %v1377 = vadd.f32 %v1328, %v1376
        %1378 = vmatmul.bf16.gmra.mxu0 %v828
        %v1379 = vpop.f32.mrf.mxu0
        %v1380 = vadd.f32 %v1331, %v1379
        %v1381 = vpop.f32.mrf.mxu0
        %v1382 = vadd.f32 %v1333, %v1381
        %1383 = vmatmul.bf16.gmra.mxu0 %v836
        %v1384 = vpop.f32.mrf.mxu0
        %v1385 = vadd.f32 %v1336, %v1384
        %v1386 = vpop.f32.mrf.mxu0
        %v1387 = vadd.f32 %v1338, %v1386
        %1388 = vdwg.mxu0
        %1389 = vmatpush.bf16.msra.mxu0 %v1186
        %1390 = vmatpush.bf16.msra.mxu0 %v1185
        %1391 = vmatpush.bf16.msra.mxu0 %v1184
        %1392 = vmatpush.bf16.msra.mxu0 %v1183
        %1393 = vmatpush.bf16.msra.mxu0 %v1182
        %1394 = vmatpush.bf16.msra.mxu0 %v1181
        %1395 = vmatpush.bf16.msra.mxu0 %v1180
        %1396 = vmatpush.bf16.msra.mxu0 %v1179
        %1397 = vmatmul.bf16.gmra.mxu0 %v781
        %v1398 = vpop.f32.mrf.mxu0
        %v1399 = vadd.f32 %v1350, %v1398
        %v1400 = vpop.f32.mrf.mxu0
        %v1401 = vadd.f32 %v1352, %v1400
        %1402 = vmatmul.bf16.gmra.mxu0 %v789
        %v1403 = vpop.f32.mrf.mxu0
        %v1404 = vadd.f32 %v1355, %v1403
        %v1405 = vpop.f32.mrf.mxu0
        %v1406 = vadd.f32 %v1357, %v1405
        %1407 = vmatmul.bf16.gmra.mxu0 %v797
        %v1408 = vpop.f32.mrf.mxu0
        %v1409 = vadd.f32 %v1360, %v1408
        %v1410 = vpop.f32.mrf.mxu0
        %v1411 = vadd.f32 %v1362, %v1410
        %1412 = vmatmul.bf16.gmra.mxu0 %v805
        %v1413 = vpop.f32.mrf.mxu0
        %v1414 = vadd.f32 %v1365, %v1413
        %v1415 = vpop.f32.mrf.mxu0
        %v1416 = vadd.f32 %v1367, %v1415
        %1417 = vmatmul.bf16.gmra.mxu0 %v813
        %v1418 = vpop.f32.mrf.mxu0
        %v1419 = vadd.f32 %v1370, %v1418
        %v1420 = vpop.f32.mrf.mxu0
        %v1421 = vadd.f32 %v1372, %v1420
        %1422 = vmatmul.bf16.gmra.mxu0 %v821
        %v1423 = vpop.f32.mrf.mxu0
        %v1424 = vadd.f32 %v1375, %v1423
        %v1425 = vpop.f32.mrf.mxu0
        %v1426 = vadd.f32 %v1377, %v1425
        %1427 = vmatmul.bf16.gmra.mxu0 %v829
        %v1428 = vpop.f32.mrf.mxu0
        %v1429 = vadd.f32 %v1380, %v1428
        %v1430 = vpop.f32.mrf.mxu0
        %v1431 = vadd.f32 %v1382, %v1430
        %1432 = vmatmul.bf16.gmra.mxu0 %v837
        %v1433 = vpop.f32.mrf.mxu0
        %v1434 = vadd.f32 %v1385, %v1433
        %v1435 = vpop.f32.mrf.mxu0
        %v1436 = vadd.f32 %v1387, %v1435
        %1437 = vdwg.mxu0
        %1438 = vmatpush.bf16.msra.mxu0 %v1194
        %1439 = vmatpush.bf16.msra.mxu0 %v1193
        %1440 = vmatpush.bf16.msra.mxu0 %v1192
        %1441 = vmatpush.bf16.msra.mxu0 %v1191
        %1442 = vmatpush.bf16.msra.mxu0 %v1190
        %1443 = vmatpush.bf16.msra.mxu0 %v1189
        %1444 = vmatpush.bf16.msra.mxu0 %v1188
        %1445 = vmatpush.bf16.msra.mxu0 %v1187
        %1446 = vmatmul.bf16.gmra.mxu0 %v782
        %v1447 = vpop.f32.mrf.mxu0
        %v1448 = vadd.f32 %v1399, %v1447
        %v1449 = vpop.f32.mrf.mxu0
        %v1450 = vadd.f32 %v1401, %v1449
        %1451 = vmatmul.bf16.gmra.mxu0 %v790
        %v1452 = vpop.f32.mrf.mxu0
        %v1453 = vadd.f32 %v1404, %v1452
        %v1454 = vpop.f32.mrf.mxu0
        %v1455 = vadd.f32 %v1406, %v1454
        %1456 = vmatmul.bf16.gmra.mxu0 %v798
        %v1457 = vpop.f32.mrf.mxu0
        %v1458 = vadd.f32 %v1409, %v1457
        %v1459 = vpop.f32.mrf.mxu0
        %v1460 = vadd.f32 %v1411, %v1459
        %1461 = vmatmul.bf16.gmra.mxu0 %v806
        %v1462 = vpop.f32.mrf.mxu0
        %v1463 = vadd.f32 %v1414, %v1462
        %v1464 = vpop.f32.mrf.mxu0
        %v1465 = vadd.f32 %v1416, %v1464
        %1466 = vmatmul.bf16.gmra.mxu0 %v814
        %v1467 = vpop.f32.mrf.mxu0
        %v1468 = vadd.f32 %v1419, %v1467
        %v1469 = vpop.f32.mrf.mxu0
        %v1470 = vadd.f32 %v1421, %v1469
        %1471 = vmatmul.bf16.gmra.mxu0 %v822
        %v1472 = vpop.f32.mrf.mxu0
        %v1473 = vadd.f32 %v1424, %v1472
        %v1474 = vpop.f32.mrf.mxu0
        %v1475 = vadd.f32 %v1426, %v1474
        %1476 = vmatmul.bf16.gmra.mxu0 %v830
        %v1477 = vpop.f32.mrf.mxu0
        %v1478 = vadd.f32 %v1429, %v1477
        %v1479 = vpop.f32.mrf.mxu0
        %v1480 = vadd.f32 %v1431, %v1479
        %1481 = vmatmul.bf16.gmra.mxu0 %v838
        %v1482 = vpop.f32.mrf.mxu0
        %v1483 = vadd.f32 %v1434, %v1482
        %v1484 = vpop.f32.mrf.mxu0
        %v1485 = vadd.f32 %v1436, %v1484
        %1486 = vdwg.mxu0
        %1487 = vmatpush.bf16.msra.mxu0 %v1202
        %1488 = vmatpush.bf16.msra.mxu0 %v1201
        %1489 = vmatpush.bf16.msra.mxu0 %v1200
        %1490 = vmatpush.bf16.msra.mxu0 %v1199
        %1491 = vmatpush.bf16.msra.mxu0 %v1198
        %1492 = vmatpush.bf16.msra.mxu0 %v1197
        %1493 = vmatpush.bf16.msra.mxu0 %v1196
        %1494 = vmatpush.bf16.msra.mxu0 %v1195
        %1495 = vmatmul.bf16.gmra.mxu0 %v783
        %v1496 = vpop.f32.mrf.mxu0
        %v1497 = vadd.f32 %v1448, %v1496
        %v1498 = vpop.f32.mrf.mxu0
        %v1499 = vadd.f32 %v1450, %v1498
        %1500 = vmatmul.bf16.gmra.mxu0 %v791
        %v1501 = vpop.f32.mrf.mxu0
        %v1502 = vadd.f32 %v1453, %v1501
        %v1503 = vpop.f32.mrf.mxu0
        %v1504 = vadd.f32 %v1455, %v1503
        %1505 = vmatmul.bf16.gmra.mxu0 %v799
        %v1506 = vpop.f32.mrf.mxu0
        %v1507 = vadd.f32 %v1458, %v1506
        %v1508 = vpop.f32.mrf.mxu0
        %v1509 = vadd.f32 %v1460, %v1508
        %1510 = vmatmul.bf16.gmra.mxu0 %v807
        %v1511 = vpop.f32.mrf.mxu0
        %v1512 = vadd.f32 %v1463, %v1511
        %v1513 = vpop.f32.mrf.mxu0
        %v1514 = vadd.f32 %v1465, %v1513
        %1515 = vmatmul.bf16.gmra.mxu0 %v815
        %v1516 = vpop.f32.mrf.mxu0
        %v1517 = vadd.f32 %v1468, %v1516
        %v1518 = vpop.f32.mrf.mxu0
        %v1519 = vadd.f32 %v1470, %v1518
        %1520 = vmatmul.bf16.gmra.mxu0 %v823
        %v1521 = vpop.f32.mrf.mxu0
        %v1522 = vadd.f32 %v1473, %v1521
        %v1523 = vpop.f32.mrf.mxu0
        %v1524 = vadd.f32 %v1475, %v1523
        %1525 = vmatmul.bf16.gmra.mxu0 %v831
        %v1526 = vpop.f32.mrf.mxu0
        %v1527 = vadd.f32 %v1478, %v1526
        %v1528 = vpop.f32.mrf.mxu0
        %v1529 = vadd.f32 %v1480, %v1528
        %1530 = vmatmul.bf16.gmra.mxu0 %v839
        %v1531 = vpop.f32.mrf.mxu0
        %v1532 = vadd.f32 %v1483, %v1531
        %v1533 = vpop.f32.mrf.mxu0
        %v1534 = vadd.f32 %v1485, %v1533
        %1535 = vdwg.mxu0
        %1536 = vmatpush.bf16.msra.mxu0 %v1210
        %1537 = vmatpush.bf16.msra.mxu0 %v1209
        %1538 = vmatpush.bf16.msra.mxu0 %v1208
        %1539 = vmatpush.bf16.msra.mxu0 %v1207
        %1540 = vmatpush.bf16.msra.mxu0 %v1206
        %1541 = vmatpush.bf16.msra.mxu0 %v1205
        %1542 = vmatpush.bf16.msra.mxu0 %v1204
        %1543 = vmatpush.bf16.msra.mxu0 %v1203
        %1544 = vmatmul.bf16.gmra.mxu0 %v784
        %v1545 = vpop.f32.mrf.mxu0
        %v1546 = vadd.f32 %v1497, %v1545
        %v1547 = vpop.f32.mrf.mxu0
        %v1548 = vadd.f32 %v1499, %v1547
        %1549 = vmatmul.bf16.gmra.mxu0 %v792
        %v1550 = vpop.f32.mrf.mxu0
        %v1551 = vadd.f32 %v1502, %v1550
        %v1552 = vpop.f32.mrf.mxu0
        %v1553 = vadd.f32 %v1504, %v1552
        %1554 = vmatmul.bf16.gmra.mxu0 %v800
        %v1555 = vpop.f32.mrf.mxu0
        %v1556 = vadd.f32 %v1507, %v1555
        %v1557 = vpop.f32.mrf.mxu0
        %v1558 = vadd.f32 %v1509, %v1557
        %1559 = vmatmul.bf16.gmra.mxu0 %v808
        %v1560 = vpop.f32.mrf.mxu0
        %v1561 = vadd.f32 %v1512, %v1560
        %v1562 = vpop.f32.mrf.mxu0
        %v1563 = vadd.f32 %v1514, %v1562
        %1564 = vmatmul.bf16.gmra.mxu0 %v816
        %v1565 = vpop.f32.mrf.mxu0
        %v1566 = vadd.f32 %v1517, %v1565
        %v1567 = vpop.f32.mrf.mxu0
        %v1568 = vadd.f32 %v1519, %v1567
        %1569 = vmatmul.bf16.gmra.mxu0 %v824
        %v1570 = vpop.f32.mrf.mxu0
        %v1571 = vadd.f32 %v1522, %v1570
        %v1572 = vpop.f32.mrf.mxu0
        %v1573 = vadd.f32 %v1524, %v1572
        %1574 = vmatmul.bf16.gmra.mxu0 %v832
        %v1575 = vpop.f32.mrf.mxu0
        %v1576 = vadd.f32 %v1527, %v1575
        %v1577 = vpop.f32.mrf.mxu0
        %v1578 = vadd.f32 %v1529, %v1577
        %1579 = vmatmul.bf16.gmra.mxu0 %v840
        %v1580 = vpop.f32.mrf.mxu0
        %v1581 = vadd.f32 %v1532, %v1580
        %v1582 = vpop.f32.mrf.mxu0
        %v1583 = vadd.f32 %v1534, %v1582
        %1584 = vdwg.mxu0
        %1585 = vmatpush.bf16.msra.mxu0 %v1218
        %1586 = vmatpush.bf16.msra.mxu0 %v1217
        %1587 = vmatpush.bf16.msra.mxu0 %v1216
        %1588 = vmatpush.bf16.msra.mxu0 %v1215
        %1589 = vmatpush.bf16.msra.mxu0 %v1214
        %1590 = vmatpush.bf16.msra.mxu0 %v1213
        %1591 = vmatpush.bf16.msra.mxu0 %v1212
        %1592 = vmatpush.bf16.msra.mxu0 %v1211
        %1593 = vmatmul.bf16.gmra.mxu0 %v785
        %v1594 = vpop.f32.mrf.mxu0
        %v1595 = vadd.f32 %v1546, %v1594
        %v1596 = vpop.f32.mrf.mxu0
        %v1597 = vadd.f32 %v1548, %v1596
        %1598 = vmatmul.bf16.gmra.mxu0 %v793
        %v1599 = vpop.f32.mrf.mxu0
        %v1600 = vadd.f32 %v1551, %v1599
        %v1601 = vpop.f32.mrf.mxu0
        %v1602 = vadd.f32 %v1553, %v1601
        %1603 = vmatmul.bf16.gmra.mxu0 %v801
        %v1604 = vpop.f32.mrf.mxu0
        %v1605 = vadd.f32 %v1556, %v1604
        %v1606 = vpop.f32.mrf.mxu0
        %v1607 = vadd.f32 %v1558, %v1606
        %1608 = vmatmul.bf16.gmra.mxu0 %v809
        %v1609 = vpop.f32.mrf.mxu0
        %v1610 = vadd.f32 %v1561, %v1609
        %v1611 = vpop.f32.mrf.mxu0
        %v1612 = vadd.f32 %v1563, %v1611
        %1613 = vmatmul.bf16.gmra.mxu0 %v817
        %v1614 = vpop.f32.mrf.mxu0
        %v1615 = vadd.f32 %v1566, %v1614
        %v1616 = vpop.f32.mrf.mxu0
        %v1617 = vadd.f32 %v1568, %v1616
        %1618 = vmatmul.bf16.gmra.mxu0 %v825
        %v1619 = vpop.f32.mrf.mxu0
        %v1620 = vadd.f32 %v1571, %v1619
        %v1621 = vpop.f32.mrf.mxu0
        %v1622 = vadd.f32 %v1573, %v1621
        %1623 = vmatmul.bf16.gmra.mxu0 %v833
        %v1624 = vpop.f32.mrf.mxu0
        %v1625 = vadd.f32 %v1576, %v1624
        %v1626 = vpop.f32.mrf.mxu0
        %v1627 = vadd.f32 %v1578, %v1626
        %1628 = vmatmul.bf16.gmra.mxu0 %v841
        %v1629 = vpop.f32.mrf.mxu0
        %v1630 = vadd.f32 %v1581, %v1629
        %v1631 = vpop.f32.mrf.mxu0
        %v1632 = vadd.f32 %v1583, %v1631
        %1633 = vdwg.mxu0
        %1634 = vmatpush.bf16.msra.mxu0 %v1226
        %1635 = vmatpush.bf16.msra.mxu0 %v1225
        %1636 = vmatpush.bf16.msra.mxu0 %v1224
        %1637 = vmatpush.bf16.msra.mxu0 %v1223
        %1638 = vmatpush.bf16.msra.mxu0 %v1222
        %1639 = vmatpush.bf16.msra.mxu0 %v1221
        %1640 = vmatpush.bf16.msra.mxu0 %v1220
        %1641 = vmatpush.bf16.msra.mxu0 %v1219
        %1642 = vmatmul.bf16.gmra.mxu0 %v786
        %v1643 = vpop.f32.mrf.mxu0
        %v1644 = vadd.f32 %v1595, %v1643
        %v1645 = vpop.f32.mrf.mxu0
        %v1646 = vadd.f32 %v1597, %v1645
        %1647 = vmatmul.bf16.gmra.mxu0 %v794
        %v1648 = vpop.f32.mrf.mxu0
        %v1649 = vadd.f32 %v1600, %v1648
        %v1650 = vpop.f32.mrf.mxu0
        %v1651 = vadd.f32 %v1602, %v1650
        %1652 = vmatmul.bf16.gmra.mxu0 %v802
        %v1653 = vpop.f32.mrf.mxu0
        %v1654 = vadd.f32 %v1605, %v1653
        %v1655 = vpop.f32.mrf.mxu0
        %v1656 = vadd.f32 %v1607, %v1655
        %1657 = vmatmul.bf16.gmra.mxu0 %v810
        %v1658 = vpop.f32.mrf.mxu0
        %v1659 = vadd.f32 %v1610, %v1658
        %v1660 = vpop.f32.mrf.mxu0
        %v1661 = vadd.f32 %v1612, %v1660
        %1662 = vmatmul.bf16.gmra.mxu0 %v818
        %v1663 = vpop.f32.mrf.mxu0
        %v1664 = vadd.f32 %v1615, %v1663
        %v1665 = vpop.f32.mrf.mxu0
        %v1666 = vadd.f32 %v1617, %v1665
        %1667 = vmatmul.bf16.gmra.mxu0 %v826
        %v1668 = vpop.f32.mrf.mxu0
        %v1669 = vadd.f32 %v1620, %v1668
        %v1670 = vpop.f32.mrf.mxu0
        %v1671 = vadd.f32 %v1622, %v1670
        %1672 = vmatmul.bf16.gmra.mxu0 %v834
        %v1673 = vpop.f32.mrf.mxu0
        %v1674 = vadd.f32 %v1625, %v1673
        %v1675 = vpop.f32.mrf.mxu0
        %v1676 = vadd.f32 %v1627, %v1675
        %1677 = vmatmul.bf16.gmra.mxu0 %v842
        %v1678 = vpop.f32.mrf.mxu0
        %v1679 = vadd.f32 %v1630, %v1678
        %v1680 = vpop.f32.mrf.mxu0
        %v1681 = vadd.f32 %v1632, %v1680
        %1682 = vdwg.mxu0
        %v1683 = vmax.f32 %v1644, 0.0
        %v1684 = vmax.f32 %v1646, 0.0
        %v1685 = vmax.f32 %v1649, 0.0
        %v1686 = vmax.f32 %v1651, 0.0
        %v1687 = vmax.f32 %v1654, 0.0
        %v1688 = vmax.f32 %v1656, 0.0
        %v1689 = vmax.f32 %v1659, 0.0
        %v1690 = vmax.f32 %v1661, 0.0
        %v1691 = vmax.f32 %v1664, 0.0
        %v1692 = vmax.f32 %v1666, 0.0
        %v1693 = vmax.f32 %v1669, 0.0
        %v1694 = vmax.f32 %v1671, 0.0
        %v1695 = vmax.f32 %v1674, 0.0
        %v1696 = vmax.f32 %v1676, 0.0
        %v1697 = vmax.f32 %v1679, 0.0
        %v1698 = vmax.f32 %v1681, 0.0
        %v1715 = vrot.slane %v1683, 4
        %v1716 = vrot.slane %v1684, 4
        %v1717 = vrot.slane %v1685, 4
        %v1718 = vrot.slane %v1686, 4
        %v1719 = vrot.slane %v1687, 4
        %v1720 = vrot.slane %v1688, 4
        %v1721 = vrot.slane %v1689, 4
        %v1722 = vrot.slane %v1690, 4
        %v1723 = vrot.slane %v1691, 4
        %v1724 = vrot.slane %v1692, 4
        %v1725 = vrot.slane %v1693, 4
        %v1726 = vrot.slane %v1694, 4
        %v1727 = vrot.slane %v1695, 4
        %v1728 = vrot.slane %v1696, 4
        %v1729 = vrot.slane %v1697, 4
        %v1730 = vrot.slane %v1698, 4
        %1731 = vst [vmem:[#allocation1] ss:$2 sm:$0xff] %v1683
        %v1732 = vld.sshfl [vmem:[#allocation1] sm:$0xff pattern:$0x75316420]
        %s1733 = scalar_lea.vmem [#allocation1], 16
        %1734 = vst [vmem:[%s1733] ss:$2 sm:$0xff] %v1715
        %v1735 = vld.sshfl [vmem:[#allocation1 + $0x10] sm:$0xff pattern:$0x75316420]
        %s1736 = scalar_lea.vmem [#allocation1], 32
        %1737 = vst [vmem:[%s1736] ss:$2 sm:$0xff] %v1684
        %v1738 = vld.sshfl [vmem:[#allocation1 + $0x20] sm:$0xff pattern:$0x75316420]
        %s1739 = scalar_lea.vmem [#allocation1], 48
        %1740 = vst [vmem:[%s1739] ss:$2 sm:$0xff] %v1685
        %v1741 = vld.sshfl [vmem:[#allocation1 + $0x30] sm:$0xff pattern:$0x75316420]
        %1742 = vst [vmem:[#allocation1] ss:$2 sm:$0xff] %v1717
        %v1743 = vld.sshfl [vmem:[#allocation1] sm:$0xff pattern:$0x75316420]
        %1744 = vst [vmem:[%s1733] ss:$2 sm:$0xff] %v1686
        %v1745 = vld.sshfl [vmem:[#allocation1 + $0x10] sm:$0xff pattern:$0x75316420]
        %1746 = vst [vmem:[%s1736] ss:$2 sm:$0xff] %v1687
        %v1747 = vld.sshfl [vmem:[#allocation1 + $0x20] sm:$0xff pattern:$0x75316420]
        %1748 = vst [vmem:[%s1739] ss:$2 sm:$0xff] %v1719
        %v1749 = vld.sshfl [vmem:[#allocation1 + $0x30] sm:$0xff pattern:$0x75316420]
        %1750 = vst [vmem:[#allocation1] ss:$2 sm:$0xff] %v1688
        %v1751 = vld.sshfl [vmem:[#allocation1] sm:$0xff pattern:$0x75316420]
        %1752 = vst [vmem:[%s1733] ss:$2 sm:$0xff] %v1689
        %v1753 = vld.sshfl [vmem:[#allocation1 + $0x10] sm:$0xff pattern:$0x75316420]
        %1754 = vst [vmem:[%s1736] ss:$2 sm:$0xff] %v1721
        %v1755 = vld.sshfl [vmem:[#allocation1 + $0x20] sm:$0xff pattern:$0x75316420]
        %1756 = vst [vmem:[%s1739] ss:$2 sm:$0xff] %v1690
        %v1757 = vld.sshfl [vmem:[#allocation1 + $0x30] sm:$0xff pattern:$0x75316420]
        %1758 = vst [vmem:[#allocation1] ss:$2 sm:$0xff] %v1691
        %v1759 = vld.sshfl [vmem:[#allocation1] sm:$0xff pattern:$0x75316420]
        %1760 = vst [vmem:[%s1733] ss:$2 sm:$0xff] %v1723
        %v1761 = vld.sshfl [vmem:[#allocation1 + $0x10] sm:$0xff pattern:$0x75316420]
        %1762 = vst [vmem:[%s1736] ss:$2 sm:$0xff] %v1692
        %v1763 = vld.sshfl [vmem:[#allocation1 + $0x20] sm:$0xff pattern:$0x75316420]
        %1764 = vst [vmem:[%s1739] ss:$2 sm:$0xff] %v1693
        %v1765 = vld.sshfl [vmem:[#allocation1 + $0x30] sm:$0xff pattern:$0x75316420]
        %1766 = vst [vmem:[#allocation1] ss:$2 sm:$0xff] %v1725
        %v1767 = vld.sshfl [vmem:[#allocation1] sm:$0xff pattern:$0x75316420]
        %1768 = vst [vmem:[%s1733] ss:$2 sm:$0xff] %v1694
        %v1769 = vld.sshfl [vmem:[#allocation1 + $0x10] sm:$0xff pattern:$0x75316420]
        %1770 = vst [vmem:[%s1736] ss:$2 sm:$0xff] %v1695
        %v1771 = vld.sshfl [vmem:[#allocation1 + $0x20] sm:$0xff pattern:$0x75316420]
        %1772 = vst [vmem:[%s1739] ss:$2 sm:$0xff] %v1727
        %v1773 = vld.sshfl [vmem:[#allocation1 + $0x30] sm:$0xff pattern:$0x75316420]
        %1774 = vst [vmem:[#allocation1] ss:$2 sm:$0xff] %v1696
        %v1775 = vld.sshfl [vmem:[#allocation1] sm:$0xff pattern:$0x75316420]
        %1776 = vst [vmem:[%s1733] ss:$2 sm:$0xff] %v1697
        %v1777 = vld.sshfl [vmem:[#allocation1 + $0x10] sm:$0xff pattern:$0x75316420]
        %1778 = vst [vmem:[%s1736] ss:$2 sm:$0xff] %v1729
        %v1779 = vld.sshfl [vmem:[#allocation1 + $0x20] sm:$0xff pattern:$0x75316420]
        %1780 = vst [vmem:[%s1739] ss:$2 sm:$0xff] %v1698
        %v1781 = vld.sshfl [vmem:[#allocation1 + $0x30] sm:$0xff pattern:$0x75316420]
        %v1782 = vrot.slane %v1732, 1
        %v1783 = vrot.slane %v1735, 1
        %v1784 = vrot.slane %v1738, 1
        %v1785 = vrot.slane %v1741, 1
        %v1786 = vrot.slane %v1743, 1
        %v1787 = vrot.slane %v1745, 1
        %v1788 = vrot.slane %v1747, 1
        %v1789 = vrot.slane %v1749, 1
        %v1790 = vrot.slane %v1751, 1
        %v1791 = vrot.slane %v1753, 1
        %v1792 = vrot.slane %v1755, 1
        %v1793 = vrot.slane %v1757, 1
        %v1794 = vrot.slane %v1759, 1
        %v1795 = vrot.slane %v1761, 1
        %v1796 = vrot.slane %v1763, 1
        %v1797 = vrot.slane %v1765, 1
        %v1798 = vrot.slane %v1767, 1
        %v1799 = vrot.slane %v1769, 1
        %v1800 = vrot.slane %v1771, 1
        %v1801 = vrot.slane %v1773, 1
        %v1802 = vrot.slane %v1775, 1
        %v1803 = vrot.slane %v1777, 1
        %v1804 = vrot.slane %v1779, 1
        %v1805 = vrot.slane %v1781, 1
        %1806 = vst [vmem:[#allocation1] ss:$2 sm:$0xff] %v1715
        %v1807 = vld.sshfl [vmem:[#allocation1] sm:$0xff pattern:$0x75316420]
        %s1808 = scalar_lea.vmem [#allocation1], 16
        %1809 = vst [vmem:[%s1808] ss:$2 sm:$0xff] %v1684
        %v1810 = vld.sshfl [vmem:[#allocation1 + $0x10] sm:$0xff pattern:$0x75316420]
        %s1811 = scalar_lea.vmem [#allocation1], 32
        %1812 = vst [vmem:[%s1811] ss:$2 sm:$0xff] %v1716
        %v1813 = vld.sshfl [vmem:[#allocation1 + $0x20] sm:$0xff pattern:$0x75316420]
        %s1814 = scalar_lea.vmem [#allocation1], 48
        %1815 = vst [vmem:[%s1814] ss:$2 sm:$0xff] %v1717
        %v1816 = vld.sshfl [vmem:[#allocation1 + $0x30] sm:$0xff pattern:$0x75316420]
        %1817 = vst [vmem:[#allocation1] ss:$2 sm:$0xff] %v1686
        %v1818 = vld.sshfl [vmem:[#allocation1] sm:$0xff pattern:$0x75316420]
        %1819 = vst [vmem:[%s1808] ss:$2 sm:$0xff] %v1718
        %v1820 = vld.sshfl [vmem:[#allocation1 + $0x10] sm:$0xff pattern:$0x75316420]
        %1821 = vst [vmem:[%s1811] ss:$2 sm:$0xff] %v1719
        %v1822 = vld.sshfl [vmem:[#allocation1 + $0x20] sm:$0xff pattern:$0x75316420]
        %1823 = vst [vmem:[%s1814] ss:$2 sm:$0xff] %v1688
        %v1824 = vld.sshfl [vmem:[#allocation1 + $0x30] sm:$0xff pattern:$0x75316420]
        %1825 = vst [vmem:[#allocation1] ss:$2 sm:$0xff] %v1720
        %v1826 = vld.sshfl [vmem:[#allocation1] sm:$0xff pattern:$0x75316420]
        %1827 = vst [vmem:[%s1808] ss:$2 sm:$0xff] %v1721
        %v1828 = vld.sshfl [vmem:[#allocation1 + $0x10] sm:$0xff pattern:$0x75316420]
        %1829 = vst [vmem:[%s1811] ss:$2 sm:$0xff] %v1690
        %v1830 = vld.sshfl [vmem:[#allocation1 + $0x20] sm:$0xff pattern:$0x75316420]
        %1831 = vst [vmem:[%s1814] ss:$2 sm:$0xff] %v1722
        %v1832 = vld.sshfl [vmem:[#allocation1 + $0x30] sm:$0xff pattern:$0x75316420]
        %1833 = vst [vmem:[#allocation1] ss:$2 sm:$0xff] %v1723
        %v1834 = vld.sshfl [vmem:[#allocation1] sm:$0xff pattern:$0x75316420]
        %1835 = vst [vmem:[%s1808] ss:$2 sm:$0xff] %v1692
        %v1836 = vld.sshfl [vmem:[#allocation1 + $0x10] sm:$0xff pattern:$0x75316420]
        %1837 = vst [vmem:[%s1811] ss:$2 sm:$0xff] %v1724
        %v1838 = vld.sshfl [vmem:[#allocation1 + $0x20] sm:$0xff pattern:$0x75316420]
        %1839 = vst [vmem:[%s1814] ss:$2 sm:$0xff] %v1725
        %v1840 = vld.sshfl [vmem:[#allocation1 + $0x30] sm:$0xff pattern:$0x75316420]
        %1841 = vst [vmem:[#allocation1] ss:$2 sm:$0xff] %v1694
        %v1842 = vld.sshfl [vmem:[#allocation1] sm:$0xff pattern:$0x75316420]
        %1843 = vst [vmem:[%s1808] ss:$2 sm:$0xff] %v1726
        %v1844 = vld.sshfl [vmem:[#allocation1 + $0x10] sm:$0xff pattern:$0x75316420]
        %1845 = vst [vmem:[%s1811] ss:$2 sm:$0xff] %v1727
        %v1846 = vld.sshfl [vmem:[#allocation1 + $0x20] sm:$0xff pattern:$0x75316420]
        %1847 = vst [vmem:[%s1814] ss:$2 sm:$0xff] %v1696
        %v1848 = vld.sshfl [vmem:[#allocation1 + $0x30] sm:$0xff pattern:$0x75316420]
        %1849 = vst [vmem:[#allocation1] ss:$2 sm:$0xff] %v1728
        %v1850 = vld.sshfl [vmem:[#allocation1] sm:$0xff pattern:$0x75316420]
        %1851 = vst [vmem:[%s1808] ss:$2 sm:$0xff] %v1729
        %v1852 = vld.sshfl [vmem:[#allocation1 + $0x10] sm:$0xff pattern:$0x75316420]
        %1853 = vst [vmem:[%s1811] ss:$2 sm:$0xff] %v1698
        %v1854 = vld.sshfl [vmem:[#allocation1 + $0x20] sm:$0xff pattern:$0x75316420]
        %1855 = vst [vmem:[%s1814] ss:$2 sm:$0xff] %v1730
        %v1856 = vld.sshfl [vmem:[#allocation1 + $0x30] sm:$0xff pattern:$0x75316420]
        %v1857 = vrot.slane %v1807, 1
        %v1858 = vrot.slane %v1810, 1
        %v1859 = vrot.slane %v1813, 1
        %v1860 = vrot.slane %v1816, 1
        %v1861 = vrot.slane %v1818, 1
        %v1862 = vrot.slane %v1820, 1
        %v1863 = vrot.slane %v1822, 1
        %v1864 = vrot.slane %v1824, 1
        %v1865 = vrot.slane %v1826, 1
        %v1866 = vrot.slane %v1828, 1
        %v1867 = vrot.slane %v1830, 1
        %v1868 = vrot.slane %v1832, 1
        %v1869 = vrot.slane %v1834, 1
        %v1870 = vrot.slane %v1836, 1
        %v1871 = vrot.slane %v1838, 1
        %v1872 = vrot.slane %v1840, 1
        %v1873 = vrot.slane %v1842, 1
        %v1874 = vrot.slane %v1844, 1
        %v1875 = vrot.slane %v1846, 1
        %v1876 = vrot.slane %v1848, 1
        %v1877 = vrot.slane %v1850, 1
        %v1878 = vrot.slane %v1852, 1
        %v1879 = vrot.slane %v1854, 1
        %v1880 = vrot.slane %v1856, 1
        %v1881 = vrot.slane %v1782, 7
        %v1882 = vrot.slane %v1715, 6
        %v1883 = vrot.slane %v1857, 5
        %v1884 = vrot.slane %v1783, 7
        %v1885 = vrot.slane %v1684, 6
        %v1886 = vrot.slane %v1858, 5
        %v1887 = vrot.slane %v1784, 7
        %v1888 = vrot.slane %v1716, 6
        %v1889 = vrot.slane %v1859, 5
        %v1890 = vrot.slane %v1785, 7
        %v1891 = vrot.slane %v1717, 6
        %v1892 = vrot.slane %v1860, 5
        %v1893 = vrot.slane %v1786, 7
        %v1894 = vrot.slane %v1686, 6
        %v1895 = vrot.slane %v1861, 5
        %v1896 = vrot.slane %v1787, 7
        %v1897 = vrot.slane %v1718, 6
        %v1898 = vrot.slane %v1862, 5
        %v1899 = vrot.slane %v1788, 7
        %v1900 = vrot.slane %v1719, 6
        %v1901 = vrot.slane %v1863, 5
        %v1902 = vrot.slane %v1789, 7
        %v1903 = vrot.slane %v1688, 6
        %v1904 = vrot.slane %v1864, 5
        %v1905 = vrot.slane %v1790, 7
        %v1906 = vrot.slane %v1720, 6
        %v1907 = vrot.slane %v1865, 5
        %v1908 = vrot.slane %v1791, 7
        %v1909 = vrot.slane %v1721, 6
        %v1910 = vrot.slane %v1866, 5
        %v1911 = vrot.slane %v1792, 7
        %v1912 = vrot.slane %v1690, 6
        %v1913 = vrot.slane %v1867, 5
        %v1914 = vrot.slane %v1793, 7
        %v1915 = vrot.slane %v1722, 6
        %v1916 = vrot.slane %v1868, 5
        %v1917 = vrot.slane %v1794, 7
        %v1918 = vrot.slane %v1723, 6
        %v1919 = vrot.slane %v1869, 5
        %v1920 = vrot.slane %v1795, 7
        %v1921 = vrot.slane %v1692, 6
        %v1922 = vrot.slane %v1870, 5
        %v1923 = vrot.slane %v1796, 7
        %v1924 = vrot.slane %v1724, 6
        %v1925 = vrot.slane %v1871, 5
        %v1926 = vrot.slane %v1797, 7
        %v1927 = vrot.slane %v1725, 6
        %v1928 = vrot.slane %v1872, 5
        %v1929 = vrot.slane %v1798, 7
        %v1930 = vrot.slane %v1694, 6
        %v1931 = vrot.slane %v1873, 5
        %v1932 = vrot.slane %v1799, 7
        %v1933 = vrot.slane %v1726, 6
        %v1934 = vrot.slane %v1874, 5
        %v1935 = vrot.slane %v1800, 7
        %v1936 = vrot.slane %v1727, 6
        %v1937 = vrot.slane %v1875, 5
        %v1938 = vrot.slane %v1801, 7
        %v1939 = vrot.slane %v1696, 6
        %v1940 = vrot.slane %v1876, 5
        %v1941 = vrot.slane %v1802, 7
        %v1942 = vrot.slane %v1728, 6
        %v1943 = vrot.slane %v1877, 5
        %v1944 = vrot.slane %v1803, 7
        %v1945 = vrot.slane %v1729, 6
        %v1946 = vrot.slane %v1878, 5
        %v1947 = vrot.slane %v1804, 7
        %v1948 = vrot.slane %v1698, 6
        %v1949 = vrot.slane %v1879, 5
        %v1950 = vrot.slane %v1805, 7
        %v1951 = vrot.slane %v1730, 6
        %v1952 = vrot.slane %v1880, 5
        %vm1953 = vcmask 1040384
        %v1954 = vsel %vm1953, %v1683, %v1881
        %vm1955 = vcmask 1042434
        %v1956 = vsel %vm1955, %v1882, %v1883
        %vm1957 = vcmask 1041408
        %v1958 = vsel %vm1957, %v1954, %v1956
        %vm1959 = vcmask 1041409
        %v1960 = vsel %vm1959, %v1683, %v1881
        %vm1961 = vcmask 1043459
        %v1962 = vsel %vm1961, %v1882, %v1883
        %vm1963 = vcmask 1042433
        %v1964 = vsel %vm1963, %v1960, %v1962
        %v1965 = vrot.slane %v1964, 1
        %v1966 = vsel %vm1955, %v1683, %v1881
        %vm1967 = vcmask 1044484
        %v1968 = vsel %vm1967, %v1882, %v1883
        %vm1969 = vcmask 1043458
        %v1970 = vsel %vm1969, %v1966, %v1968
        %v1971 = vrot.slane %v1970, 2
        %v1972 = vsel %vm1953, %v1715, %v1884
        %v1973 = vsel %vm1955, %v1885, %v1886
        %v1974 = vsel %vm1957, %v1972, %v1973
        %v1975 = vsel %vm1959, %v1715, %v1884
        %v1976 = vsel %vm1961, %v1885, %v1886
        %v1977 = vsel %vm1963, %v1975, %v1976
        %v1978 = vrot.slane %v1977, 1
        %v1979 = vsel %vm1955, %v1715, %v1884
        %v1980 = vsel %vm1967, %v1885, %v1886
        %v1981 = vsel %vm1969, %v1979, %v1980
        %v1982 = vrot.slane %v1981, 2
        %v1983 = vsel %vm1953, %v1684, %v1887
        %v1984 = vsel %vm1955, %v1888, %v1889
        %v1985 = vsel %vm1957, %v1983, %v1984
        %v1986 = vsel %vm1959, %v1684, %v1887
        %v1987 = vsel %vm1961, %v1888, %v1889
        %v1988 = vsel %vm1963, %v1986, %v1987
        %v1989 = vrot.slane %v1988, 1
        %v1990 = vsel %vm1955, %v1684, %v1887
        %v1991 = vsel %vm1967, %v1888, %v1889
        %v1992 = vsel %vm1969, %v1990, %v1991
        %v1993 = vrot.slane %v1992, 2
        %v1994 = vsel %vm1953, %v1685, %v1890
        %v1995 = vsel %vm1955, %v1891, %v1892
        %v1996 = vsel %vm1957, %v1994, %v1995
        %v1997 = vsel %vm1959, %v1685, %v1890
        %v1998 = vsel %vm1961, %v1891, %v1892
        %v1999 = vsel %vm1963, %v1997, %v1998
        %v2000 = vrot.slane %v1999, 1
        %v2001 = vsel %vm1955, %v1685, %v1890
        %v2002 = vsel %vm1967, %v1891, %v1892
        %v2003 = vsel %vm1969, %v2001, %v2002
        %v2004 = vrot.slane %v2003, 2
        %v2005 = vsel %vm1953, %v1717, %v1893
        %v2006 = vsel %vm1955, %v1894, %v1895
        %v2007 = vsel %vm1957, %v2005, %v2006
        %v2008 = vsel %vm1959, %v1717, %v1893
        %v2009 = vsel %vm1961, %v1894, %v1895
        %v2010 = vsel %vm1963, %v2008, %v2009
        %v2011 = vrot.slane %v2010, 1
        %v2012 = vsel %vm1955, %v1717, %v1893
        %v2013 = vsel %vm1967, %v1894, %v1895
        %v2014 = vsel %vm1969, %v2012, %v2013
        %v2015 = vrot.slane %v2014, 2
        %v2016 = vsel %vm1953, %v1686, %v1896
        %v2017 = vsel %vm1955, %v1897, %v1898
        %v2018 = vsel %vm1957, %v2016, %v2017
        %v2019 = vsel %vm1959, %v1686, %v1896
        %v2020 = vsel %vm1961, %v1897, %v1898
        %v2021 = vsel %vm1963, %v2019, %v2020
        %v2022 = vrot.slane %v2021, 1
        %v2023 = vsel %vm1955, %v1686, %v1896
        %v2024 = vsel %vm1967, %v1897, %v1898
        %v2025 = vsel %vm1969, %v2023, %v2024
        %v2026 = vrot.slane %v2025, 2
        %v2027 = vsel %vm1953, %v1687, %v1899
        %v2028 = vsel %vm1955, %v1900, %v1901
        %v2029 = vsel %vm1957, %v2027, %v2028
        %v2030 = vsel %vm1959, %v1687, %v1899
        %v2031 = vsel %vm1961, %v1900, %v1901
        %v2032 = vsel %vm1963, %v2030, %v2031
        %v2033 = vrot.slane %v2032, 1
        %v2034 = vsel %vm1955, %v1687, %v1899
        %v2035 = vsel %vm1967, %v1900, %v1901
        %v2036 = vsel %vm1969, %v2034, %v2035
        %v2037 = vrot.slane %v2036, 2
        %v2038 = vsel %vm1953, %v1719, %v1902
        %v2039 = vsel %vm1955, %v1903, %v1904
        %v2040 = vsel %vm1957, %v2038, %v2039
        %v2041 = vsel %vm1959, %v1719, %v1902
        %v2042 = vsel %vm1961, %v1903, %v1904
        %v2043 = vsel %vm1963, %v2041, %v2042
        %v2044 = vrot.slane %v2043, 1
        %v2045 = vsel %vm1955, %v1719, %v1902
        %v2046 = vsel %vm1967, %v1903, %v1904
        %v2047 = vsel %vm1969, %v2045, %v2046
        %v2048 = vrot.slane %v2047, 2
        %v2049 = vsel %vm1953, %v1688, %v1905
        %v2050 = vsel %vm1955, %v1906, %v1907
        %v2051 = vsel %vm1957, %v2049, %v2050
        %v2052 = vsel %vm1959, %v1688, %v1905
        %v2053 = vsel %vm1961, %v1906, %v1907
        %v2054 = vsel %vm1963, %v2052, %v2053
        %v2055 = vrot.slane %v2054, 1
        %v2056 = vsel %vm1955, %v1688, %v1905
        %v2057 = vsel %vm1967, %v1906, %v1907
        %v2058 = vsel %vm1969, %v2056, %v2057
        %v2059 = vrot.slane %v2058, 2
        %v2060 = vsel %vm1953, %v1689, %v1908
        %v2061 = vsel %vm1955, %v1909, %v1910
        %v2062 = vsel %vm1957, %v2060, %v2061
        %v2063 = vsel %vm1959, %v1689, %v1908
        %v2064 = vsel %vm1961, %v1909, %v1910
        %v2065 = vsel %vm1963, %v2063, %v2064
        %v2066 = vrot.slane %v2065, 1
        %v2067 = vsel %vm1955, %v1689, %v1908
        %v2068 = vsel %vm1967, %v1909, %v1910
        %v2069 = vsel %vm1969, %v2067, %v2068
        %v2070 = vrot.slane %v2069, 2
        %v2071 = vsel %vm1953, %v1721, %v1911
        %v2072 = vsel %vm1955, %v1912, %v1913
        %v2073 = vsel %vm1957, %v2071, %v2072
        %v2074 = vsel %vm1959, %v1721, %v1911
        %v2075 = vsel %vm1961, %v1912, %v1913
        %v2076 = vsel %vm1963, %v2074, %v2075
        %v2077 = vrot.slane %v2076, 1
        %v2078 = vsel %vm1955, %v1721, %v1911
        %v2079 = vsel %vm1967, %v1912, %v1913
        %v2080 = vsel %vm1969, %v2078, %v2079
        %v2081 = vrot.slane %v2080, 2
        %v2082 = vsel %vm1953, %v1690, %v1914
        %v2083 = vsel %vm1955, %v1915, %v1916
        %v2084 = vsel %vm1957, %v2082, %v2083
        %v2085 = vsel %vm1959, %v1690, %v1914
        %v2086 = vsel %vm1961, %v1915, %v1916
        %v2087 = vsel %vm1963, %v2085, %v2086
        %v2088 = vrot.slane %v2087, 1
        %v2089 = vsel %vm1955, %v1690, %v1914
        %v2090 = vsel %vm1967, %v1915, %v1916
        %v2091 = vsel %vm1969, %v2089, %v2090
        %v2092 = vrot.slane %v2091, 2
        %v2093 = vsel %vm1953, %v1691, %v1917
        %v2094 = vsel %vm1955, %v1918, %v1919
        %v2095 = vsel %vm1957, %v2093, %v2094
        %v2096 = vsel %vm1959, %v1691, %v1917
        %v2097 = vsel %vm1961, %v1918, %v1919
        %v2098 = vsel %vm1963, %v2096, %v2097
        %v2099 = vrot.slane %v2098, 1
        %v2100 = vsel %vm1955, %v1691, %v1917
        %v2101 = vsel %vm1967, %v1918, %v1919
        %v2102 = vsel %vm1969, %v2100, %v2101
        %v2103 = vrot.slane %v2102, 2
        %v2104 = vsel %vm1953, %v1723, %v1920
        %v2105 = vsel %vm1955, %v1921, %v1922
        %v2106 = vsel %vm1957, %v2104, %v2105
        %v2107 = vsel %vm1959, %v1723, %v1920
        %v2108 = vsel %vm1961, %v1921, %v1922
        %v2109 = vsel %vm1963, %v2107, %v2108
        %v2110 = vrot.slane %v2109, 1
        %v2111 = vsel %vm1955, %v1723, %v1920
        %v2112 = vsel %vm1967, %v1921, %v1922
        %v2113 = vsel %vm1969, %v2111, %v2112
        %v2114 = vrot.slane %v2113, 2
        %v2115 = vsel %vm1953, %v1692, %v1923
        %v2116 = vsel %vm1955, %v1924, %v1925
        %v2117 = vsel %vm1957, %v2115, %v2116
        %v2118 = vsel %vm1959, %v1692, %v1923
        %v2119 = vsel %vm1961, %v1924, %v1925
        %v2120 = vsel %vm1963, %v2118, %v2119
        %v2121 = vrot.slane %v2120, 1
        %v2122 = vsel %vm1955, %v1692, %v1923
        %v2123 = vsel %vm1967, %v1924, %v1925
        %v2124 = vsel %vm1969, %v2122, %v2123
        %v2125 = vrot.slane %v2124, 2
        %v2126 = vsel %vm1953, %v1693, %v1926
        %v2127 = vsel %vm1955, %v1927, %v1928
        %v2128 = vsel %vm1957, %v2126, %v2127
        %v2129 = vsel %vm1959, %v1693, %v1926
        %v2130 = vsel %vm1961, %v1927, %v1928
        %v2131 = vsel %vm1963, %v2129, %v2130
        %v2132 = vrot.slane %v2131, 1
        %v2133 = vsel %vm1955, %v1693, %v1926
        %v2134 = vsel %vm1967, %v1927, %v1928
        %v2135 = vsel %vm1969, %v2133, %v2134
        %v2136 = vrot.slane %v2135, 2
        %v2137 = vsel %vm1953, %v1725, %v1929
        %v2138 = vsel %vm1955, %v1930, %v1931
        %v2139 = vsel %vm1957, %v2137, %v2138
        %v2140 = vsel %vm1959, %v1725, %v1929
        %v2141 = vsel %vm1961, %v1930, %v1931
        %v2142 = vsel %vm1963, %v2140, %v2141
        %v2143 = vrot.slane %v2142, 1
        %v2144 = vsel %vm1955, %v1725, %v1929
        %v2145 = vsel %vm1967, %v1930, %v1931
        %v2146 = vsel %vm1969, %v2144, %v2145
        %v2147 = vrot.slane %v2146, 2
        %v2148 = vsel %vm1953, %v1694, %v1932
        %v2149 = vsel %vm1955, %v1933, %v1934
        %v2150 = vsel %vm1957, %v2148, %v2149
        %v2151 = vsel %vm1959, %v1694, %v1932
        %v2152 = vsel %vm1961, %v1933, %v1934
        %v2153 = vsel %vm1963, %v2151, %v2152
        %v2154 = vrot.slane %v2153, 1
        %v2155 = vsel %vm1955, %v1694, %v1932
        %v2156 = vsel %vm1967, %v1933, %v1934
        %v2157 = vsel %vm1969, %v2155, %v2156
        %v2158 = vrot.slane %v2157, 2
        %v2159 = vsel %vm1953, %v1695, %v1935
        %v2160 = vsel %vm1955, %v1936, %v1937
        %v2161 = vsel %vm1957, %v2159, %v2160
        %v2162 = vsel %vm1959, %v1695, %v1935
        %v2163 = vsel %vm1961, %v1936, %v1937
        %v2164 = vsel %vm1963, %v2162, %v2163
        %v2165 = vrot.slane %v2164, 1
        %v2166 = vsel %vm1955, %v1695, %v1935
        %v2167 = vsel %vm1967, %v1936, %v1937
        %v2168 = vsel %vm1969, %v2166, %v2167
        %v2169 = vrot.slane %v2168, 2
        %v2170 = vsel %vm1953, %v1727, %v1938
        %v2171 = vsel %vm1955, %v1939, %v1940
        %v2172 = vsel %vm1957, %v2170, %v2171
        %v2173 = vsel %vm1959, %v1727, %v1938
        %v2174 = vsel %vm1961, %v1939, %v1940
        %v2175 = vsel %vm1963, %v2173, %v2174
        %v2176 = vrot.slane %v2175, 1
        %v2177 = vsel %vm1955, %v1727, %v1938
        %v2178 = vsel %vm1967, %v1939, %v1940
        %v2179 = vsel %vm1969, %v2177, %v2178
        %v2180 = vrot.slane %v2179, 2
        %v2181 = vsel %vm1953, %v1696, %v1941
        %v2182 = vsel %vm1955, %v1942, %v1943
        %v2183 = vsel %vm1957, %v2181, %v2182
        %v2184 = vsel %vm1959, %v1696, %v1941
        %v2185 = vsel %vm1961, %v1942, %v1943
        %v2186 = vsel %vm1963, %v2184, %v2185
        %v2187 = vrot.slane %v2186, 1
        %v2188 = vsel %vm1955, %v1696, %v1941
        %v2189 = vsel %vm1967, %v1942, %v1943
        %v2190 = vsel %vm1969, %v2188, %v2189
        %v2191 = vrot.slane %v2190, 2
        %v2192 = vsel %vm1953, %v1697, %v1944
        %v2193 = vsel %vm1955, %v1945, %v1946
        %v2194 = vsel %vm1957, %v2192, %v2193
        %v2195 = vsel %vm1959, %v1697, %v1944
        %v2196 = vsel %vm1961, %v1945, %v1946
        %v2197 = vsel %vm1963, %v2195, %v2196
        %v2198 = vrot.slane %v2197, 1
        %v2199 = vsel %vm1955, %v1697, %v1944
        %v2200 = vsel %vm1967, %v1945, %v1946
        %v2201 = vsel %vm1969, %v2199, %v2200
        %v2202 = vrot.slane %v2201, 2
        %v2203 = vsel %vm1953, %v1729, %v1947
        %v2204 = vsel %vm1955, %v1948, %v1949
        %v2205 = vsel %vm1957, %v2203, %v2204
        %v2206 = vsel %vm1959, %v1729, %v1947
        %v2207 = vsel %vm1961, %v1948, %v1949
        %v2208 = vsel %vm1963, %v2206, %v2207
        %v2209 = vrot.slane %v2208, 1
        %v2210 = vsel %vm1955, %v1729, %v1947
        %v2211 = vsel %vm1967, %v1948, %v1949
        %v2212 = vsel %vm1969, %v2210, %v2211
        %v2213 = vrot.slane %v2212, 2
        %v2214 = vsel %vm1953, %v1698, %v1950
        %v2215 = vsel %vm1955, %v1951, %v1952
        %v2216 = vsel %vm1957, %v2214, %v2215
        %v2217 = vsel %vm1959, %v1698, %v1950
        %v2218 = vsel %vm1961, %v1951, %v1952
        %v2219 = vsel %vm1963, %v2217, %v2218
        %v2220 = vrot.slane %v2219, 1
        %v2221 = vsel %vm1955, %v1698, %v1950
        %v2222 = vsel %vm1967, %v1951, %v1952
        %v2223 = vsel %vm1969, %v2221, %v2222
        %v2224 = vrot.slane %v2223, 2
        %2225 = vst [vmem:[#allocation1] ss:$9 sm:$0xff] %v1958
        %s2226 = scalar_lea.vmem [#allocation1], 1
        %2227 = vst [vmem:[%s2226] ss:$9 sm:$0xff] %v1965
        %s2228 = scalar_lea.vmem [#allocation1], 2
        %2229 = vst [vmem:[%s2228] ss:$9 sm:$0xff] %v1971
        %s2230 = scalar_lea.vmem [#allocation1], 3
        %2231 = vst [vmem:[%s2230] ss:$9 sm:$0xff] %v1974
        %s2232 = scalar_lea.vmem [#allocation1], 4
        %2233 = vst [vmem:[%s2232] ss:$9 sm:$0xff] %v1978
        %s2234 = scalar_lea.vmem [#allocation1], 5
        %2235 = vst [vmem:[%s2234] ss:$9 sm:$0xff] %v1982
        %s2236 = scalar_lea.vmem [#allocation1], 6
        %2237 = vst [vmem:[%s2236] ss:$9 sm:$0xff] %v1985
        %s2238 = scalar_lea.vmem [#allocation1], 7
        %2239 = vst [vmem:[%s2238] ss:$9 sm:$0xff] %v1989
        %v2240 = vld [vmem:[#allocation1] sm:$0xff]
        %v2241 = vld [vmem:[#allocation1 + $0x9] sm:$0xff]
        %v2242 = vld [vmem:[#allocation1 + $0x12] sm:$0xff]
        %v2243 = vld [vmem:[#allocation1 + $0x1b] sm:$0xff]
        %2244 = vst [vmem:[#allocation1] ss:$9 sm:$0xff] %v1993
        %2245 = vst [vmem:[%s2226] ss:$9 sm:$0xff] %v1996
        %2246 = vst [vmem:[%s2228] ss:$9 sm:$0xff] %v2000
        %2247 = vst [vmem:[%s2230] ss:$9 sm:$0xff] %v2004
        %2248 = vst [vmem:[%s2232] ss:$9 sm:$0xff] %v2007
        %2249 = vst [vmem:[%s2234] ss:$9 sm:$0xff] %v2011
        %2250 = vst [vmem:[%s2236] ss:$9 sm:$0xff] %v2015
        %2251 = vst [vmem:[%s2238] ss:$9 sm:$0xff] %v2018
        %v2252 = vld [vmem:[#allocation1] sm:$0xff]
        %v2253 = vld [vmem:[#allocation1 + $0x9] sm:$0xff]
        %v2254 = vld [vmem:[#allocation1 + $0x12] sm:$0xff]
        %v2255 = vld [vmem:[#allocation1 + $0x1b] sm:$0xff]
        %2256 = vst [vmem:[#allocation1] ss:$9 sm:$0xff] %v2022
        %2257 = vst [vmem:[%s2226] ss:$9 sm:$0xff] %v2026
        %2258 = vst [vmem:[%s2228] ss:$9 sm:$0xff] %v2029
        %2259 = vst [vmem:[%s2230] ss:$9 sm:$0xff] %v2033
        %2260 = vst [vmem:[%s2232] ss:$9 sm:$0xff] %v2037
        %2261 = vst [vmem:[%s2234] ss:$9 sm:$0xff] %v2040
        %2262 = vst [vmem:[%s2236] ss:$9 sm:$0xff] %v2044
        %2263 = vst [vmem:[%s2238] ss:$9 sm:$0xff] %v2048
        %v2264 = vld [vmem:[#allocation1] sm:$0xff]
        %v2265 = vld [vmem:[#allocation1 + $0x9] sm:$0xff]
        %v2266 = vld [vmem:[#allocation1 + $0x12] sm:$0xff]
        %v2267 = vld [vmem:[#allocation1 + $0x1b] sm:$0xff]
        %2268 = vst [vmem:[#allocation1] ss:$9 sm:$0xff] %v2051
        %2269 = vst [vmem:[%s2226] ss:$9 sm:$0xff] %v2055
        %2270 = vst [vmem:[%s2228] ss:$9 sm:$0xff] %v2059
        %2271 = vst [vmem:[%s2230] ss:$9 sm:$0xff] %v2062
        %2272 = vst [vmem:[%s2232] ss:$9 sm:$0xff] %v2066
        %2273 = vst [vmem:[%s2234] ss:$9 sm:$0xff] %v2070
        %2274 = vst [vmem:[%s2236] ss:$9 sm:$0xff] %v2073
        %2275 = vst [vmem:[%s2238] ss:$9 sm:$0xff] %v2077
        %v2276 = vld [vmem:[#allocation1] sm:$0xff]
        %v2277 = vld [vmem:[#allocation1 + $0x9] sm:$0xff]
        %v2278 = vld [vmem:[#allocation1 + $0x12] sm:$0xff]
        %v2279 = vld [vmem:[#allocation1 + $0x1b] sm:$0xff]
        %2280 = vst [vmem:[#allocation1] ss:$9 sm:$0xff] %v2081
        %2281 = vst [vmem:[%s2226] ss:$9 sm:$0xff] %v2084
        %2282 = vst [vmem:[%s2228] ss:$9 sm:$0xff] %v2088
        %2283 = vst [vmem:[%s2230] ss:$9 sm:$0xff] %v2092
        %2284 = vst [vmem:[%s2232] ss:$9 sm:$0xff] %v2095
        %2285 = vst [vmem:[%s2234] ss:$9 sm:$0xff] %v2099
        %2286 = vst [vmem:[%s2236] ss:$9 sm:$0xff] %v2103
        %2287 = vst [vmem:[%s2238] ss:$9 sm:$0xff] %v2106
        %v2288 = vld [vmem:[#allocation1] sm:$0xff]
        %v2289 = vld [vmem:[#allocation1 + $0x9] sm:$0xff]
        %v2290 = vld [vmem:[#allocation1 + $0x12] sm:$0xff]
        %v2291 = vld [vmem:[#allocation1 + $0x1b] sm:$0xff]
        %2292 = vst [vmem:[#allocation1] ss:$9 sm:$0xff] %v2110
        %2293 = vst [vmem:[%s2226] ss:$9 sm:$0xff] %v2114
        %2294 = vst [vmem:[%s2228] ss:$9 sm:$0xff] %v2117
        %2295 = vst [vmem:[%s2230] ss:$9 sm:$0xff] %v2121
        %2296 = vst [vmem:[%s2232] ss:$9 sm:$0xff] %v2125
        %2297 = vst [vmem:[%s2234] ss:$9 sm:$0xff] %v2128
        %2298 = vst [vmem:[%s2236] ss:$9 sm:$0xff] %v2132
        %2299 = vst [vmem:[%s2238] ss:$9 sm:$0xff] %v2136
        %v2300 = vld [vmem:[#allocation1] sm:$0xff]
        %v2301 = vld [vmem:[#allocation1 + $0x9] sm:$0xff]
        %v2302 = vld [vmem:[#allocation1 + $0x12] sm:$0xff]
        %v2303 = vld [vmem:[#allocation1 + $0x1b] sm:$0xff]
        %2304 = vst [vmem:[#allocation1] ss:$9 sm:$0xff] %v2139
        %2305 = vst [vmem:[%s2226] ss:$9 sm:$0xff] %v2143
        %2306 = vst [vmem:[%s2228] ss:$9 sm:$0xff] %v2147
        %2307 = vst [vmem:[%s2230] ss:$9 sm:$0xff] %v2150
        %2308 = vst [vmem:[%s2232] ss:$9 sm:$0xff] %v2154
        %2309 = vst [vmem:[%s2234] ss:$9 sm:$0xff] %v2158
        %2310 = vst [vmem:[%s2236] ss:$9 sm:$0xff] %v2161
        %2311 = vst [vmem:[%s2238] ss:$9 sm:$0xff] %v2165
        %v2312 = vld [vmem:[#allocation1] sm:$0xff]
        %v2313 = vld [vmem:[#allocation1 + $0x9] sm:$0xff]
        %v2314 = vld [vmem:[#allocation1 + $0x12] sm:$0xff]
        %v2315 = vld [vmem:[#allocation1 + $0x1b] sm:$0xff]
        %2316 = vst [vmem:[#allocation1] ss:$9 sm:$0xff] %v2169
        %2317 = vst [vmem:[%s2226] ss:$9 sm:$0xff] %v2172
        %2318 = vst [vmem:[%s2228] ss:$9 sm:$0xff] %v2176
        %2319 = vst [vmem:[%s2230] ss:$9 sm:$0xff] %v2180
        %2320 = vst [vmem:[%s2232] ss:$9 sm:$0xff] %v2183
        %2321 = vst [vmem:[%s2234] ss:$9 sm:$0xff] %v2187
        %2322 = vst [vmem:[%s2236] ss:$9 sm:$0xff] %v2191
        %2323 = vst [vmem:[%s2238] ss:$9 sm:$0xff] %v2194
        %v2324 = vld [vmem:[#allocation1] sm:$0xff]
        %v2325 = vld [vmem:[#allocation1 + $0x9] sm:$0xff]
        %v2326 = vld [vmem:[#allocation1 + $0x12] sm:$0xff]
        %v2327 = vld [vmem:[#allocation1 + $0x1b] sm:$0xff]
        %2328 = vst [vmem:[#allocation1] ss:$9 sm:$0xff] %v2198
        %2329 = vst [vmem:[%s2226] ss:$9 sm:$0xff] %v2202
        %2330 = vst [vmem:[%s2228] ss:$9 sm:$0xff] %v2205
        %2331 = vst [vmem:[%s2230] ss:$9 sm:$0xff] %v2209
        %2332 = vst [vmem:[%s2232] ss:$9 sm:$0xff] %v2213
        %2333 = vst [vmem:[%s2234] ss:$9 sm:$0xff] %v2216
        %2334 = vst [vmem:[%s2236] ss:$9 sm:$0xff] %v2220
        %2335 = vst [vmem:[%s2238] ss:$9 sm:$0xff] %v2224
        %v2336 = vld [vmem:[#allocation1] sm:$0xff]
        %v2337 = vld [vmem:[#allocation1 + $0x9] sm:$0xff]
        %v2338 = vld [vmem:[#allocation1 + $0x12] sm:$0xff]
        %v2339 = vld [vmem:[#allocation1 + $0x1b] sm:$0xff]
        %v2376 = vpack.c.bf16 %v2252, %v2240
        %v2377 = vpack.c.bf16 %v2253, %v2241
        %v2378 = vpack.c.bf16 %v2254, %v2242
        %v2379 = vpack.c.bf16 %v2255, %v2243
        %v2380 = vpack.c.bf16 %v2276, %v2264
        %v2381 = vpack.c.bf16 %v2277, %v2265
        %v2382 = vpack.c.bf16 %v2278, %v2266
        %v2383 = vpack.c.bf16 %v2279, %v2267
        %v2384 = vpack.c.bf16 %v2300, %v2288
        %v2385 = vpack.c.bf16 %v2301, %v2289
        %v2386 = vpack.c.bf16 %v2302, %v2290
        %v2387 = vpack.c.bf16 %v2303, %v2291
        %v2388 = vpack.c.bf16 %v2324, %v2312
        %v2389 = vpack.c.bf16 %v2325, %v2313
        %v2390 = vpack.c.bf16 %v2326, %v2314
        %v2391 = vpack.c.bf16 %v2327, %v2315
        %v2392 = vpack.c.bf16 %v2336, %v2336
        %v2393 = vpack.c.bf16 %v2337, %v2337
        %v2394 = vpack.c.bf16 %v2338, %v2338
        %v2395 = vpack.c.bf16 %v2339, %v2339
        %v2396 = vld [vmem:[%s3] sm:$0xf]
        %v2397 = vld [vmem:[%s3 + $0x4] sm:$0xf]
        %v2398 = vld [vmem:[%s3 + $0x8] sm:$0xf]
        %v2399 = vld [vmem:[%s3 + $0xc] sm:$0xf]
        %v2400 = vld [vmem:[%s3 + $0x10] sm:$0xf]
        %v2401 = vld [vmem:[%s3 + $0x14] sm:$0xf]
        %v2402 = vld [vmem:[%s3 + $0x18] sm:$0xf]
        %v2403 = vld [vmem:[%s3 + $0x1c] sm:$0xf]
        %v2404 = vld [vmem:[%s3 + $0x20] sm:$0xf]
        %v2405 = vld [vmem:[%s3 + $0x24] sm:$0xf]
        %v2406 = vld [vmem:[%s3 + $0x28] sm:$0xf]
        %v2407 = vld [vmem:[%s3 + $0x2c] sm:$0xf]
        %v2408 = vld [vmem:[%s3 + $0x30] sm:$0xf]
        %v2409 = vld [vmem:[%s3 + $0x34] sm:$0xf]
        %v2410 = vld [vmem:[%s3 + $0x38] sm:$0xf]
        %v2411 = vld [vmem:[%s3 + $0x3c] sm:$0xf]
        %v2412 = vld [vmem:[%s3 + $0x40] sm:$0xf]
        %v2413 = vld [vmem:[%s3 + $0x44] sm:$0xf]
        %v2414 = vld [vmem:[%s3 + $0x48] sm:$0xf]
        %v2415 = vld [vmem:[%s3 + $0x4c] sm:$0xf]
        %v2416 = vld [vmem:[%s3 + $0x50] sm:$0xf]
        %v2417 = vld [vmem:[%s3 + $0x54] sm:$0xf]
        %v2418 = vld [vmem:[%s3 + $0x58] sm:$0xf]
        %v2419 = vld [vmem:[%s3 + $0x5c] sm:$0xf]
        %v2420 = vld [vmem:[%s3 + $0x60] sm:$0xf]
        %v2421 = vld [vmem:[%s3 + $0x64] sm:$0xf]
        %v2422 = vld [vmem:[%s3 + $0x68] sm:$0xf]
        %v2423 = vld [vmem:[%s3 + $0x6c] sm:$0xf]
        %v2424 = vld [vmem:[%s3 + $0x70] sm:$0xf]
        %v2425 = vld [vmem:[%s3 + $0x74] sm:$0xf]
        %v2426 = vld [vmem:[%s3 + $0x78] sm:$0xf]
        %v2427 = vld [vmem:[%s3 + $0x7c] sm:$0xf]
        %v2428 = vld [vmem:[%s3 + $0x80] sm:$0xf]
        %v2429 = vld [vmem:[%s3 + $0x84] sm:$0xf]
        %v2430 = vld [vmem:[%s3 + $0x88] sm:$0xf]
        %v2431 = vld [vmem:[%s3 + $0x8c] sm:$0xf]
        %v2432 = vld [vmem:[%s3 + $0x90] sm:$0xf]
        %v2433 = vld [vmem:[%s3 + $0x94] sm:$0xf]
        %v2434 = vld [vmem:[%s3 + $0x98] sm:$0xf]
        %v2435 = vld [vmem:[%s3 + $0x9c] sm:$0xf]
        %v2436 = vld [vmem:[%s3 + $0xa0] sm:$0xf]
        %v2437 = vld [vmem:[%s3 + $0xa4] sm:$0xf]
        %v2438 = vld [vmem:[%s3 + $0xa8] sm:$0xf]
        %v2439 = vld [vmem:[%s3 + $0xac] sm:$0xf]
        %v2440 = vld [vmem:[%s3 + $0xb0] sm:$0xf]
        %v2441 = vld [vmem:[%s3 + $0xb4] sm:$0xf]
        %v2442 = vld [vmem:[%s3 + $0xb8] sm:$0xf]
        %v2443 = vld [vmem:[%s3 + $0xbc] sm:$0xf]
        %v2444 = vld [vmem:[%s3 + $0xc0] sm:$0xf]
        %v2445 = vld [vmem:[%s3 + $0xc4] sm:$0xf]
        %v2446 = vld [vmem:[%s3 + $0xc8] sm:$0xf]
        %v2447 = vld [vmem:[%s3 + $0xcc] sm:$0xf]
        %v2448 = vld [vmem:[%s3 + $0xd0] sm:$0xf]
        %v2449 = vld [vmem:[%s3 + $0xd4] sm:$0xf]
        %v2450 = vld [vmem:[%s3 + $0xd8] sm:$0xf]
        %v2451 = vld [vmem:[%s3 + $0xdc] sm:$0xf]
        %v2452 = vld [vmem:[%s3 + $0xe0] sm:$0xf]
        %v2453 = vld [vmem:[%s3 + $0xe4] sm:$0xf]
        %v2454 = vld [vmem:[%s3 + $0xe8] sm:$0xf]
        %v2455 = vld [vmem:[%s3 + $0xec] sm:$0xf]
        %v2456 = vld [vmem:[%s3 + $0xf0] sm:$0xf]
        %v2457 = vld [vmem:[%s3 + $0xf4] sm:$0xf]
        %v2458 = vld [vmem:[%s3 + $0xf8] sm:$0xf]
        %v2459 = vld [vmem:[%s3 + $0xfc] sm:$0xf]
        %v2460 = vld [vmem:[%s4] sm:$0x1]
        %v2462 = vperm.slane %v2460, 0
        %v2528 = vunpack.c.l.b16 %v2396
        %v2529 = vunpack.c.l.b16 %v2397
        %v2530 = vunpack.c.l.b16 %v2398
        %v2531 = vunpack.c.l.b16 %v2399
        %v2532 = vunpack.c.l.b16 %v2400
        %v2533 = vunpack.c.l.b16 %v2401
        %v2534 = vunpack.c.l.b16 %v2402
        %v2535 = vunpack.c.l.b16 %v2403
        %v2536 = vunpack.c.l.b16 %v2404
        %v2537 = vunpack.c.l.b16 %v2405
        %v2538 = vunpack.c.l.b16 %v2406
        %v2539 = vunpack.c.l.b16 %v2407
        %v2540 = vunpack.c.l.b16 %v2408
        %v2541 = vunpack.c.l.b16 %v2409
        %v2542 = vunpack.c.l.b16 %v2410
        %v2543 = vunpack.c.l.b16 %v2411
        %v2544 = vunpack.c.l.b16 %v2412
        %v2545 = vunpack.c.l.b16 %v2413
        %v2546 = vunpack.c.l.b16 %v2414
        %v2547 = vunpack.c.l.b16 %v2415
        %v2548 = vunpack.c.l.b16 %v2416
        %v2549 = vunpack.c.l.b16 %v2417
        %v2550 = vunpack.c.l.b16 %v2418
        %v2551 = vunpack.c.l.b16 %v2419
        %v2552 = vunpack.c.l.b16 %v2420
        %v2553 = vunpack.c.l.b16 %v2421
        %v2554 = vunpack.c.l.b16 %v2422
        %v2555 = vunpack.c.l.b16 %v2423
        %v2556 = vunpack.c.l.b16 %v2424
        %v2557 = vunpack.c.l.b16 %v2425
        %v2558 = vunpack.c.l.b16 %v2426
        %v2559 = vunpack.c.l.b16 %v2427
        %v2560 = vunpack.c.l.b16 %v2428
        %v2561 = vunpack.c.l.b16 %v2429
        %v2562 = vunpack.c.l.b16 %v2430
        %v2563 = vunpack.c.l.b16 %v2431
        %v2564 = vunpack.c.l.b16 %v2432
        %v2565 = vunpack.c.l.b16 %v2433
        %v2566 = vunpack.c.l.b16 %v2434
        %v2567 = vunpack.c.l.b16 %v2435
        %v2568 = vunpack.c.l.b16 %v2436
        %v2569 = vunpack.c.l.b16 %v2437
        %v2570 = vunpack.c.l.b16 %v2438
        %v2571 = vunpack.c.l.b16 %v2439
        %v2572 = vunpack.c.l.b16 %v2440
        %v2573 = vunpack.c.l.b16 %v2441
        %v2574 = vunpack.c.l.b16 %v2442
        %v2575 = vunpack.c.l.b16 %v2443
        %v2576 = vunpack.c.l.b16 %v2444
        %v2577 = vunpack.c.l.b16 %v2445
        %v2578 = vunpack.c.l.b16 %v2446
        %v2579 = vunpack.c.l.b16 %v2447
        %v2580 = vunpack.c.l.b16 %v2448
        %v2581 = vunpack.c.l.b16 %v2449
        %v2582 = vunpack.c.l.b16 %v2450
        %v2583 = vunpack.c.l.b16 %v2451
        %v2584 = vunpack.c.l.b16 %v2452
        %v2585 = vunpack.c.l.b16 %v2453
        %v2586 = vunpack.c.l.b16 %v2454
        %v2587 = vunpack.c.l.b16 %v2455
        %v2588 = vunpack.c.l.b16 %v2456
        %v2589 = vunpack.c.l.b16 %v2457
        %v2590 = vunpack.c.l.b16 %v2458
        %v2591 = vunpack.c.l.b16 %v2459
        %v2592 = vpack.c.b16 %v2529, %v2528
        %v2593 = vpack.c.b16 %v2531, %v2530
        %v2594 = vpack.c.b16 %v2533, %v2532
        %v2595 = vpack.c.b16 %v2535, %v2534
        %v2596 = vpack.c.b16 %v2537, %v2536
        %v2597 = vpack.c.b16 %v2539, %v2538
        %v2598 = vpack.c.b16 %v2541, %v2540
        %v2599 = vpack.c.b16 %v2543, %v2542
        %v2600 = vpack.c.b16 %v2545, %v2544
        %v2601 = vpack.c.b16 %v2547, %v2546
        %v2602 = vpack.c.b16 %v2549, %v2548
        %v2603 = vpack.c.b16 %v2551, %v2550
        %v2604 = vpack.c.b16 %v2553, %v2552
        %v2605 = vpack.c.b16 %v2555, %v2554
        %v2606 = vpack.c.b16 %v2557, %v2556
        %v2607 = vpack.c.b16 %v2559, %v2558
        %v2608 = vpack.c.b16 %v2561, %v2560
        %v2609 = vpack.c.b16 %v2563, %v2562
        %v2610 = vpack.c.b16 %v2565, %v2564
        %v2611 = vpack.c.b16 %v2567, %v2566
        %v2612 = vpack.c.b16 %v2569, %v2568
        %v2613 = vpack.c.b16 %v2571, %v2570
        %v2614 = vpack.c.b16 %v2573, %v2572
        %v2615 = vpack.c.b16 %v2575, %v2574
        %v2616 = vpack.c.b16 %v2577, %v2576
        %v2617 = vpack.c.b16 %v2579, %v2578
        %v2618 = vpack.c.b16 %v2581, %v2580
        %v2619 = vpack.c.b16 %v2583, %v2582
        %v2620 = vpack.c.b16 %v2585, %v2584
        %v2621 = vpack.c.b16 %v2587, %v2586
        %v2622 = vpack.c.b16 %v2589, %v2588
        %v2623 = vpack.c.b16 %v2591, %v2590
        %2656 = vmatpush.bf16.msra.mxu0 %v2599
        %2657 = vmatpush.bf16.msra.mxu0 %v2598
        %2658 = vmatpush.bf16.msra.mxu0 %v2597
        %2659 = vmatpush.bf16.msra.mxu0 %v2596
        %2660 = vmatpush.bf16.msra.mxu0 %v2595
        %2661 = vmatpush.bf16.msra.mxu0 %v2594
        %2662 = vmatpush.bf16.msra.mxu0 %v2593
        %2663 = vmatpush.bf16.msra.mxu0 %v2592
        %2664 = vmatmul.bf16.gmra.mxu0 %v2376
        %v2665 = vpop.f32.mrf.mxu0
        %v2666 = vadd.f32 %v2462, %v2665
        %v2667 = vpop.f32.mrf.mxu0
        %v2668 = vadd.f32 %v2462, %v2667
        %2669 = vmatmul.bf16.gmra.mxu0 %v2380
        %v2670 = vpop.f32.mrf.mxu0
        %v2671 = vadd.f32 %v2462, %v2670
        %v2672 = vpop.f32.mrf.mxu0
        %v2673 = vadd.f32 %v2462, %v2672
        %2674 = vmatmul.bf16.gmra.mxu0 %v2384
        %v2675 = vpop.f32.mrf.mxu0
        %v2676 = vadd.f32 %v2462, %v2675
        %v2677 = vpop.f32.mrf.mxu0
        %v2678 = vadd.f32 %v2462, %v2677
        %2679 = vmatmul.bf16.gmra.mxu0 %v2388
        %v2680 = vpop.f32.mrf.mxu0
        %v2681 = vadd.f32 %v2462, %v2680
        %v2682 = vpop.f32.mrf.mxu0
        %v2683 = vadd.f32 %v2462, %v2682
        %2684 = vmatmul.bf16.gmra.mxu0 %v2392
        %v2685 = vpop.f32.mrf.mxu0
        %v2686 = vadd.f32 %v2462, %v2685
        %v2687 = vpop.f32.mrf.mxu0
        %2688 = vdwg.mxu0
        %2689 = vmatpush.bf16.msra.mxu0 %v2607
        %2690 = vmatpush.bf16.msra.mxu0 %v2606
        %2691 = vmatpush.bf16.msra.mxu0 %v2605
        %2692 = vmatpush.bf16.msra.mxu0 %v2604
        %2693 = vmatpush.bf16.msra.mxu0 %v2603
        %2694 = vmatpush.bf16.msra.mxu0 %v2602
        %2695 = vmatpush.bf16.msra.mxu0 %v2601
        %2696 = vmatpush.bf16.msra.mxu0 %v2600
        %2697 = vmatmul.bf16.gmra.mxu0 %v2377
        %v2698 = vpop.f32.mrf.mxu0
        %v2699 = vadd.f32 %v2666, %v2698
        %v2700 = vpop.f32.mrf.mxu0
        %v2701 = vadd.f32 %v2668, %v2700
        %2702 = vmatmul.bf16.gmra.mxu0 %v2381
        %v2703 = vpop.f32.mrf.mxu0
        %v2704 = vadd.f32 %v2671, %v2703
        %v2705 = vpop.f32.mrf.mxu0
        %v2706 = vadd.f32 %v2673, %v2705
        %2707 = vmatmul.bf16.gmra.mxu0 %v2385
        %v2708 = vpop.f32.mrf.mxu0
        %v2709 = vadd.f32 %v2676, %v2708
        %v2710 = vpop.f32.mrf.mxu0
        %v2711 = vadd.f32 %v2678, %v2710
        %2712 = vmatmul.bf16.gmra.mxu0 %v2389
        %v2713 = vpop.f32.mrf.mxu0
        %v2714 = vadd.f32 %v2681, %v2713
        %v2715 = vpop.f32.mrf.mxu0
        %v2716 = vadd.f32 %v2683, %v2715
        %2717 = vmatmul.bf16.gmra.mxu0 %v2393
        %v2718 = vpop.f32.mrf.mxu0
        %v2719 = vadd.f32 %v2686, %v2718
        %v2720 = vpop.f32.mrf.mxu0
        %2721 = vdwg.mxu0
        %2722 = vmatpush.bf16.msra.mxu0 %v2615
        %2723 = vmatpush.bf16.msra.mxu0 %v2614
        %2724 = vmatpush.bf16.msra.mxu0 %v2613
        %2725 = vmatpush.bf16.msra.mxu0 %v2612
        %2726 = vmatpush.bf16.msra.mxu0 %v2611
        %2727 = vmatpush.bf16.msra.mxu0 %v2610
        %2728 = vmatpush.bf16.msra.mxu0 %v2609
        %2729 = vmatpush.bf16.msra.mxu0 %v2608
        %2730 = vmatmul.bf16.gmra.mxu0 %v2378
        %v2731 = vpop.f32.mrf.mxu0
        %v2732 = vadd.f32 %v2699, %v2731
        %v2733 = vpop.f32.mrf.mxu0
        %v2734 = vadd.f32 %v2701, %v2733
        %2735 = vmatmul.bf16.gmra.mxu0 %v2382
        %v2736 = vpop.f32.mrf.mxu0
        %v2737 = vadd.f32 %v2704, %v2736
        %v2738 = vpop.f32.mrf.mxu0
        %v2739 = vadd.f32 %v2706, %v2738
        %2740 = vmatmul.bf16.gmra.mxu0 %v2386
        %v2741 = vpop.f32.mrf.mxu0
        %v2742 = vadd.f32 %v2709, %v2741
        %v2743 = vpop.f32.mrf.mxu0
        %v2744 = vadd.f32 %v2711, %v2743
        %2745 = vmatmul.bf16.gmra.mxu0 %v2390
        %v2746 = vpop.f32.mrf.mxu0
        %v2747 = vadd.f32 %v2714, %v2746
        %v2748 = vpop.f32.mrf.mxu0
        %v2749 = vadd.f32 %v2716, %v2748
        %2750 = vmatmul.bf16.gmra.mxu0 %v2394
        %v2751 = vpop.f32.mrf.mxu0
        %v2752 = vadd.f32 %v2719, %v2751
        %v2753 = vpop.f32.mrf.mxu0
        %2754 = vdwg.mxu0
        %2755 = vmatpush.bf16.msra.mxu0 %v2623
        %2756 = vmatpush.bf16.msra.mxu0 %v2622
        %2757 = vmatpush.bf16.msra.mxu0 %v2621
        %2758 = vmatpush.bf16.msra.mxu0 %v2620
        %2759 = vmatpush.bf16.msra.mxu0 %v2619
        %2760 = vmatpush.bf16.msra.mxu0 %v2618
        %2761 = vmatpush.bf16.msra.mxu0 %v2617
        %2762 = vmatpush.bf16.msra.mxu0 %v2616
        %2763 = vmatmul.bf16.gmra.mxu0 %v2379
        %v2764 = vpop.f32.mrf.mxu0
        %v2765 = vadd.f32 %v2732, %v2764
        %v2766 = vpop.f32.mrf.mxu0
        %v2767 = vadd.f32 %v2734, %v2766
        %2768 = vmatmul.bf16.gmra.mxu0 %v2383
        %v2769 = vpop.f32.mrf.mxu0
        %v2770 = vadd.f32 %v2737, %v2769
        %v2771 = vpop.f32.mrf.mxu0
        %v2772 = vadd.f32 %v2739, %v2771
        %2773 = vmatmul.bf16.gmra.mxu0 %v2387
        %v2774 = vpop.f32.mrf.mxu0
        %v2775 = vadd.f32 %v2742, %v2774
        %v2776 = vpop.f32.mrf.mxu0
        %v2777 = vadd.f32 %v2744, %v2776
        %2778 = vmatmul.bf16.gmra.mxu0 %v2391
        %v2779 = vpop.f32.mrf.mxu0
        %v2780 = vadd.f32 %v2747, %v2779
        %v2781 = vpop.f32.mrf.mxu0
        %v2782 = vadd.f32 %v2749, %v2781
        %2783 = vmatmul.bf16.gmra.mxu0 %v2395
        %v2784 = vpop.f32.mrf.mxu0
        %v2785 = vadd.f32 %v2752, %v2784
        %v2786 = vpop.f32.mrf.mxu0
        %2787 = vdwg.mxu0
        %v2788 = vmax.f32 %v2765, 0.0
        %v2789 = vmax.f32 %v2767, 0.0
        %v2790 = vmax.f32 %v2770, 0.0
        %v2791 = vmax.f32 %v2772, 0.0
        %v2792 = vmax.f32 %v2775, 0.0
        %v2793 = vmax.f32 %v2777, 0.0
        %v2794 = vmax.f32 %v2780, 0.0
        %v2795 = vmax.f32 %v2782, 0.0
        %v2796 = vmax.f32 %v2785, 0.0
        %v2806 = vrot.slane %v2788, 1
        %v2807 = vrot.slane %v2788, 2
        %v2808 = vrot.slane %v2788, 3
        %v2809 = vrot.slane %v2788, 4
        %v2810 = vrot.slane %v2788, 5
        %v2811 = vrot.slane %v2788, 6
        %v2812 = vrot.slane %v2788, 7
        %v2813 = vrot.slane %v2789, 1
        %v2814 = vrot.slane %v2789, 2
        %v2815 = vrot.slane %v2789, 3
        %v2816 = vrot.slane %v2789, 4
        %v2817 = vrot.slane %v2789, 5
        %v2818 = vrot.slane %v2789, 6
        %v2819 = vrot.slane %v2789, 7
        %v2820 = vrot.slane %v2790, 1
        %v2821 = vrot.slane %v2790, 2
        %v2822 = vrot.slane %v2790, 3
        %v2823 = vrot.slane %v2790, 4
        %v2824 = vrot.slane %v2790, 5
        %v2825 = vrot.slane %v2790, 6
        %v2826 = vrot.slane %v2790, 7
        %v2827 = vrot.slane %v2791, 1
        %v2828 = vrot.slane %v2791, 2
        %v2829 = vrot.slane %v2791, 3
        %v2830 = vrot.slane %v2791, 4
        %v2831 = vrot.slane %v2791, 5
        %v2832 = vrot.slane %v2791, 6
        %v2833 = vrot.slane %v2791, 7
        %v2834 = vrot.slane %v2792, 1
        %v2835 = vrot.slane %v2792, 2
        %v2836 = vrot.slane %v2792, 3
        %v2837 = vrot.slane %v2792, 4
        %v2838 = vrot.slane %v2792, 5
        %v2839 = vrot.slane %v2792, 6
        %v2840 = vrot.slane %v2792, 7
        %v2841 = vrot.slane %v2793, 1
        %v2842 = vrot.slane %v2793, 2
        %v2843 = vrot.slane %v2793, 3
        %v2844 = vrot.slane %v2793, 4
        %v2845 = vrot.slane %v2793, 5
        %v2846 = vrot.slane %v2793, 6
        %v2847 = vrot.slane %v2793, 7
        %v2848 = vrot.slane %v2794, 1
        %v2849 = vrot.slane %v2794, 2
        %v2850 = vrot.slane %v2794, 3
        %v2851 = vrot.slane %v2794, 4
        %v2852 = vrot.slane %v2794, 5
        %v2853 = vrot.slane %v2794, 6
        %v2854 = vrot.slane %v2794, 7
        %v2855 = vrot.slane %v2795, 1
        %v2856 = vrot.slane %v2795, 2
        %v2857 = vrot.slane %v2795, 3
        %v2858 = vrot.slane %v2795, 4
        %v2859 = vrot.slane %v2795, 5
        %v2860 = vrot.slane %v2795, 6
        %v2861 = vrot.slane %v2795, 7
        %v2862 = vrot.slane %v2796, 1
        %v2863 = vrot.slane %v2796, 2
        %v2864 = vrot.slane %v2796, 3
        %v2865 = vrot.slane %v2796, 4
        %v2866 = vrot.slane %v2796, 5
        %v2867 = vrot.slane %v2796, 6
        %v2868 = vrot.slane %v2796, 7
        %v2904 = vperm.slane %v2806, 0
        %v2905 = vperm.slane %v2814, 0
        %v2906 = vperm.slane %v2822, 0
        %v2907 = vperm.slane %v2830, 0
        %v2908 = vperm.slane %v2838, 0
        %v2909 = vperm.slane %v2846, 0
        %v2910 = vperm.slane %v2854, 0
        %v2911 = vperm.slane %v2796, 0
        %2912 = vrot.lane.b32.xlu0 %v2904, 64
        %v2913 = vpop.permute.xlu0 %2912
        %2914 = vrot.lane.b32.xlu0 %v2905, 64
        %v2915 = vpop.permute.xlu0 %2914
        %2916 = vrot.lane.b32.xlu0 %v2906, 64
        %v2917 = vpop.permute.xlu0 %2916
        %2918 = vrot.lane.b32.xlu0 %v2907, 64
        %v2919 = vpop.permute.xlu0 %2918
        %2920 = vrot.lane.b32.xlu0 %v2908, 64
        %v2921 = vpop.permute.xlu0 %2920
        %2922 = vrot.lane.b32.xlu0 %v2909, 64
        %v2923 = vpop.permute.xlu0 %2922
        %2924 = vrot.lane.b32.xlu0 %v2910, 64
        %v2925 = vpop.permute.xlu0 %2924
        %2926 = vrot.lane.b32.xlu0 %v2911, 64
        %v2927 = vpop.permute.xlu0 %2926
        %v2936 = vperm.slane %v2808, 0
        %v2937 = vperm.slane %v2816, 0
        %v2938 = vperm.slane %v2824, 0
        %v2939 = vperm.slane %v2832, 0
        %v2940 = vperm.slane %v2840, 0
        %v2941 = vperm.slane %v2794, 0
        %v2942 = vperm.slane %v2855, 0
        %v2943 = vperm.slane %v2863, 0
        %2944 = vrot.lane.b32.xlu0 %v2936, 64
        %v2945 = vpop.permute.xlu0 %2944
        %2946 = vrot.lane.b32.xlu0 %v2937, 64
        %v2947 = vpop.permute.xlu0 %2946
        %2948 = vrot.lane.b32.xlu0 %v2938, 64
        %v2949 = vpop.permute.xlu0 %2948
        %2950 = vrot.lane.b32.xlu0 %v2939, 64
        %v2951 = vpop.permute.xlu0 %2950
        %2952 = vrot.lane.b32.xlu0 %v2940, 64
        %v2953 = vpop.permute.xlu0 %2952
        %2954 = vrot.lane.b32.xlu0 %v2941, 64
        %v2955 = vpop.permute.xlu0 %2954
        %2956 = vrot.lane.b32.xlu0 %v2942, 64
        %v2957 = vpop.permute.xlu0 %2956
        %2958 = vrot.lane.b32.xlu0 %v2943, 64
        %v2959 = vpop.permute.xlu0 %2958
        %v2968 = vperm.slane %v2810, 0
        %v2969 = vperm.slane %v2818, 0
        %v2970 = vperm.slane %v2826, 0
        %v2971 = vperm.slane %v2792, 0
        %v2972 = vperm.slane %v2841, 0
        %v2973 = vperm.slane %v2849, 0
        %v2974 = vperm.slane %v2857, 0
        %v2975 = vperm.slane %v2865, 0
        %2976 = vrot.lane.b32.xlu0 %v2968, 64
        %v2977 = vpop.permute.xlu0 %2976
        %2978 = vrot.lane.b32.xlu0 %v2969, 64
        %v2979 = vpop.permute.xlu0 %2978
        %2980 = vrot.lane.b32.xlu0 %v2970, 64
        %v2981 = vpop.permute.xlu0 %2980
        %2982 = vrot.lane.b32.xlu0 %v2971, 64
        %v2983 = vpop.permute.xlu0 %2982
        %2984 = vrot.lane.b32.xlu0 %v2972, 64
        %v2985 = vpop.permute.xlu0 %2984
        %2986 = vrot.lane.b32.xlu0 %v2973, 64
        %v2987 = vpop.permute.xlu0 %2986
        %2988 = vrot.lane.b32.xlu0 %v2974, 64
        %v2989 = vpop.permute.xlu0 %2988
        %2990 = vrot.lane.b32.xlu0 %v2975, 64
        %v2991 = vpop.permute.xlu0 %2990
        %v3000 = vperm.slane %v2812, 0
        %v3001 = vperm.slane %v2790, 0
        %v3002 = vperm.slane %v2827, 0
        %v3003 = vperm.slane %v2835, 0
        %v3004 = vperm.slane %v2843, 0
        %v3005 = vperm.slane %v2851, 0
        %v3006 = vperm.slane %v2859, 0
        %v3007 = vperm.slane %v2867, 0
        %3008 = vrot.lane.b32.xlu0 %v3000, 64
        %v3009 = vpop.permute.xlu0 %3008
        %3010 = vrot.lane.b32.xlu0 %v3001, 64
        %v3011 = vpop.permute.xlu0 %3010
        %3012 = vrot.lane.b32.xlu0 %v3002, 64
        %v3013 = vpop.permute.xlu0 %3012
        %3014 = vrot.lane.b32.xlu0 %v3003, 64
        %v3015 = vpop.permute.xlu0 %3014
        %3016 = vrot.lane.b32.xlu0 %v3004, 64
        %v3017 = vpop.permute.xlu0 %3016
        %3018 = vrot.lane.b32.xlu0 %v3005, 64
        %v3019 = vpop.permute.xlu0 %3018
        %3020 = vrot.lane.b32.xlu0 %v3006, 64
        %v3021 = vpop.permute.xlu0 %3020
        %3022 = vrot.lane.b32.xlu0 %v3007, 64
        %v3023 = vpop.permute.xlu0 %3022
        %vm3032 = vcmask 523264
        %v3033 = vsel %vm3032, %v2788, %v2913
        %v3034 = vsel %vm3032, %v2813, %v2915
        %v3035 = vsel %vm3032, %v2821, %v2917
        %v3036 = vsel %vm3032, %v2829, %v2919
        %v3037 = vsel %vm3032, %v2837, %v2921
        %v3038 = vsel %vm3032, %v2845, %v2923
        %v3039 = vsel %vm3032, %v2853, %v2925
        %v3040 = vsel %vm3032, %v2861, %v2927
        %v3041 = vsel %vm3032, %v2807, %v2945
        %v3042 = vsel %vm3032, %v2815, %v2947
        %v3043 = vsel %vm3032, %v2823, %v2949
        %v3044 = vsel %vm3032, %v2831, %v2951
        %v3045 = vsel %vm3032, %v2839, %v2953
        %v3046 = vsel %vm3032, %v2847, %v2955
        %v3047 = vsel %vm3032, %v2795, %v2957
        %v3048 = vsel %vm3032, %v2862, %v2959
        %v3049 = vsel %vm3032, %v2809, %v2977
        %v3050 = vsel %vm3032, %v2817, %v2979
        %v3051 = vsel %vm3032, %v2825, %v2981
        %v3052 = vsel %vm3032, %v2833, %v2983
        %v3053 = vsel %vm3032, %v2793, %v2985
        %v3054 = vsel %vm3032, %v2848, %v2987
        %v3055 = vsel %vm3032, %v2856, %v2989
        %v3056 = vsel %vm3032, %v2864, %v2991
        %v3057 = vsel %vm3032, %v2811, %v3009
        %v3058 = vsel %vm3032, %v2819, %v3011
        %v3059 = vsel %vm3032, %v2791, %v3013
        %v3060 = vsel %vm3032, %v2834, %v3015
        %v3061 = vsel %vm3032, %v2842, %v3017
        %v3062 = vsel %vm3032, %v2850, %v3019
        %v3063 = vsel %vm3032, %v2858, %v3021
        %v3064 = vsel %vm3032, %v2866, %v3023
        %v3065 = vpack.c.bf16 %v3033, %v3033
        %v3066 = vpack.c.bf16 %v3041, %v3041
        %v3067 = vpack.c.bf16 %v3049, %v3049
        %v3068 = vpack.c.bf16 %v3057, %v3057
        %v3069 = vpack.c.bf16 %v2789, %v2789
        %v3070 = vpack.c.bf16 %v3034, %v3034
        %v3071 = vpack.c.bf16 %v3042, %v3042
        %v3072 = vpack.c.bf16 %v3050, %v3050
        %v3073 = vpack.c.bf16 %v3058, %v3058
        %v3074 = vpack.c.bf16 %v2820, %v2820
        %v3075 = vpack.c.bf16 %v3035, %v3035
        %v3076 = vpack.c.bf16 %v3043, %v3043
        %v3077 = vpack.c.bf16 %v3051, %v3051
        %v3078 = vpack.c.bf16 %v3059, %v3059
        %v3079 = vpack.c.bf16 %v2828, %v2828
        %v3080 = vpack.c.bf16 %v3036, %v3036
        %v3081 = vpack.c.bf16 %v3044, %v3044
        %v3082 = vpack.c.bf16 %v3052, %v3052
        %v3083 = vpack.c.bf16 %v3060, %v3060
        %v3084 = vpack.c.bf16 %v2836, %v2836
        %v3085 = vpack.c.bf16 %v3037, %v3037
        %v3086 = vpack.c.bf16 %v3045, %v3045
        %v3087 = vpack.c.bf16 %v3053, %v3053
        %v3088 = vpack.c.bf16 %v3061, %v3061
        %v3089 = vpack.c.bf16 %v2844, %v2844
        %v3090 = vpack.c.bf16 %v3038, %v3038
        %v3091 = vpack.c.bf16 %v3046, %v3046
        %v3092 = vpack.c.bf16 %v3054, %v3054
        %v3093 = vpack.c.bf16 %v3062, %v3062
        %v3094 = vpack.c.bf16 %v2852, %v2852
        %v3095 = vpack.c.bf16 %v3039, %v3039
        %v3096 = vpack.c.bf16 %v3047, %v3047
        %v3097 = vpack.c.bf16 %v3055, %v3055
        %v3098 = vpack.c.bf16 %v3063, %v3063
        %v3099 = vpack.c.bf16 %v2860, %v2860
        %v3100 = vpack.c.bf16 %v3040, %v3040
        %v3101 = vpack.c.bf16 %v3048, %v3048
        %v3102 = vpack.c.bf16 %v3056, %v3056
        %v3103 = vpack.c.bf16 %v3064, %v3064
        %v3104 = vpack.c.bf16 %v2868, %v2868
        %v3105 = vld [vmem:[%s5] sm:$0xf]
        %v3106 = vld [vmem:[%s5 + $0x4] sm:$0xf]
        %v3107 = vld [vmem:[%s5 + $0x8] sm:$0xf]
        %v3108 = vld [vmem:[%s5 + $0xc] sm:$0xf]
        %v3109 = vld [vmem:[%s5 + $0x10] sm:$0xf]
        %v3110 = vld [vmem:[%s5 + $0x14] sm:$0xf]
        %v3111 = vld [vmem:[%s5 + $0x18] sm:$0xf]
        %v3112 = vld [vmem:[%s5 + $0x1c] sm:$0xf]
        %v3113 = vld [vmem:[%s5 + $0x20] sm:$0xf]
        %v3114 = vld [vmem:[%s5 + $0x24] sm:$0xf]
        %v3115 = vld [vmem:[%s5 + $0x28] sm:$0xf]
        %v3116 = vld [vmem:[%s5 + $0x2c] sm:$0xf]
        %v3117 = vld [vmem:[%s5 + $0x30] sm:$0xf]
        %v3118 = vld [vmem:[%s5 + $0x34] sm:$0xf]
        %v3119 = vld [vmem:[%s5 + $0x38] sm:$0xf]
        %v3120 = vld [vmem:[%s5 + $0x3c] sm:$0xf]
        %v3121 = vld [vmem:[%s5 + $0x40] sm:$0xf]
        %v3122 = vld [vmem:[%s5 + $0x44] sm:$0xf]
        %v3123 = vld [vmem:[%s5 + $0x48] sm:$0xf]
        %v3124 = vld [vmem:[%s5 + $0x4c] sm:$0xf]
        %v3125 = vld [vmem:[%s5 + $0x50] sm:$0xf]
        %v3126 = vld [vmem:[%s5 + $0x54] sm:$0xf]
        %v3127 = vld [vmem:[%s5 + $0x58] sm:$0xf]
        %v3128 = vld [vmem:[%s5 + $0x5c] sm:$0xf]
        %v3129 = vld [vmem:[%s5 + $0x60] sm:$0xf]
        %v3130 = vld [vmem:[%s5 + $0x64] sm:$0xf]
        %v3131 = vld [vmem:[%s5 + $0x68] sm:$0xf]
        %v3132 = vld [vmem:[%s5 + $0x6c] sm:$0xf]
        %v3133 = vld [vmem:[%s5 + $0x70] sm:$0xf]
        %v3134 = vld [vmem:[%s5 + $0x74] sm:$0xf]
        %v3135 = vld [vmem:[%s5 + $0x78] sm:$0xf]
        %v3136 = vld [vmem:[%s5 + $0x7c] sm:$0xf]
        %v3137 = vld [vmem:[%s5 + $0x80] sm:$0xf]
        %v3138 = vld [vmem:[%s5 + $0x84] sm:$0xf]
        %v3139 = vld [vmem:[%s5 + $0x88] sm:$0xf]
        %v3140 = vld [vmem:[%s5 + $0x8c] sm:$0xf]
        %v3141 = vld [vmem:[%s5 + $0x90] sm:$0xf]
        %v3142 = vld [vmem:[%s5 + $0x94] sm:$0xf]
        %v3143 = vld [vmem:[%s5 + $0x98] sm:$0xf]
        %v3144 = vld [vmem:[%s5 + $0x9c] sm:$0xf]
        %v3145 = vld [vmem:[%s5 + $0xa0] sm:$0xf]
        %v3146 = vld [vmem:[%s5 + $0xa4] sm:$0xf]
        %v3147 = vld [vmem:[%s5 + $0xa8] sm:$0xf]
        %v3148 = vld [vmem:[%s5 + $0xac] sm:$0xf]
        %v3149 = vld [vmem:[%s5 + $0xb0] sm:$0xf]
        %v3150 = vld [vmem:[%s5 + $0xb4] sm:$0xf]
        %v3151 = vld [vmem:[%s5 + $0xb8] sm:$0xf]
        %v3152 = vld [vmem:[%s5 + $0xbc] sm:$0xf]
        %v3153 = vld [vmem:[%s5 + $0xc0] sm:$0xf]
        %v3154 = vld [vmem:[%s5 + $0xc4] sm:$0xf]
        %v3155 = vld [vmem:[%s5 + $0xc8] sm:$0xf]
        %v3156 = vld [vmem:[%s5 + $0xcc] sm:$0xf]
        %v3157 = vld [vmem:[%s5 + $0xd0] sm:$0xf]
        %v3158 = vld [vmem:[%s5 + $0xd4] sm:$0xf]
        %v3159 = vld [vmem:[%s5 + $0xd8] sm:$0xf]
        %v3160 = vld [vmem:[%s5 + $0xdc] sm:$0xf]
        %v3161 = vld [vmem:[%s5 + $0xe0] sm:$0xf]
        %v3162 = vld [vmem:[%s5 + $0xe4] sm:$0xf]
        %v3163 = vld [vmem:[%s5 + $0xe8] sm:$0xf]
        %v3164 = vld [vmem:[%s5 + $0xec] sm:$0xf]
        %v3165 = vld [vmem:[%s5 + $0xf0] sm:$0xf]
        %v3166 = vld [vmem:[%s5 + $0xf4] sm:$0xf]
        %v3167 = vld [vmem:[%s5 + $0xf8] sm:$0xf]
        %v3168 = vld [vmem:[%s5 + $0xfc] sm:$0xf]
        %v3169 = vld [vmem:[%s5 + $0x100] sm:$0xf]
        %v3170 = vld [vmem:[%s5 + $0x104] sm:$0xf]
        %v3171 = vld [vmem:[%s5 + $0x108] sm:$0xf]
        %v3172 = vld [vmem:[%s5 + $0x10c] sm:$0xf]
        %v3173 = vld [vmem:[%s5 + $0x110] sm:$0xf]
        %v3174 = vld [vmem:[%s5 + $0x114] sm:$0xf]
        %v3175 = vld [vmem:[%s5 + $0x118] sm:$0xf]
        %v3176 = vld [vmem:[%s5 + $0x11c] sm:$0xf]
        %v3177 = vld [vmem:[%s6] sm:$0x1]
        %v3179 = vperm.slane %v3177, 0
        %v3221 = vunpack.c.l.b16 %v3065
        %v3222 = vunpack.c.l.b16 %v3066
        %v3223 = vunpack.c.l.b16 %v3067
        %v3224 = vunpack.c.l.b16 %v3068
        %v3225 = vunpack.c.l.b16 %v3069
        %v3226 = vunpack.c.l.b16 %v3070
        %v3227 = vunpack.c.l.b16 %v3071
        %v3228 = vunpack.c.l.b16 %v3072
        %v3229 = vunpack.c.l.b16 %v3073
        %v3230 = vunpack.c.l.b16 %v3074
        %v3231 = vunpack.c.l.b16 %v3075
        %v3232 = vunpack.c.l.b16 %v3076
        %v3233 = vunpack.c.l.b16 %v3077
        %v3234 = vunpack.c.l.b16 %v3078
        %v3235 = vunpack.c.l.b16 %v3079
        %v3236 = vunpack.c.l.b16 %v3080
        %v3237 = vunpack.c.l.b16 %v3081
        %v3238 = vunpack.c.l.b16 %v3082
        %v3239 = vunpack.c.l.b16 %v3083
        %v3240 = vunpack.c.l.b16 %v3084
        %v3241 = vunpack.c.l.b16 %v3085
        %v3242 = vunpack.c.l.b16 %v3086
        %v3243 = vunpack.c.l.b16 %v3087
        %v3244 = vunpack.c.l.b16 %v3088
        %v3245 = vunpack.c.l.b16 %v3089
        %v3246 = vunpack.c.l.b16 %v3090
        %v3247 = vunpack.c.l.b16 %v3091
        %v3248 = vunpack.c.l.b16 %v3092
        %v3249 = vunpack.c.l.b16 %v3093
        %v3250 = vunpack.c.l.b16 %v3094
        %v3251 = vunpack.c.l.b16 %v3095
        %v3252 = vunpack.c.l.b16 %v3096
        %v3253 = vunpack.c.l.b16 %v3097
        %v3254 = vunpack.c.l.b16 %v3098
        %v3255 = vunpack.c.l.b16 %v3099
        %v3256 = vunpack.c.l.b16 %v3100
        %v3257 = vunpack.c.l.b16 %v3101
        %v3258 = vunpack.c.l.b16 %v3102
        %v3259 = vunpack.c.l.b16 %v3103
        %v3260 = vunpack.c.l.b16 %v3104
        %v3261 = vrot.slane %v3226, 7
        %v3262 = vsel %vm1959, %v3261, %v3221
        %v3263 = vrot.slane %v3231, 6
        %v3264 = vsel %vm1955, %v3263, %v3262
        %v3265 = vrot.slane %v3236, 5
        %v3266 = vsel %vm1961, %v3265, %v3264
        %v3267 = vrot.slane %v3241, 4
        %v3268 = vsel %vm1967, %v3267, %v3266
        %v3269 = vrot.slane %v3246, 3
        %vm3270 = vcmask 1045509
        %v3271 = vsel %vm3270, %v3269, %v3268
        %v3272 = vrot.slane %v3251, 2
        %vm3273 = vcmask 1046534
        %v3274 = vsel %vm3273, %v3272, %v3271
        %v3275 = vrot.slane %v3256, 1
        %vm3276 = vcmask 1047559
        %v3277 = vsel %vm3276, %v3275, %v3274
        %v3278 = vrot.slane %v3227, 7
        %v3279 = vsel %vm1959, %v3278, %v3222
        %v3280 = vrot.slane %v3232, 6
        %v3281 = vsel %vm1955, %v3280, %v3279
        %v3282 = vrot.slane %v3237, 5
        %v3283 = vsel %vm1961, %v3282, %v3281
        %v3284 = vrot.slane %v3242, 4
        %v3285 = vsel %vm1967, %v3284, %v3283
        %v3286 = vrot.slane %v3247, 3
        %v3287 = vsel %vm3270, %v3286, %v3285
        %v3288 = vrot.slane %v3252, 2
        %v3289 = vsel %vm3273, %v3288, %v3287
        %v3290 = vrot.slane %v3257, 1
        %v3291 = vsel %vm3276, %v3290, %v3289
        %v3292 = vrot.slane %v3228, 7
        %v3293 = vsel %vm1959, %v3292, %v3223
        %v3294 = vrot.slane %v3233, 6
        %v3295 = vsel %vm1955, %v3294, %v3293
        %v3296 = vrot.slane %v3238, 5
        %v3297 = vsel %vm1961, %v3296, %v3295
        %v3298 = vrot.slane %v3243, 4
        %v3299 = vsel %vm1967, %v3298, %v3297
        %v3300 = vrot.slane %v3248, 3
        %v3301 = vsel %vm3270, %v3300, %v3299
        %v3302 = vrot.slane %v3253, 2
        %v3303 = vsel %vm3273, %v3302, %v3301
        %v3304 = vrot.slane %v3258, 1
        %v3305 = vsel %vm3276, %v3304, %v3303
        %v3306 = vrot.slane %v3229, 7
        %v3307 = vsel %vm1959, %v3306, %v3224
        %v3308 = vrot.slane %v3234, 6
        %v3309 = vsel %vm1955, %v3308, %v3307
        %v3310 = vrot.slane %v3239, 5
        %v3311 = vsel %vm1961, %v3310, %v3309
        %v3312 = vrot.slane %v3244, 4
        %v3313 = vsel %vm1967, %v3312, %v3311
        %v3314 = vrot.slane %v3249, 3
        %v3315 = vsel %vm3270, %v3314, %v3313
        %v3316 = vrot.slane %v3254, 2
        %v3317 = vsel %vm3273, %v3316, %v3315
        %v3318 = vrot.slane %v3259, 1
        %v3319 = vsel %vm3276, %v3318, %v3317
        %v3320 = vrot.slane %v3230, 7
        %v3321 = vsel %vm1959, %v3320, %v3225
        %v3322 = vrot.slane %v3235, 6
        %v3323 = vsel %vm1955, %v3322, %v3321
        %v3324 = vrot.slane %v3240, 5
        %v3325 = vsel %vm1961, %v3324, %v3323
        %v3326 = vrot.slane %v3245, 4
        %v3327 = vsel %vm1967, %v3326, %v3325
        %v3328 = vrot.slane %v3250, 3
        %v3329 = vsel %vm3270, %v3328, %v3327
        %v3330 = vrot.slane %v3255, 2
        %v3331 = vsel %vm3273, %v3330, %v3329
        %v3332 = vrot.slane %v3260, 1
        %v3333 = vsel %vm3276, %v3332, %v3331
        %v3334 = vpack.c.b16 %v3277, %v3277
        %v3335 = vpack.c.b16 %v3291, %v3291
        %v3336 = vpack.c.b16 %v3305, %v3305
        %v3337 = vpack.c.b16 %v3319, %v3319
        %v3338 = vpack.c.b16 %v3333, %v3333
        %v3415 = vunpack.c.l.b16 %v3105
        %v3416 = vunpack.c.l.b16 %v3106
        %v3417 = vunpack.c.l.b16 %v3107
        %v3418 = vunpack.c.l.b16 %v3108
        %v3419 = vunpack.c.l.b16 %v3109
        %v3420 = vunpack.c.l.b16 %v3110
        %v3421 = vunpack.c.l.b16 %v3111
        %v3422 = vunpack.c.l.b16 %v3112
        %v3423 = vunpack.c.l.b16 %v3113
        %v3424 = vunpack.c.l.b16 %v3114
        %v3425 = vunpack.c.l.b16 %v3115
        %v3426 = vunpack.c.l.b16 %v3116
        %v3427 = vunpack.c.l.b16 %v3117
        %v3428 = vunpack.c.l.b16 %v3118
        %v3429 = vunpack.c.l.b16 %v3119
        %v3430 = vunpack.c.l.b16 %v3120
        %v3431 = vunpack.c.l.b16 %v3121
        %v3432 = vunpack.c.l.b16 %v3122
        %v3433 = vunpack.c.l.b16 %v3123
        %v3434 = vunpack.c.l.b16 %v3124
        %v3435 = vunpack.c.l.b16 %v3125
        %v3436 = vunpack.c.l.b16 %v3126
        %v3437 = vunpack.c.l.b16 %v3127
        %v3438 = vunpack.c.l.b16 %v3128
        %v3439 = vunpack.c.l.b16 %v3129
        %v3440 = vunpack.c.l.b16 %v3130
        %v3441 = vunpack.c.l.b16 %v3131
        %v3442 = vunpack.c.l.b16 %v3132
        %v3443 = vunpack.c.l.b16 %v3133
        %v3444 = vunpack.c.l.b16 %v3134
        %v3445 = vunpack.c.l.b16 %v3135
        %v3446 = vunpack.c.l.b16 %v3136
        %v3447 = vunpack.c.l.b16 %v3137
        %v3448 = vunpack.c.l.b16 %v3138
        %v3449 = vunpack.c.l.b16 %v3139
        %v3450 = vunpack.c.l.b16 %v3140
        %v3451 = vunpack.c.l.b16 %v3141
        %v3452 = vunpack.c.l.b16 %v3142
        %v3453 = vunpack.c.l.b16 %v3143
        %v3454 = vunpack.c.l.b16 %v3144
        %v3455 = vunpack.c.l.b16 %v3145
        %v3456 = vunpack.c.l.b16 %v3146
        %v3457 = vunpack.c.l.b16 %v3147
        %v3458 = vunpack.c.l.b16 %v3148
        %v3459 = vunpack.c.l.b16 %v3149
        %v3460 = vunpack.c.l.b16 %v3150
        %v3461 = vunpack.c.l.b16 %v3151
        %v3462 = vunpack.c.l.b16 %v3152
        %v3463 = vunpack.c.l.b16 %v3153
        %v3464 = vunpack.c.l.b16 %v3154
        %v3465 = vunpack.c.l.b16 %v3155
        %v3466 = vunpack.c.l.b16 %v3156
        %v3467 = vunpack.c.l.b16 %v3157
        %v3468 = vunpack.c.l.b16 %v3158
        %v3469 = vunpack.c.l.b16 %v3159
        %v3470 = vunpack.c.l.b16 %v3160
        %v3471 = vunpack.c.l.b16 %v3161
        %v3472 = vunpack.c.l.b16 %v3162
        %v3473 = vunpack.c.l.b16 %v3163
        %v3474 = vunpack.c.l.b16 %v3164
        %v3475 = vunpack.c.l.b16 %v3165
        %v3476 = vunpack.c.l.b16 %v3166
        %v3477 = vunpack.c.l.b16 %v3167
        %v3478 = vunpack.c.l.b16 %v3168
        %v3479 = vunpack.c.l.b16 %v3169
        %v3480 = vunpack.c.l.b16 %v3170
        %v3481 = vunpack.c.l.b16 %v3171
        %v3482 = vunpack.c.l.b16 %v3172
        %v3483 = vunpack.c.l.b16 %v3173
        %v3484 = vunpack.c.l.b16 %v3174
        %v3485 = vunpack.c.l.b16 %v3175
        %v3486 = vunpack.c.l.b16 %v3176
        %v3487 = vpack.c.b16 %v3416, %v3415
        %v3488 = vpack.c.b16 %v3418, %v3417
        %v3489 = vpack.c.b16 %v3420, %v3419
        %v3490 = vpack.c.b16 %v3422, %v3421
        %v3491 = vpack.c.b16 %v3424, %v3423
        %v3492 = vpack.c.b16 %v3426, %v3425
        %v3493 = vpack.c.b16 %v3428, %v3427
        %v3494 = vpack.c.b16 %v3430, %v3429
        %v3495 = vpack.c.b16 %v3432, %v3431
        %v3496 = vpack.c.b16 %v3434, %v3433
        %v3497 = vpack.c.b16 %v3436, %v3435
        %v3498 = vpack.c.b16 %v3438, %v3437
        %v3499 = vpack.c.b16 %v3440, %v3439
        %v3500 = vpack.c.b16 %v3442, %v3441
        %v3501 = vpack.c.b16 %v3444, %v3443
        %v3502 = vpack.c.b16 %v3446, %v3445
        %v3503 = vpack.c.b16 %v3448, %v3447
        %v3504 = vpack.c.b16 %v3450, %v3449
        %v3505 = vpack.c.b16 %v3452, %v3451
        %v3506 = vpack.c.b16 %v3454, %v3453
        %v3507 = vpack.c.b16 %v3456, %v3455
        %v3508 = vpack.c.b16 %v3458, %v3457
        %v3509 = vpack.c.b16 %v3460, %v3459
        %v3510 = vpack.c.b16 %v3462, %v3461
        %v3511 = vpack.c.b16 %v3464, %v3463
        %v3512 = vpack.c.b16 %v3466, %v3465
        %v3513 = vpack.c.b16 %v3468, %v3467
        %v3514 = vpack.c.b16 %v3470, %v3469
        %v3515 = vpack.c.b16 %v3472, %v3471
        %v3516 = vpack.c.b16 %v3474, %v3473
        %v3517 = vpack.c.b16 %v3476, %v3475
        %v3518 = vpack.c.b16 %v3478, %v3477
        %v3519 = vpack.c.b16 %v3480, %v3479
        %v3520 = vpack.c.b16 %v3482, %v3481
        %v3521 = vpack.c.b16 %v3484, %v3483
        %v3522 = vpack.c.b16 %v3486, %v3485
        %v3560 = vsel %vm3032, %v3338, 0
        %3562 = vmatpush.bf16.msra.mxu0 %v3494
        %3563 = vmatpush.bf16.msra.mxu0 %v3493
        %3564 = vmatpush.bf16.msra.mxu0 %v3492
        %3565 = vmatpush.bf16.msra.mxu0 %v3491
        %3566 = vmatpush.bf16.msra.mxu0 %v3490
        %3567 = vmatpush.bf16.msra.mxu0 %v3489
        %3568 = vmatpush.bf16.msra.mxu0 %v3488
        %3569 = vmatpush.bf16.msra.mxu0 %v3487
        %3570 = vmatmul.bf16.gmra.mxu0 %v3334
        %v3571 = vpop.f32.mrf.mxu0
        %v3572 = vadd.f32 %v3179, %v3571
        %v3573 = vpop.f32.mrf.mxu0
        %3574 = vdwg.mxu0
        %3575 = vmatpush.bf16.msra.mxu0 %v3502
        %3576 = vmatpush.bf16.msra.mxu0 %v3501
        %3577 = vmatpush.bf16.msra.mxu0 %v3500
        %3578 = vmatpush.bf16.msra.mxu0 %v3499
        %3579 = vmatpush.bf16.msra.mxu0 %v3498
        %3580 = vmatpush.bf16.msra.mxu0 %v3497
        %3581 = vmatpush.bf16.msra.mxu0 %v3496
        %3582 = vmatpush.bf16.msra.mxu0 %v3495
        %3583 = vmatmul.bf16.gmra.mxu0 %v3335
        %v3584 = vpop.f32.mrf.mxu0
        %v3585 = vadd.f32 %v3572, %v3584
        %v3586 = vpop.f32.mrf.mxu0
        %3587 = vdwg.mxu0
        %3588 = vmatpush.bf16.msra.mxu0 %v3510
        %3589 = vmatpush.bf16.msra.mxu0 %v3509
        %3590 = vmatpush.bf16.msra.mxu0 %v3508
        %3591 = vmatpush.bf16.msra.mxu0 %v3507
        %3592 = vmatpush.bf16.msra.mxu0 %v3506
        %3593 = vmatpush.bf16.msra.mxu0 %v3505
        %3594 = vmatpush.bf16.msra.mxu0 %v3504
        %3595 = vmatpush.bf16.msra.mxu0 %v3503
        %3596 = vmatmul.bf16.gmra.mxu0 %v3336
        %v3597 = vpop.f32.mrf.mxu0
        %v3598 = vadd.f32 %v3585, %v3597
        %v3599 = vpop.f32.mrf.mxu0
        %3600 = vdwg.mxu0
        %3601 = vmatpush.bf16.msra.mxu0 %v3518
        %3602 = vmatpush.bf16.msra.mxu0 %v3517
        %3603 = vmatpush.bf16.msra.mxu0 %v3516
        %3604 = vmatpush.bf16.msra.mxu0 %v3515
        %3605 = vmatpush.bf16.msra.mxu0 %v3514
        %3606 = vmatpush.bf16.msra.mxu0 %v3513
        %3607 = vmatpush.bf16.msra.mxu0 %v3512
        %3608 = vmatpush.bf16.msra.mxu0 %v3511
        %3609 = vmatmul.bf16.gmra.mxu0 %v3337
        %v3610 = vpop.f32.mrf.mxu0
        %v3611 = vadd.f32 %v3598, %v3610
        %v3612 = vpop.f32.mrf.mxu0
        %3613 = vdwg.mxu0
        %3614 = vmatpush.bf16.msra.mxu0 0
        %3615 = vmatpush.bf16.msra.mxu0 0
        %3616 = vmatpush.bf16.msra.mxu0 0
        %3617 = vmatpush.bf16.msra.mxu0 0
        %3618 = vmatpush.bf16.msra.mxu0 %v3522
        %3619 = vmatpush.bf16.msra.mxu0 %v3521
        %3620 = vmatpush.bf16.msra.mxu0 %v3520
        %3621 = vmatpush.bf16.msra.mxu0 %v3519
        %3622 = vmatmul.bf16.gmra.mxu0 %v3560
        %v3623 = vpop.f32.mrf.mxu0
        %v3624 = vadd.f32 %v3611, %v3623
        %v3625 = vpop.f32.mrf.mxu0
        %3626 = vdwg.mxu0
        %v3627 = vmax.f32 %v3624, 0.0
        %v3628 = vpack.c.bf16 %v3627, %v3627
        %v3629 = vld [vmem:[%s7] sm:$0xff]
        %v3630 = vld [vmem:[%s7 + $0x8] sm:$0xff]
        %v3631 = vld [vmem:[%s7 + $0x10] sm:$0xff]
        %v3632 = vld [vmem:[%s7 + $0x18] sm:$0xff]
        %v3633 = vld [vmem:[%s7 + $0x20] sm:$0xff]
        %v3634 = vld [vmem:[%s7 + $0x28] sm:$0xff]
        %v3635 = vld [vmem:[%s7 + $0x30] sm:$0xff]
        %v3636 = vld [vmem:[%s7 + $0x38] sm:$0xff]
        %v3637 = vld [vmem:[%s7 + $0x40] sm:$0xff]
        %v3638 = vld [vmem:[%s7 + $0x48] sm:$0xff]
        %v3639 = vld [vmem:[%s7 + $0x50] sm:$0xff]
        %v3640 = vld [vmem:[%s7 + $0x58] sm:$0xff]
        %v3641 = vld [vmem:[%s7 + $0x60] sm:$0xff]
        %v3642 = vld [vmem:[%s7 + $0x68] sm:$0xff]
        %v3643 = vld [vmem:[%s7 + $0x70] sm:$0xff]
        %v3644 = vld [vmem:[%s7 + $0x78] sm:$0xff]
        %v3645 = vld [vmem:[%s8] sm:$0xf]
        %v3647 = vperm.slane %v3645, 0
        %v3648 = vperm.slane %v3645, 1
        %v3649 = vperm.slane %v3645, 2
        %v3650 = vperm.slane %v3645, 3
        %v3671 = vunpack.c.l.b16 %v3629
        %v3672 = vunpack.c.h.b16 %v3629
        %v3673 = vunpack.c.l.b16 %v3630
        %v3674 = vunpack.c.h.b16 %v3630
        %v3675 = vunpack.c.l.b16 %v3631
        %v3676 = vunpack.c.h.b16 %v3631
        %v3677 = vunpack.c.l.b16 %v3632
        %v3678 = vunpack.c.h.b16 %v3632
        %v3679 = vunpack.c.l.b16 %v3633
        %v3680 = vunpack.c.h.b16 %v3633
        %v3681 = vunpack.c.l.b16 %v3634
        %v3682 = vunpack.c.h.b16 %v3634
        %v3683 = vunpack.c.l.b16 %v3635
        %v3684 = vunpack.c.h.b16 %v3635
        %v3685 = vunpack.c.l.b16 %v3636
        %v3686 = vunpack.c.h.b16 %v3636
        %v3687 = vunpack.c.l.b16 %v3637
        %v3688 = vunpack.c.h.b16 %v3637
        %v3689 = vunpack.c.l.b16 %v3638
        %v3690 = vunpack.c.h.b16 %v3638
        %v3691 = vunpack.c.l.b16 %v3639
        %v3692 = vunpack.c.h.b16 %v3639
        %v3693 = vunpack.c.l.b16 %v3640
        %v3694 = vunpack.c.h.b16 %v3640
        %v3695 = vunpack.c.l.b16 %v3641
        %v3696 = vunpack.c.h.b16 %v3641
        %v3697 = vunpack.c.l.b16 %v3642
        %v3698 = vunpack.c.h.b16 %v3642
        %v3699 = vunpack.c.l.b16 %v3643
        %v3700 = vunpack.c.h.b16 %v3643
        %v3701 = vunpack.c.l.b16 %v3644
        %v3702 = vunpack.c.h.b16 %v3644
        %v3703 = vpack.c.b16 %v3675, %v3671
        %v3704 = vpack.c.b16 %v3676, %v3672
        %v3705 = vpack.c.b16 %v3677, %v3673
        %v3706 = vpack.c.b16 %v3678, %v3674
        %v3707 = vpack.c.b16 %v3683, %v3679
        %v3708 = vpack.c.b16 %v3684, %v3680
        %v3709 = vpack.c.b16 %v3685, %v3681
        %v3710 = vpack.c.b16 %v3686, %v3682
        %v3711 = vpack.c.b16 %v3691, %v3687
        %v3712 = vpack.c.b16 %v3692, %v3688
        %v3713 = vpack.c.b16 %v3693, %v3689
        %v3714 = vpack.c.b16 %v3694, %v3690
        %v3715 = vpack.c.b16 %v3699, %v3695
        %v3716 = vpack.c.b16 %v3700, %v3696
        %v3717 = vpack.c.b16 %v3701, %v3697
        %v3718 = vpack.c.b16 %v3702, %v3698
        %v3736 = vsel %vm3032, %v3628, 0
        %3738 = vmatpush.bf16.msra.mxu0 0
        %3739 = vmatpush.bf16.msra.mxu0 0
        %3740 = vmatpush.bf16.msra.mxu0 0
        %3741 = vmatpush.bf16.msra.mxu0 0
        %3742 = vmatpush.bf16.msra.mxu0 %v3715
        %3743 = vmatpush.bf16.msra.mxu0 %v3711
        %3744 = vmatpush.bf16.msra.mxu0 %v3707
        %3745 = vmatpush.bf16.msra.mxu0 %v3703
        %3746 = vmatmul.bf16.gmra.mxu0 %v3736
        %v3747 = vpop.f32.mrf.mxu0
        %v3748 = vadd.f32 %v3647, %v3747
        %v3749 = vpop.f32.mrf.mxu0
        %3750 = vdwg.mxu0
        %3751 = vmatpush.bf16.msra.mxu0 0
        %3752 = vmatpush.bf16.msra.mxu0 0
        %3753 = vmatpush.bf16.msra.mxu0 0
        %3754 = vmatpush.bf16.msra.mxu0 0
        %3755 = vmatpush.bf16.msra.mxu0 %v3716
        %3756 = vmatpush.bf16.msra.mxu0 %v3712
        %3757 = vmatpush.bf16.msra.mxu0 %v3708
        %3758 = vmatpush.bf16.msra.mxu0 %v3704
        %3759 = vmatmul.bf16.gmra.mxu0 %v3736
        %v3760 = vpop.f32.mrf.mxu0
        %v3761 = vadd.f32 %v3648, %v3760
        %v3762 = vpop.f32.mrf.mxu0
        %3763 = vdwg.mxu0
        %3764 = vmatpush.bf16.msra.mxu0 0
        %3765 = vmatpush.bf16.msra.mxu0 0
        %3766 = vmatpush.bf16.msra.mxu0 0
        %3767 = vmatpush.bf16.msra.mxu0 0
        %3768 = vmatpush.bf16.msra.mxu0 %v3717
        %3769 = vmatpush.bf16.msra.mxu0 %v3713
        %3770 = vmatpush.bf16.msra.mxu0 %v3709
        %3771 = vmatpush.bf16.msra.mxu0 %v3705
        %3772 = vmatmul.bf16.gmra.mxu0 %v3736
        %v3773 = vpop.f32.mrf.mxu0
        %v3774 = vadd.f32 %v3649, %v3773
        %v3775 = vpop.f32.mrf.mxu0
        %3776 = vdwg.mxu0
        %3777 = vmatpush.bf16.msra.mxu0 0
        %3778 = vmatpush.bf16.msra.mxu0 0
        %3779 = vmatpush.bf16.msra.mxu0 0
        %3780 = vmatpush.bf16.msra.mxu0 0
        %3781 = vmatpush.bf16.msra.mxu0 %v3718
        %3782 = vmatpush.bf16.msra.mxu0 %v3714
        %3783 = vmatpush.bf16.msra.mxu0 %v3710
        %3784 = vmatpush.bf16.msra.mxu0 %v3706
        %3785 = vmatmul.bf16.gmra.mxu0 %v3736
        %v3786 = vpop.f32.mrf.mxu0
        %v3787 = vadd.f32 %v3650, %v3786
        %v3788 = vpop.f32.mrf.mxu0
        %3789 = vdwg.mxu0
        %v3790 = vmax.f32 %v3748, 0.0
        %v3791 = vmax.f32 %v3761, 0.0
        %v3792 = vmax.f32 %v3774, 0.0
        %v3793 = vmax.f32 %v3787, 0.0
        %v3794 = vpack.c.bf16 %v3790, %v3790
        %v3795 = vpack.c.bf16 %v3791, %v3791
        %v3796 = vpack.c.bf16 %v3792, %v3792
        %v3797 = vpack.c.bf16 %v3793, %v3793
        %v3798 = vld [vmem:[%s9] sm:$0xf]
        %v3799 = vld [vmem:[%s9 + $0x4] sm:$0xf]
        %v3800 = vld [vmem:[%s9 + $0x8] sm:$0xf]
        %v3801 = vld [vmem:[%s9 + $0xc] sm:$0xf]
        %v3802 = vld [vmem:[%s9 + $0x10] sm:$0xf]
        %v3803 = vld [vmem:[%s9 + $0x14] sm:$0xf]
        %v3804 = vld [vmem:[%s9 + $0x18] sm:$0xf]
        %v3805 = vld [vmem:[%s9 + $0x1c] sm:$0xf]
        %v3806 = vld [vmem:[%s9 + $0x20] sm:$0xf]
        %v3807 = vld [vmem:[%s9 + $0x24] sm:$0xf]
        %v3808 = vld [vmem:[%s9 + $0x28] sm:$0xf]
        %v3809 = vld [vmem:[%s9 + $0x2c] sm:$0xf]
        %v3810 = vld [vmem:[%s9 + $0x30] sm:$0xf]
        %v3811 = vld [vmem:[%s9 + $0x34] sm:$0xf]
        %v3812 = vld [vmem:[%s9 + $0x38] sm:$0xf]
        %v3813 = vld [vmem:[%s9 + $0x3c] sm:$0xf]
        %v3814 = vld [vmem:[%s9 + $0x40] sm:$0xf]
        %v3815 = vld [vmem:[%s9 + $0x44] sm:$0xf]
        %v3816 = vld [vmem:[%s9 + $0x48] sm:$0xf]
        %v3817 = vld [vmem:[%s9 + $0x4c] sm:$0xf]
        %v3818 = vld [vmem:[%s9 + $0x50] sm:$0xf]
        %v3819 = vld [vmem:[%s9 + $0x54] sm:$0xf]
        %v3820 = vld [vmem:[%s9 + $0x58] sm:$0xf]
        %v3821 = vld [vmem:[%s9 + $0x5c] sm:$0xf]
        %v3822 = vld [vmem:[%s9 + $0x60] sm:$0xf]
        %v3823 = vld [vmem:[%s9 + $0x64] sm:$0xf]
        %v3824 = vld [vmem:[%s9 + $0x68] sm:$0xf]
        %v3825 = vld [vmem:[%s9 + $0x6c] sm:$0xf]
        %v3826 = vld [vmem:[%s9 + $0x70] sm:$0xf]
        %v3827 = vld [vmem:[%s9 + $0x74] sm:$0xf]
        %v3828 = vld [vmem:[%s9 + $0x78] sm:$0xf]
        %v3829 = vld [vmem:[%s9 + $0x7c] sm:$0xf]
        %v3830 = vld [vmem:[%s9 + $0x80] sm:$0xf]
        %v3831 = vld [vmem:[%s9 + $0x84] sm:$0xf]
        %v3832 = vld [vmem:[%s9 + $0x88] sm:$0xf]
        %v3833 = vld [vmem:[%s9 + $0x8c] sm:$0xf]
        %v3834 = vld [vmem:[%s9 + $0x90] sm:$0xf]
        %v3835 = vld [vmem:[%s9 + $0x94] sm:$0xf]
        %v3836 = vld [vmem:[%s9 + $0x98] sm:$0xf]
        %v3837 = vld [vmem:[%s9 + $0x9c] sm:$0xf]
        %v3838 = vld [vmem:[%s9 + $0xa0] sm:$0xf]
        %v3839 = vld [vmem:[%s9 + $0xa4] sm:$0xf]
        %v3840 = vld [vmem:[%s9 + $0xa8] sm:$0xf]
        %v3841 = vld [vmem:[%s9 + $0xac] sm:$0xf]
        %v3842 = vld [vmem:[%s9 + $0xb0] sm:$0xf]
        %v3843 = vld [vmem:[%s9 + $0xb4] sm:$0xf]
        %v3844 = vld [vmem:[%s9 + $0xb8] sm:$0xf]
        %v3845 = vld [vmem:[%s9 + $0xbc] sm:$0xf]
        %v3846 = vld [vmem:[%s9 + $0xc0] sm:$0xf]
        %v3847 = vld [vmem:[%s9 + $0xc4] sm:$0xf]
        %v3848 = vld [vmem:[%s9 + $0xc8] sm:$0xf]
        %v3849 = vld [vmem:[%s9 + $0xcc] sm:$0xf]
        %v3850 = vld [vmem:[%s9 + $0xd0] sm:$0xf]
        %v3851 = vld [vmem:[%s9 + $0xd4] sm:$0xf]
        %v3852 = vld [vmem:[%s9 + $0xd8] sm:$0xf]
        %v3853 = vld [vmem:[%s9 + $0xdc] sm:$0xf]
        %v3854 = vld [vmem:[%s9 + $0xe0] sm:$0xf]
        %v3855 = vld [vmem:[%s9 + $0xe4] sm:$0xf]
        %v3856 = vld [vmem:[%s9 + $0xe8] sm:$0xf]
        %v3857 = vld [vmem:[%s9 + $0xec] sm:$0xf]
        %v3858 = vld [vmem:[%s9 + $0xf0] sm:$0xf]
        %v3859 = vld [vmem:[%s9 + $0xf4] sm:$0xf]
        %v3860 = vld [vmem:[%s9 + $0xf8] sm:$0xf]
        %v3861 = vld [vmem:[%s9 + $0xfc] sm:$0xf]
        %v3862 = vld [vmem:[%s10] sm:$0x1]
        %v3864 = vperm.slane %v3862, 0
        %v3930 = vunpack.c.l.b16 %v3798
        %v3931 = vunpack.c.l.b16 %v3799
        %v3932 = vunpack.c.l.b16 %v3800
        %v3933 = vunpack.c.l.b16 %v3801
        %v3934 = vunpack.c.l.b16 %v3802
        %v3935 = vunpack.c.l.b16 %v3803
        %v3936 = vunpack.c.l.b16 %v3804
        %v3937 = vunpack.c.l.b16 %v3805
        %v3938 = vunpack.c.l.b16 %v3806
        %v3939 = vunpack.c.l.b16 %v3807
        %v3940 = vunpack.c.l.b16 %v3808
        %v3941 = vunpack.c.l.b16 %v3809
        %v3942 = vunpack.c.l.b16 %v3810
        %v3943 = vunpack.c.l.b16 %v3811
        %v3944 = vunpack.c.l.b16 %v3812
        %v3945 = vunpack.c.l.b16 %v3813
        %v3946 = vunpack.c.l.b16 %v3814
        %v3947 = vunpack.c.l.b16 %v3815
        %v3948 = vunpack.c.l.b16 %v3816
        %v3949 = vunpack.c.l.b16 %v3817
        %v3950 = vunpack.c.l.b16 %v3818
        %v3951 = vunpack.c.l.b16 %v3819
        %v3952 = vunpack.c.l.b16 %v3820
        %v3953 = vunpack.c.l.b16 %v3821
        %v3954 = vunpack.c.l.b16 %v3822
        %v3955 = vunpack.c.l.b16 %v3823
        %v3956 = vunpack.c.l.b16 %v3824
        %v3957 = vunpack.c.l.b16 %v3825
        %v3958 = vunpack.c.l.b16 %v3826
        %v3959 = vunpack.c.l.b16 %v3827
        %v3960 = vunpack.c.l.b16 %v3828
        %v3961 = vunpack.c.l.b16 %v3829
        %v3962 = vunpack.c.l.b16 %v3830
        %v3963 = vunpack.c.l.b16 %v3831
        %v3964 = vunpack.c.l.b16 %v3832
        %v3965 = vunpack.c.l.b16 %v3833
        %v3966 = vunpack.c.l.b16 %v3834
        %v3967 = vunpack.c.l.b16 %v3835
        %v3968 = vunpack.c.l.b16 %v3836
        %v3969 = vunpack.c.l.b16 %v3837
        %v3970 = vunpack.c.l.b16 %v3838
        %v3971 = vunpack.c.l.b16 %v3839
        %v3972 = vunpack.c.l.b16 %v3840
        %v3973 = vunpack.c.l.b16 %v3841
        %v3974 = vunpack.c.l.b16 %v3842
        %v3975 = vunpack.c.l.b16 %v3843
        %v3976 = vunpack.c.l.b16 %v3844
        %v3977 = vunpack.c.l.b16 %v3845
        %v3978 = vunpack.c.l.b16 %v3846
        %v3979 = vunpack.c.l.b16 %v3847
        %v3980 = vunpack.c.l.b16 %v3848
        %v3981 = vunpack.c.l.b16 %v3849
        %v3982 = vunpack.c.l.b16 %v3850
        %v3983 = vunpack.c.l.b16 %v3851
        %v3984 = vunpack.c.l.b16 %v3852
        %v3985 = vunpack.c.l.b16 %v3853
        %v3986 = vunpack.c.l.b16 %v3854
        %v3987 = vunpack.c.l.b16 %v3855
        %v3988 = vunpack.c.l.b16 %v3856
        %v3989 = vunpack.c.l.b16 %v3857
        %v3990 = vunpack.c.l.b16 %v3858
        %v3991 = vunpack.c.l.b16 %v3859
        %v3992 = vunpack.c.l.b16 %v3860
        %v3993 = vunpack.c.l.b16 %v3861
        %v3994 = vpack.c.b16 %v3931, %v3930
        %v3995 = vpack.c.b16 %v3933, %v3932
        %v3996 = vpack.c.b16 %v3935, %v3934
        %v3997 = vpack.c.b16 %v3937, %v3936
        %v3998 = vpack.c.b16 %v3939, %v3938
        %v3999 = vpack.c.b16 %v3941, %v3940
        %v4000 = vpack.c.b16 %v3943, %v3942
        %v4001 = vpack.c.b16 %v3945, %v3944
        %v4002 = vpack.c.b16 %v3947, %v3946
        %v4003 = vpack.c.b16 %v3949, %v3948
        %v4004 = vpack.c.b16 %v3951, %v3950
        %v4005 = vpack.c.b16 %v3953, %v3952
        %v4006 = vpack.c.b16 %v3955, %v3954
        %v4007 = vpack.c.b16 %v3957, %v3956
        %v4008 = vpack.c.b16 %v3959, %v3958
        %v4009 = vpack.c.b16 %v3961, %v3960
        %v4010 = vpack.c.b16 %v3963, %v3962
        %v4011 = vpack.c.b16 %v3965, %v3964
        %v4012 = vpack.c.b16 %v3967, %v3966
        %v4013 = vpack.c.b16 %v3969, %v3968
        %v4014 = vpack.c.b16 %v3971, %v3970
        %v4015 = vpack.c.b16 %v3973, %v3972
        %v4016 = vpack.c.b16 %v3975, %v3974
        %v4017 = vpack.c.b16 %v3977, %v3976
        %v4018 = vpack.c.b16 %v3979, %v3978
        %v4019 = vpack.c.b16 %v3981, %v3980
        %v4020 = vpack.c.b16 %v3983, %v3982
        %v4021 = vpack.c.b16 %v3985, %v3984
        %v4022 = vpack.c.b16 %v3987, %v3986
        %v4023 = vpack.c.b16 %v3989, %v3988
        %v4024 = vpack.c.b16 %v3991, %v3990
        %v4025 = vpack.c.b16 %v3993, %v3992
        %4058 = vmatpush.bf16.msra.mxu0 %v4001
        %4059 = vmatpush.bf16.msra.mxu0 %v4000
        %4060 = vmatpush.bf16.msra.mxu0 %v3999
        %4061 = vmatpush.bf16.msra.mxu0 %v3998
        %4062 = vmatpush.bf16.msra.mxu0 %v3997
        %4063 = vmatpush.bf16.msra.mxu0 %v3996
        %4064 = vmatpush.bf16.msra.mxu0 %v3995
        %4065 = vmatpush.bf16.msra.mxu0 %v3994
        %4066 = vmatmul.bf16.gmra.mxu0 %v3794
        %v4067 = vpop.f32.mrf.mxu0
        %v4068 = vadd.f32 %v3864, %v4067
        %v4069 = vpop.f32.mrf.mxu0
        %4070 = vdwg.mxu0
        %4071 = vmatpush.bf16.msra.mxu0 %v4009
        %4072 = vmatpush.bf16.msra.mxu0 %v4008
        %4073 = vmatpush.bf16.msra.mxu0 %v4007
        %4074 = vmatpush.bf16.msra.mxu0 %v4006
        %4075 = vmatpush.bf16.msra.mxu0 %v4005
        %4076 = vmatpush.bf16.msra.mxu0 %v4004
        %4077 = vmatpush.bf16.msra.mxu0 %v4003
        %4078 = vmatpush.bf16.msra.mxu0 %v4002
        %4079 = vmatmul.bf16.gmra.mxu0 %v3795
        %v4080 = vpop.f32.mrf.mxu0
        %v4081 = vadd.f32 %v4068, %v4080
        %v4082 = vpop.f32.mrf.mxu0
        %4083 = vdwg.mxu0
        %4084 = vmatpush.bf16.msra.mxu0 %v4017
        %4085 = vmatpush.bf16.msra.mxu0 %v4016
        %4086 = vmatpush.bf16.msra.mxu0 %v4015
        %4087 = vmatpush.bf16.msra.mxu0 %v4014
        %4088 = vmatpush.bf16.msra.mxu0 %v4013
        %4089 = vmatpush.bf16.msra.mxu0 %v4012
        %4090 = vmatpush.bf16.msra.mxu0 %v4011
        %4091 = vmatpush.bf16.msra.mxu0 %v4010
        %4092 = vmatmul.bf16.gmra.mxu0 %v3796
        %v4093 = vpop.f32.mrf.mxu0
        %v4094 = vadd.f32 %v4081, %v4093
        %v4095 = vpop.f32.mrf.mxu0
        %4096 = vdwg.mxu0
        %4097 = vmatpush.bf16.msra.mxu0 %v4025
        %4098 = vmatpush.bf16.msra.mxu0 %v4024
        %4099 = vmatpush.bf16.msra.mxu0 %v4023
        %4100 = vmatpush.bf16.msra.mxu0 %v4022
        %4101 = vmatpush.bf16.msra.mxu0 %v4021
        %4102 = vmatpush.bf16.msra.mxu0 %v4020
        %4103 = vmatpush.bf16.msra.mxu0 %v4019
        %4104 = vmatpush.bf16.msra.mxu0 %v4018
        %4105 = vmatmul.bf16.gmra.mxu0 %v3797
        %v4106 = vpop.f32.mrf.mxu0
        %v4107 = vadd.f32 %v4094, %v4106
        %v4108 = vpop.f32.mrf.mxu0
        %4109 = vdwg.mxu0
        %4110 = vst [vmem:[%s382] sm:$0xff] %v4107
        %s4111 = sand.u32 %s269, 1
        %s4112 = scalar_lea.sflag [#allocation3], %s4111
        %s4113 = sand.u32 %s269, 1
        %s4114 = smul.addr %s4113, 8
        %s4115 = scalar_lea.vmem [#allocation2], %s4114
        // Predicated region
        $region65: #{nature_cnn_forward.1} parent=63 // pred_check
          %p4116 = pneg %p279
        $region66: #{nature_cnn_forward.1} parent=63 // pred_check_branch
          %4118 = sbr.rel (%p4116) target = $region68
        $region67: #{nature_cnn_forward.1} parent=63 // pred_region
          %4120 = vsyncadd %s4112, 0
          %s4121 = smul.addr %s25, 8
          %s4122 = scalar_lea.hbm %s11, %s4121
          %s4124 = sshll.u32 %s4115, 4
          %s4125 = int_to_ptr.vmem [resolvable:$true] %s4124
          %s4126 = sshll.u32 %s4122, 4
          %s4127 = int_to_ptr.hbm [resolvable:$true] %s4126
          %4129 = dma.vmem_to_hbm [thread:$0]  %s4125, 128, %s4127, %s4112
        $region68: #{nature_cnn_forward.1} parent=63 // pred_fallthru
          _
      $region64: #{nature_cnn_forward.1} parent=5 // pred_fallthru
        _
      %p4130 = scmp.le.s32.totalorder 2, %s20
      // Predicated region
      $region69: #{nature_cnn_forward.1} parent=5 // pred_check
        %p4131 = pneg %p4130
      $region70: #{nature_cnn_forward.1} parent=5 // pred_check_branch
        %4133 = sbr.rel (%p4131) target = $region72
      $region71: #{nature_cnn_forward.1} parent=5 // pred_region
        %s4134 = ssub.s32 %s20, 2
        // Predicated region
        $region73: #{nature_cnn_forward.1} parent=71 // pred_check
          %p4135 = pneg %p285
        $region74: #{nature_cnn_forward.1} parent=71 // pred_check_branch
          %4137 = sbr.rel (%p4135) target = $region76
        $region75: #{nature_cnn_forward.1} parent=71 // pred_region
          %s4138 = sand.u32 %s270, 1
          %s4139 = scalar_lea.sflag [#allocation3], %s4138
          %s4140 = sand.u32 %s270, 1
          %s4141 = smul.addr %s4140, 8
          %s4142 = scalar_lea.vmem [#allocation2], %s4141
          %4144 = dma.done %s4139, 128
        $region76: #{nature_cnn_forward.1} parent=71 // pred_fallthru
          _
      $region72: #{nature_cnn_forward.1} parent=5 // pred_fallthru
        _
    $region6: #{nature_cnn_forward.1} parent=1 // loop_footer
      %s24 = sadd.s32 1, %s20
    $region7: #{nature_cnn_forward.1} parent=1 // loop_footer_branch
      %19 = sbr.rel target = $region3
    $region8: #{nature_cnn_forward.1} parent=1 // loop_exit
      _
    %4145 = vsyncpa [#allocation3], 1
    %s4146 = scalar_lea.sflag [#allocation3], 1
    %4147 = vsyncpa %s4146, 1

</llo_original>
